<compile_context>
chip_gen: v6e
topology: v6e:2x2x1
jax: 0.10.0
libtpu: 0.0.40
codegen_flags: <defaults>
</compile_context>

<pallas_src>
import functools
import math

import jax
import jax.numpy as jnp
from jax.experimental import pallas as pl
from jax.experimental.pallas import tpu as pltpu


_ROW_Q = 16  # row-tile quantum (bf16 sublane packing = 16 rows)


def _round_up(x, m):
    return (x + m - 1) // m * m


def _pick_tile(total, target, quantum):
    """Largest multiple of `quantum` that divides `total` and is <= target.
    Requires total % quantum == 0 (guaranteed by the once-per-forward pad)."""
    t = max(quantum, min(target, total) // quantum * quantum)
    while total % t:
        t -= quantum
    return t


@functools.lru_cache(maxsize=None)
def _chip_tuning():
    """Generation-dependent scoped-VMEM limit and tile targets."""
    try:
        cap = getattr(pltpu.get_tpu_info(), "vmem_capacity_bytes", None)
    except Exception:
        cap = None
    if cap is None or cap <= (64 << 20):
        # v7x-class (64 MiB physical VMEM) or unknown: stay conservative.
        return {"vmem_limit": 56 << 20, "row_bm": 256, "swiglu_bm": 128,
                "qkv_tn": 1024, "swiglu_ti": 512}
    # v5e / v6e (128 MiB physical VMEM): bigger row tiles (~85% of HBM
    # roofline at block_m=512 vs ~63% at 256 for mem-bound row kernels).
    return {"vmem_limit": 100 << 20, "row_bm": 512, "swiglu_bm": 256,
            "qkv_tn": 1024, "swiglu_ti": 512}


@functools.lru_cache(maxsize=None)
def _buffered_const_ok():
    """Probe whether pipeline_mode=pl.Buffered(1) is accepted for grid-constant
    inputs on this JAX/Mosaic version; fall back to default buffering if not."""
    try:
        def k(a_ref, c_ref, o_ref):
            o_ref[...] = a_ref[...] + c_ref[...]

        a = jnp.arange(16 * 128, dtype=jnp.float32).reshape(16, 128)
        c = jnp.ones((8, 128), jnp.float32)
        out = pl.pallas_call(
            k,
            out_shape=jax.ShapeDtypeStruct((16, 128), jnp.float32),
            grid=(2,),
            in_specs=[pl.BlockSpec((8, 128), lambda i: (i, 0)),
                      pl.BlockSpec((8, 128), lambda i: (0, 0),
                                   pipeline_mode=pl.Buffered(1))],
            out_specs=pl.BlockSpec((8, 128), lambda i: (i, 0)),
        )(a, c)
        out = jax.block_until_ready(out)
        return bool(jnp.allclose(out, a + jnp.tile(c, (2, 1))))
    except Exception:
        return False


def _const_spec(shape, index_map):
    """BlockSpec for an input whose block never changes across the grid:
    single-buffer it (halves its VMEM footprint) when supported."""
    if _buffered_const_ok():
        return pl.BlockSpec(shape, index_map, pipeline_mode=pl.Buffered(1))
    return pl.BlockSpec(shape, index_map)


# ----------------------------------------------------------------------------
# Pallas kernels
# ----------------------------------------------------------------------------
def _linear_bias_kernel(x_ref, w_ref, b_ref, o_ref):
    # o = x @ w + b  (patch embed; bf16 weights, f32 accumulation)
    o_ref[...] = (
        jnp.dot(x_ref[...].astype(jnp.bfloat16), w_ref[...],
                preferred_element_type=jnp.float32)
        + b_ref[...]
    )


def _norm_qkv_kernel(x_ref, nw_ref, w_ref, o_ref, *, eps):
    # o_tile = rmsnorm(x) @ w_tile   (fused norm1 + QKV projection, N-tiled;
    # the RMSNorm recompute per N-tile is cheap VPU work hidden under the MXU)
    x = x_ref[...].astype(jnp.float32)
    var = jnp.mean(x * x, axis=-1, keepdims=True)
    n = x * jax.lax.rsqrt(var + eps) * nw_ref[...]
    o_ref[...] = jnp.dot(n.astype(jnp.bfloat16), w_ref[...],
                         preferred_element_type=jnp.float32).astype(o_ref.dtype)


def _residual_matmul_kernel(x_ref, h_ref, w_ref, g_ref, o_ref):
    # o = h + gamma * (x @ w)   (attention out-proj + layer-scale + residual)
    y = jnp.dot(x_ref[...].astype(jnp.bfloat16), w_ref[...],
                preferred_element_type=jnp.float32)
    o_ref[...] = (h_ref[...].astype(jnp.float32) + g_ref[...] * y
                  ).astype(o_ref.dtype)


def _norm_swiglu_residual_kernel(h_ref, nw_ref, wg_ref, wu_ref, wd_ref, g_ref,
                                 o_ref, acc_ref, *, eps):
    # o = h + gamma * ((silu(n@Wg) * (n@Wu)) @ Wd), n = rmsnorm(h),
    # with the intermediate dimension streamed over grid axis 1 ("arbitrary")
    # and accumulated in an f32 VMEM scratch.
    j = pl.program_id(1)

    @pl.when(j == 0)
    def _():
        acc_ref[...] = jnp.zeros_like(acc_ref)

    h = h_ref[...].astype(jnp.float32)
    var = jnp.mean(h * h, axis=-1, keepdims=True)
    n = (h * jax.lax.rsqrt(var + eps) * nw_ref[...]).astype(jnp.bfloat16)
    gpr = jnp.dot(n, wg_ref[...], preferred_element_type=jnp.float32)
    upr = jnp.dot(n, wu_ref[...], preferred_element_type=jnp.float32)
    act = (jax.nn.silu(gpr) * upr).astype(jnp.bfloat16)
    acc_ref[...] += jnp.dot(act, wd_ref[...], preferred_element_type=jnp.float32)

    @pl.when(j == pl.num_programs(1) - 1)
    def _():
        o_ref[...] = (h + g_ref[...] * acc_ref[...]).astype(o_ref.dtype)


def _rmsnorm_kernel(x_ref, w_ref, o_ref, *, eps):
    x = x_ref[...].astype(jnp.float32)
    var = jnp.mean(x * x, axis=-1, keepdims=True)
    o_ref[...] = (x * jax.lax.rsqrt(var + eps) * w_ref[...]).astype(o_ref.dtype)


def _attn_kernel(q_ref, k_ref, v_ref, cos_ref, sin_ref, bias_ref, o_ref, *,
                 scale, num_heads, head_dim):
    # One batch per grid step; all heads processed in-kernel (static lane
    # slices of the (1, S, D) Q/K/V sections) -> amortized step overhead and a
    # single lane-dense (1, S, D) store.
    # TODO(synk): for S >~ 1k, switch to KV-tiled flash-style online softmax.
    half = head_dim // 2
    q_all = q_ref[0]                       # (Sp, D) bf16
    k_all = k_ref[0]
    v_all = v_ref[0]
    cos = cos_ref[...]                     # (Sp, Dh) f32
    sin = sin_ref[...]                     # sign-folded sin
    bias = bias_ref[...]                   # (1, Sp) additive key mask

    def rope(t):
        # rotate_half(t) == roll(t, Dh/2) * sign; sign folded into `sin`.
        return t * cos + pltpu.roll(t, half, 1) * sin

    outs = []
    for h in range(num_heads):
        sl = slice(h * head_dim, (h + 1) * head_dim)
        q = q_all[:, sl].astype(jnp.float32)
        k = k_all[:, sl].astype(jnp.float32)
        v = v_all[:, sl].astype(jnp.bfloat16)
        qb = rope(q).astype(jnp.bfloat16)
        kb = rope(k).astype(jnp.bfloat16)
        s = jax.lax.dot_general(qb, kb, (((1,), (1,)), ((), ())),
                                preferred_element_type=jnp.float32) * scale
        s = s + bias                       # mask padded keys
        s = s - jnp.max(s, axis=-1, keepdims=True)
        p = jnp.exp(s)
        # approx reciprocal -> EUP slot; fine for inference.
        p = p * pl.reciprocal(jnp.sum(p, axis=-1, keepdims=True), approx=True)
        outs.append(jnp.dot(p.astype(jnp.bfloat16), v,
                            preferred_element_type=jnp.float32))
    o_ref[0] = jnp.concatenate(outs, axis=-1).astype(o_ref.dtype)


# ----------------------------------------------------------------------------
# pallas_call wrappers
# ----------------------------------------------------------------------------
def pallas_linear_bias(x, w, b):
    # Patch embedding: one call per forward, so the pad/slice here is cheap.
    cfg = _chip_tuning()
    M, K = x.shape
    N = w.shape[1]
    Mp = _round_up(M, 8)
    xp = jnp.pad(x, ((0, Mp - M), (0, 0))) if Mp != M else x
    bm = _pick_tile(Mp, cfg["row_bm"], 8)
    out = pl.pallas_call(
        _linear_bias_kernel,
        out_shape=jax.ShapeDtypeStruct((Mp, N), jnp.float32),
        grid=(Mp // bm,),
        in_specs=[pl.BlockSpec((bm, K), lambda i: (i, 0)),
                  _const_spec((K, N), lambda i: (0, 0)),
                  _const_spec((1, N), lambda i: (0, 0))],
        out_specs=pl.BlockSpec((bm, N), lambda i: (i, 0)),
        compiler_params=pltpu.CompilerParams(
            dimension_semantics=("parallel",),
            vmem_limit_bytes=cfg["vmem_limit"]),
    )(xp, w, b.reshape(1, N))
    return out[:M] if Mp != M else out


def pallas_norm_matmul(x, nw, w, *, eps):
    # fused RMSNorm + (QKV) projection, tiled over rows and output columns.
    cfg = _chip_tuning()
    M, D = x.shape
    N = w.shape[1]
    bm = _pick_tile(M, cfg["row_bm"], _ROW_Q)
    tn = _pick_tile(N, cfg["qkv_tn"], 128)
    return pl.pallas_call(
        functools.partial(_norm_qkv_kernel, eps=eps),
        out_shape=jax.ShapeDtypeStruct((M, N), jnp.bfloat16),
        grid=(M // bm, N // tn),
        in_specs=[pl.BlockSpec((bm, D), lambda i, j: (i, 0)),
                  _const_spec((1, D), lambda i, j: (0, 0)),
                  pl.BlockSpec((D, tn), lambda i, j: (0, j))],
        out_specs=pl.BlockSpec((bm, tn), lambda i, j: (i, j)),
        compiler_params=pltpu.CompilerParams(
            dimension_semantics=("parallel", "parallel"),
            vmem_limit_bytes=cfg["vmem_limit"]),
    )(x, nw.reshape(1, D), w)


def pallas_residual_matmul(x, h, w, gamma):
    cfg = _chip_tuning()
    M, D = x.shape
    N = w.shape[1]
    bm = _pick_tile(M, cfg["row_bm"], _ROW_Q)
    return pl.pallas_call(
        _residual_matmul_kernel,
        out_shape=jax.ShapeDtypeStruct((M, N), jnp.bfloat16),
        grid=(M // bm,),
        in_specs=[pl.BlockSpec((bm, D), lambda i: (i, 0)),
                  pl.BlockSpec((bm, N), lambda i: (i, 0)),
                  _const_spec((D, N), lambda i: (0, 0)),
                  _const_spec((1, N), lambda i: (0, 0))],
        out_specs=pl.BlockSpec((bm, N), lambda i: (i, 0)),
        compiler_params=pltpu.CompilerParams(
            dimension_semantics=("parallel",),
            vmem_limit_bytes=cfg["vmem_limit"]),
    )(x, h, w, gamma)


def pallas_norm_swiglu_residual(h, nw, wg, wu, wd, gamma, *, eps):
    cfg = _chip_tuning()
    M, D = h.shape
    I = wg.shape[1]
    bm = _pick_tile(M, cfg["swiglu_bm"], _ROW_Q)
    ti = _pick_tile(I, cfg["swiglu_ti"], 128)
    return pl.pallas_call(
        functools.partial(_norm_swiglu_residual_kernel, eps=eps),
        out_shape=jax.ShapeDtypeStruct((M, D), jnp.bfloat16),
        grid=(M // bm, I // ti),
        in_specs=[pl.BlockSpec((bm, D), lambda i, j: (i, 0)),
                  _const_spec((1, D), lambda i, j: (0, 0)),
                  pl.BlockSpec((D, ti), lambda i, j: (0, j)),
                  pl.BlockSpec((D, ti), lambda i, j: (0, j)),
                  pl.BlockSpec((ti, D), lambda i, j: (j, 0)),
                  _const_spec((1, D), lambda i, j: (0, 0))],
        out_specs=pl.BlockSpec((bm, D), lambda i, j: (i, 0)),
        scratch_shapes=[pltpu.VMEM((bm, D), jnp.float32)],
        compiler_params=pltpu.CompilerParams(
            dimension_semantics=("parallel", "arbitrary"),
            vmem_limit_bytes=cfg["vmem_limit"]),
    )(h, nw.reshape(1, D), wg, wu, wd, gamma)


def pallas_rmsnorm(x, w, *, eps):
    cfg = _chip_tuning()
    M, D = x.shape
    bm = _pick_tile(M, cfg["row_bm"], _ROW_Q)
    return pl.pallas_call(
        functools.partial(_rmsnorm_kernel, eps=eps),
        out_shape=jax.ShapeDtypeStruct((M, D), jnp.float32),
        grid=(M // bm,),
        in_specs=[pl.BlockSpec((bm, D), lambda i: (i, 0)),
                  _const_spec((1, D), lambda i: (0, 0))],
        out_specs=pl.BlockSpec((bm, D), lambda i: (i, 0)),
        compiler_params=pltpu.CompilerParams(
            dimension_semantics=("parallel",),
            vmem_limit_bytes=cfg["vmem_limit"]),
    )(x, w.reshape(1, D))


def pallas_attention(qkv, cos, sin_signed, key_bias, num_heads, scale):
    # qkv: (B, Sp, 3D) bf16; Q/K/V sections sliced by BlockSpec (no HBM
    # transposes); output written directly in (B, Sp, D) layout.
    cfg = _chip_tuning()
    B, Sp, threeD = qkv.shape
    D = threeD // 3
    Dh = D // num_heads
    return pl.pallas_call(
        functools.partial(_attn_kernel, scale=scale, num_heads=num_heads,
                          head_dim=Dh),
        out_shape=jax.ShapeDtypeStruct((B, Sp, D), jnp.bfloat16),
        grid=(B,),
        in_specs=[pl.BlockSpec((1, Sp, D), lambda b: (b, 0, 0)),
                  pl.BlockSpec((1, Sp, D), lambda b: (b, 0, 1)),
                  pl.BlockSpec((1, Sp, D), lambda b: (b, 0, 2)),
                  _const_spec((Sp, Dh), lambda b: (0, 0)),
                  _const_spec((Sp, Dh), lambda b: (0, 0)),
                  _const_spec((1, Sp), lambda b: (0, 0))],
        out_specs=pl.BlockSpec((1, Sp, D), lambda b: (b, 0, 0)),
        compiler_params=pltpu.CompilerParams(
            dimension_semantics=("parallel",),
            vmem_limit_bytes=cfg["vmem_limit"]),
    )(qkv, qkv, qkv, cos, sin_signed, key_bias)


# ----------------------------------------------------------------------------
# Model (parameters + forward)
# ----------------------------------------------------------------------------
def make_params(key, *, dim, in_chans, patch_size, depth, num_heads, mlp_ratio,
                layer_scale_init, init_std=0.02):
    inter = int(dim * mlp_ratio)
    keys = iter(jax.random.split(key, 8 + depth * 6))

    def nrm(shape, std=init_std, dtype=jnp.bfloat16):
        return (jax.random.normal(next(keys), shape, jnp.float32) * std).astype(dtype)

    kpp = in_chans * patch_size * patch_size
    params = {
        # conv(k=p, stride=p) kernel flattened to (C*p*p, dim), stored bf16
        "patch_w": nrm((kpp, dim)),
        "patch_b": jnp.zeros((dim,), jnp.float32),
        "cls_token": nrm((1, 1, dim), dtype=jnp.float32),
        "mask_token": nrm((1, 1, dim), dtype=jnp.float32),
        "final_norm_w": jnp.ones((dim,), jnp.float32),
        "blocks": [],
    }
    out_std = init_std / math.sqrt(2 * depth)
    for _ in range(depth):
        params["blocks"].append({
            "norm1_w": jnp.ones((dim,), jnp.float32),
            "wqkv": nrm((dim, 3 * dim)),           # concatenated Q|K|V weight
            "wo": nrm((dim, dim), std=out_std),
            "gamma1": jnp.full((1, dim), layer_scale_init, jnp.float32),
            "norm2_w": jnp.ones((dim,), jnp.float32),
            "wg": nrm((dim, inter)),
            "wu": nrm((dim, inter)),
            "wd": nrm((inter, dim), std=out_std),
            "gamma2": jnp.full((1, dim), layer_scale_init, jnp.float32),
        })
    return params


def rope_2d_tables(seq_len, grid_hw, head_dim, theta_base):
    # TODO(synk): exact Rope2DPosEmb reference not provided; assumption:
    #   head_dim split in half (height / width freqs), HF rotate_half
    #   convention, patch token i -> (i // W, i % W), cls token -> (H, W).
    Hg, Wg = grid_hw
    num_patches = Hg * Wg
    assert seq_len == num_patches + 1
    hpos = jnp.concatenate(
        [jnp.array([Hg], jnp.float32),
         (jnp.arange(num_patches) // Wg).astype(jnp.float32)])
    wpos = jnp.concatenate(
        [jnp.array([Wg], jnp.float32),
         (jnp.arange(num_patches) % Wg).astype(jnp.float32)])
    dq = head_dim // 4
    inv_freq = 1.0 / (theta_base ** (jnp.arange(dq, dtype=jnp.float32) * 2.0
                                     / (head_dim // 2)))
    ang = jnp.concatenate([hpos[:, None] * inv_freq,
                           wpos[:, None] * inv_freq], axis=-1)
    cos = jnp.concatenate([jnp.cos(ang), jnp.cos(ang)], axis=-1)
    sin = jnp.concatenate([jnp.sin(ang), jnp.sin(ang)], axis=-1)
    # Fold rotate_half sign into sin so the kernel only needs a roll.
    half = head_dim // 2
    sign = jnp.concatenate([-jnp.ones((half,), jnp.float32),
                            jnp.ones((half,), jnp.float32)])
    return cos, sin * sign  # (S, head_dim) each


def patch_embed(params, image, patch_size, dim):
    # Conv2d(k=p, stride=p) == patch extraction + matmul  (image is NCHW)
    B, C, H, W = image.shape
    p = patch_size
    Hg, Wg = H // p, W // p
    patches = image.reshape(B, C, Hg, p, Wg, p).transpose(0, 2, 4, 1, 3, 5)
    patches = patches.reshape(B * Hg * Wg, C * p * p)
    out = pallas_linear_bias(patches, params["patch_w"], params["patch_b"])
    return out.reshape(B, Hg * Wg, dim)


def block_forward(bp, h, cos, sin_signed, key_bias, num_heads, scale, eps):
    B, Sp, D = h.shape
    hf = h.reshape(B * Sp, D)
    # fused RMSNorm + QKV projection (N-tiled MXU matmul), bf16 out
    qkv = pallas_norm_matmul(hf, bp["norm1_w"], bp["wqkv"], eps=eps)
    # 2D-RoPE multi-head attention, one batch per grid step, padded keys masked
    attn = pallas_attention(qkv.reshape(B, Sp, 3 * D), cos, sin_signed,
                            key_bias, num_heads, scale)
    # fused out-projection + layer-scale + residual (drop_path = identity)
    h1 = pallas_residual_matmul(attn.reshape(B * Sp, D), hf, bp["wo"],
                                bp["gamma1"])
    # fused RMSNorm + SwiGLU MLP (streamed I-tiles) + layer-scale + residual
    h2 = pallas_norm_swiglu_residual(h1, bp["norm2_w"], bp["wg"], bp["wu"],
                                     bp["wd"], bp["gamma2"], eps=eps)
    return h2.reshape(B, Sp, D)


def vit_mim_forward(params, image, bool_masked_pos, *, patch_size, dim,
                    num_heads, rope_base=10000, norm_eps=1e-6):
    """forward(..., return_all_tokens=True): returns last_hidden_state (B,S,D)."""
    B = image.shape[0]
    head_dim = dim // num_heads
    scale = head_dim ** (-0.5)

    hidden = patch_embed(params, image, patch_size, dim)             # (B, Np, D)
    Hg = image.shape[2] // patch_size
    Wg = image.shape[3] // patch_size

    # mask-token blending + cls token prepend (glue, elementwise, once)
    w = bool_masked_pos.astype(jnp.float32)[..., None]               # (B, Np, 1)
    hidden = hidden * (1.0 - w) + params["mask_token"] * w
    cls = jnp.broadcast_to(params["cls_token"], (B, 1, dim))
    hidden = jnp.concatenate([cls, hidden], axis=1)                  # (B, S, D)
    S = hidden.shape[1]

    # Pad the sequence ONCE (16-row quantum keeps bf16 blocks sublane-dense
    # and B*Sp divisible by the row tiles). Padded keys are masked out in
    # attention; padded rows are sliced off after the final norm. The residual
    # stream between kernels is bf16 (norm/softmax/residual math stays f32).
    Sp = _round_up(S, _ROW_Q)
    if Sp != S:
        hidden = jnp.pad(hidden, ((0, 0), (0, Sp - S), (0, 0)))
    hidden = hidden.astype(jnp.bfloat16)

    cos, sin_signed = rope_2d_tables(S, (Hg, Wg), head_dim, rope_base)
    if Sp != S:
        cos = jnp.pad(cos, ((0, Sp - S), (0, 0)))
        sin_signed = jnp.pad(sin_signed, ((0, Sp - S), (0, 0)))
    key_bias = jnp.where(jnp.arange(Sp) < S, 0.0, -1e30
                         ).astype(jnp.float32).reshape(1, Sp)

    for bp in params["blocks"]:
        hidden = block_forward(bp, hidden, cos, sin_signed, key_bias,
                               num_heads, scale, norm_eps)

    last = pallas_rmsnorm(hidden.reshape(B * Sp, dim),
                          params["final_norm_w"], eps=norm_eps)
    return last.reshape(B, Sp, dim)[:, :S]
    # TODO(synk): return_masked_tokens path (boolean masked_select -> lm_head)
    # has a data-dependent output shape; not implemented here.


# ----------------------------------------------------------------------------
if __name__ == "__main__":
    # small config consistent with the module's forward
    B, C = 2, 3
    IMG, PATCH = 32, 16          # grid 2x2 -> 4 patches, seq = 5
    DIM, HEADS, DEPTH = 256, 2, 2   # head_dim = 128 -> lane-dense head slices
    MLP_RATIO = 4.0

    # resolve chip tuning + Buffered(1) feature probe once, outside the jit
    _ = _chip_tuning()
    _ = _buffered_const_ok()

    key = jax.random.PRNGKey(0)
    k_img, k_par = jax.random.split(key)

    image = jax.random.normal(k_img, (B, C, IMG, IMG), jnp.float32)  # NCHW
    num_patches = (IMG // PATCH) ** 2
    bool_masked_pos = jnp.array([[1, 0, 0, 1], [0, 1, 1, 0]], dtype=jnp.bool_)
    assert bool_masked_pos.shape == (B, num_patches)

    params = make_params(
        k_par, dim=DIM, in_chans=C, patch_size=PATCH, depth=DEPTH,
        num_heads=HEADS, mlp_ratio=MLP_RATIO, layer_scale_init=0.01,
    )

    fwd = jax.jit(functools.partial(
        vit_mim_forward, patch_size=PATCH, dim=DIM, num_heads=HEADS))
    out = fwd(params, image, bool_masked_pos)
    out = jax.block_until_ready(out)
    assert out.shape == (B, num_patches + 1, DIM)
    assert bool(jnp.isfinite(out).all())
    print("KERNEL_OK")
</pallas_src>

<mosaic_0001>
module attributes {stable_mosaic.version = 11 : i64} {
  func.func @k(%arg0: i32, %arg1: memref<8x128xf32, #tpu.memory_space<vmem>>, %arg2: memref<8x128xf32, #tpu.memory_space<vmem>>, %arg3: memref<8x128xf32, #tpu.memory_space<vmem>>) attributes {dimension_semantics = [#tpu.dimension_semantics<arbitrary>], iteration_bounds = array<i64: 2>, scalar_prefetch = 0 : i64, scratch_operands = 0 : i64, tpu.core_type = #tpu.core_type<tc>, window_params = [{transform_indices = @transform_0, window_bounds = array<i64: 8, 128>}, {pipeline_mode = #tpu.pipeline_mode<synchronous>, transform_indices = @transform_1, window_bounds = array<i64: 8, 128>}, {transform_indices = @transform_2, window_bounds = array<i64: 8, 128>}]} {
    %c0 = arith.constant 0 : index
    %c0_0 = arith.constant 0 : index
    %0 = vector.load %arg1[%c0, %c0_0] : memref<8x128xf32, #tpu.memory_space<vmem>>, vector<8x128xf32>
    %c0_1 = arith.constant 0 : index
    %c0_2 = arith.constant 0 : index
    %1 = vector.load %arg2[%c0_1, %c0_2] : memref<8x128xf32, #tpu.memory_space<vmem>>, vector<8x128xf32>
    %2 = arith.addf %0, %1 : vector<8x128xf32>
    %c0_3 = arith.constant 0 : index
    %c0_4 = arith.constant 0 : index
    %3 = vector.load %arg3[%c0_3, %c0_4] : memref<8x128xf32, #tpu.memory_space<vmem>>, vector<8x128xf32>
    tpu.vector_store %arg3[%c0_3, %c0_4], %2 {strides = array<i32>} : memref<8x128xf32, #tpu.memory_space<vmem>>, vector<8x128xf32>,
    return
  }
  func.func @transform_0(%arg0: i32) -> (i32, i32) {
    %c0_i32 = arith.constant 0 : i32
    %c0_i32_0 = arith.constant 0 : i32
    return %arg0, %c0_i32 : i32, i32
  }
  func.func @transform_1(%arg0: i32) -> (i32, i32) {
    %c0_i32 = arith.constant 0 : i32
    %c0_i32_0 = arith.constant 0 : i32
    %c0_i32_1 = arith.constant 0 : i32
    return %c0_i32, %c0_i32_0 : i32, i32
  }
  func.func @transform_2(%arg0: i32) -> (i32, i32) {
    %c0_i32 = arith.constant 0 : i32
    %c0_i32_0 = arith.constant 0 : i32
    return %arg0, %c0_i32 : i32, i32
  }
}

module attributes {stable_mosaic.version = 11 : i64} {
  func.func @_linear_bias_kernel(%arg0: i32, %arg1: memref<8x768xf32, #tpu.memory_space<vmem>>, %arg2: memref<768x256xbf16, #tpu.memory_space<vmem>>, %arg3: memref<1x256xf32, #tpu.memory_space<vmem>>, %arg4: memref<8x256xf32, #tpu.memory_space<vmem>>) attributes {dimension_semantics = [#tpu.dimension_semantics<parallel>], iteration_bounds = array<i64: 1>, scalar_prefetch = 0 : i64, scratch_operands = 0 : i64, tpu.core_type = #tpu.core_type<tc>, window_params = [{transform_indices = @transform_0, window_bounds = array<i64: 8, 768>}, {pipeline_mode = #tpu.pipeline_mode<synchronous>, transform_indices = @transform_1, window_bounds = array<i64: 768, 256>}, {pipeline_mode = #tpu.pipeline_mode<synchronous>, transform_indices = @transform_2, window_bounds = array<i64: 1, 256>}, {transform_indices = @transform_3, window_bounds = array<i64: 8, 256>}]} {
    %c0 = arith.constant 0 : index
    %c0_0 = arith.constant 0 : index
    %0 = vector.load %arg1[%c0, %c0_0] : memref<8x768xf32, #tpu.memory_space<vmem>>, vector<8x768xf32>
    %1 = arith.truncf %0 : vector<8x768xf32> to vector<8x768xbf16>
    %c0_1 = arith.constant 0 : index
    %c0_2 = arith.constant 0 : index
    %2 = vector.load %arg2[%c0_1, %c0_2] : memref<768x256xbf16, #tpu.memory_space<vmem>>, vector<768x256xbf16>
    %cst = arith.constant dense<0.000000e+00> : vector<8x256xf32>
    %3 = tpu.matmul %1, %2, %cst {dimension_numbers = #tpu.dot_dimension_numbers<[1], [0], [0], [1], [0, 0, 1, 1], [], []>} : vector<8x768xbf16>, vector<768x256xbf16>, vector<8x256xf32> -> vector<8x256xf32>
    %c0_3 = arith.constant 0 : index
    %c0_4 = arith.constant 0 : index
    %4 = vector.load %arg3[%c0_3, %c0_4] : memref<1x256xf32, #tpu.memory_space<vmem>>, vector<1x256xf32>
    %5 = vector.broadcast %4 : vector<1x256xf32> to vector<8x256xf32>
    %6 = arith.addf %3, %5 : vector<8x256xf32>
    %c0_5 = arith.constant 0 : index
    %c0_6 = arith.constant 0 : index
    %7 = vector.load %arg4[%c0_5, %c0_6] : memref<8x256xf32, #tpu.memory_space<vmem>>, vector<8x256xf32>
    tpu.vector_store %arg4[%c0_5, %c0_6], %6 {strides = array<i32>} : memref<8x256xf32, #tpu.memory_space<vmem>>, vector<8x256xf32>,
    return
  }
  func.func @transform_0(%arg0: i32) -> (i32, i32) {
    %c0_i32 = arith.constant 0 : i32
    %c0_i32_0 = arith.constant 0 : i32
    return %arg0, %c0_i32 : i32, i32
  }
  func.func @transform_1(%arg0: i32) -> (i32, i32) {
    %c0_i32 = arith.constant 0 : i32
    %c0_i32_0 = arith.constant 0 : i32
    %c0_i32_1 = arith.constant 0 : i32
    return %c0_i32, %c0_i32_0 : i32, i32
  }
  func.func @transform_2(%arg0: i32) -> (i32, i32) {
    %c0_i32 = arith.constant 0 : i32
    %c0_i32_0 = arith.constant 0 : i32
    %c0_i32_1 = arith.constant 0 : i32
    return %c0_i32, %c0_i32_0 : i32, i32
  }
  func.func @transform_3(%arg0: i32) -> (i32, i32) {
    %c0_i32 = arith.constant 0 : i32
    %c0_i32_0 = arith.constant 0 : i32
    return %arg0, %c0_i32 : i32, i32
  }
}

module attributes {stable_mosaic.version = 11 : i64} {
  func.func @_norm_qkv_kernel(%arg0: i32, %arg1: i32, %arg2: memref<32x256xbf16, #tpu.memory_space<vmem>>, %arg3: memref<1x256xf32, #tpu.memory_space<vmem>>, %arg4: memref<256x768xbf16, #tpu.memory_space<vmem>>, %arg5: memref<32x768xbf16, #tpu.memory_space<vmem>>) attributes {dimension_semantics = [#tpu.dimension_semantics<parallel>, #tpu.dimension_semantics<parallel>], iteration_bounds = array<i64: 1, 1>, scalar_prefetch = 0 : i64, scratch_operands = 0 : i64, tpu.core_type = #tpu.core_type<tc>, window_params = [{transform_indices = @transform_0, window_bounds = array<i64: 32, 256>}, {pipeline_mode = #tpu.pipeline_mode<synchronous>, transform_indices = @transform_1, window_bounds = array<i64: 1, 256>}, {transform_indices = @transform_2, window_bounds = array<i64: 256, 768>}, {transform_indices = @transform_3, window_bounds = array<i64: 32, 768>}]} {
    %c0 = arith.constant 0 : index
    %c0_0 = arith.constant 0 : index
    %0 = vector.load %arg2[%c0, %c0_0] : memref<32x256xbf16, #tpu.memory_space<vmem>>, vector<32x256xbf16>
    %1 = arith.extf %0 : vector<32x256xbf16> to vector<32x256xf32>
    %2 = arith.mulf %1, %1 : vector<32x256xf32>
    %cst = arith.constant dense<0.000000e+00> : vector<32xf32>
    %3 = vector.multi_reduction <add>, %2, %cst [1] : vector<32x256xf32> to vector<32xf32>
    %4 = vector.shape_cast %3 : vector<32xf32> to vector<32x1xf32>
    %cst_1 = arith.constant 2.560000e+02 : f32
    %5 = vector.broadcast %cst_1 : f32 to vector<32x1xf32>
    %6 = arith.divf %4, %5 : vector<32x1xf32>
    %cst_2 = arith.constant 9.99999997E-7 : f32
    %7 = vector.broadcast %cst_2 : f32 to vector<32x1xf32>
    %8 = arith.addf %6, %7 : vector<32x1xf32>
    %9 = math.rsqrt %8 : vector<32x1xf32>
    %10 = vector.broadcast %9 : vector<32x1xf32> to vector<32x256xf32>
    %11 = arith.mulf %1, %10 : vector<32x256xf32>
    %c0_3 = arith.constant 0 : index
    %c0_4 = arith.constant 0 : index
    %12 = vector.load %arg3[%c0_3, %c0_4] : memref<1x256xf32, #tpu.memory_space<vmem>>, vector<1x256xf32>
    %13 = vector.broadcast %12 : vector<1x256xf32> to vector<32x256xf32>
    %14 = arith.mulf %11, %13 : vector<32x256xf32>
    %15 = arith.truncf %14 : vector<32x256xf32> to vector<32x256xbf16>
    %c0_5 = arith.constant 0 : index
    %c0_6 = arith.constant 0 : index
    %16 = vector.load %arg4[%c0_5, %c0_6] : memref<256x768xbf16, #tpu.memory_space<vmem>>, vector<256x768xbf16>
    %cst_7 = arith.constant dense<0.000000e+00> : vector<32x768xf32>
    %17 = tpu.matmul %15, %16, %cst_7 {dimension_numbers = #tpu.dot_dimension_numbers<[1], [0], [0], [1], [0, 0, 1, 1], [], []>} : vector<32x256xbf16>, vector<256x768xbf16>, vector<32x768xf32> -> vector<32x768xf32>
    %18 = arith.truncf %17 : vector<32x768xf32> to vector<32x768xbf16>
    %c0_8 = arith.constant 0 : index
    %c0_9 = arith.constant 0 : index
    %19 = vector.load %arg5[%c0_8, %c0_9] : memref<32x768xbf16, #tpu.memory_space<vmem>>, vector<32x768xbf16>
    tpu.vector_store %arg5[%c0_8, %c0_9], %18 {strides = array<i32>} : memref<32x768xbf16, #tpu.memory_space<vmem>>, vector<32x768xbf16>,
    return
  }
  func.func @transform_0(%arg0: i32, %arg1: i32) -> (i32, i32) {
    %c0_i32 = arith.constant 0 : i32
    %c0_i32_0 = arith.constant 0 : i32
    return %arg0, %c0_i32 : i32, i32
  }
  func.func @transform_1(%arg0: i32, %arg1: i32) -> (i32, i32) {
    %c0_i32 = arith.constant 0 : i32
    %c0_i32_0 = arith.constant 0 : i32
    %c0_i32_1 = arith.constant 0 : i32
    return %c0_i32, %c0_i32_0 : i32, i32
  }
  func.func @transform_2(%arg0: i32, %arg1: i32) -> (i32, i32) {
    %c0_i32 = arith.constant 0 : i32
    %c0_i32_0 = arith.constant 0 : i32
    return %c0_i32, %arg1 : i32, i32
  }
  func.func @transform_3(%arg0: i32, %arg1: i32) -> (i32, i32) {
    %c0_i32 = arith.constant 0 : i32
    return %arg0, %arg1 : i32, i32
  }
}

module attributes {stable_mosaic.version = 11 : i64} {
  func.func @_residual_matmul_kernel(%arg0: i32, %arg1: memref<32x256xbf16, #tpu.memory_space<vmem>>, %arg2: memref<32x256xbf16, #tpu.memory_space<vmem>>, %arg3: memref<256x256xbf16, #tpu.memory_space<vmem>>, %arg4: memref<1x256xf32, #tpu.memory_space<vmem>>, %arg5: memref<32x256xbf16, #tpu.memory_space<vmem>>) attributes {dimension_semantics = [#tpu.dimension_semantics<parallel>], iteration_bounds = array<i64: 1>, scalar_prefetch = 0 : i64, scratch_operands = 0 : i64, tpu.core_type = #tpu.core_type<tc>, window_params = [{transform_indices = @transform_0, window_bounds = array<i64: 32, 256>}, {transform_indices = @transform_1, window_bounds = array<i64: 32, 256>}, {pipeline_mode = #tpu.pipeline_mode<synchronous>, transform_indices = @transform_2, window_bounds = array<i64: 256, 256>}, {pipeline_mode = #tpu.pipeline_mode<synchronous>, transform_indices = @transform_3, window_bounds = array<i64: 1, 256>}, {transform_indices = @transform_4, window_bounds = array<i64: 32, 256>}]} {
    %c0 = arith.constant 0 : index
    %c0_0 = arith.constant 0 : index
    %0 = vector.load %arg1[%c0, %c0_0] : memref<32x256xbf16, #tpu.memory_space<vmem>>, vector<32x256xbf16>
    %c0_1 = arith.constant 0 : index
    %c0_2 = arith.constant 0 : index
    %1 = vector.load %arg3[%c0_1, %c0_2] : memref<256x256xbf16, #tpu.memory_space<vmem>>, vector<256x256xbf16>
    %cst = arith.constant dense<0.000000e+00> : vector<32x256xf32>
    %2 = tpu.matmul %0, %1, %cst {dimension_numbers = #tpu.dot_dimension_numbers<[1], [0], [0], [1], [0, 0, 1, 1], [], []>} : vector<32x256xbf16>, vector<256x256xbf16>, vector<32x256xf32> -> vector<32x256xf32>
    %c0_3 = arith.constant 0 : index
    %c0_4 = arith.constant 0 : index
    %3 = vector.load %arg2[%c0_3, %c0_4] : memref<32x256xbf16, #tpu.memory_space<vmem>>, vector<32x256xbf16>
    %4 = arith.extf %3 : vector<32x256xbf16> to vector<32x256xf32>
    %c0_5 = arith.constant 0 : index
    %c0_6 = arith.constant 0 : index
    %5 = vector.load %arg4[%c0_5, %c0_6] : memref<1x256xf32, #tpu.memory_space<vmem>>, vector<1x256xf32>
    %6 = vector.broadcast %5 : vector<1x256xf32> to vector<32x256xf32>
    %7 = arith.mulf %6, %2 : vector<32x256xf32>
    %8 = arith.addf %4, %7 : vector<32x256xf32>
    %9 = arith.truncf %8 : vector<32x256xf32> to vector<32x256xbf16>
    %c0_7 = arith.constant 0 : index
    %c0_8 = arith.constant 0 : index
    %10 = vector.load %arg5[%c0_7, %c0_8] : memref<32x256xbf16, #tpu.memory_space<vmem>>, vector<32x256xbf16>
    tpu.vector_store %arg5[%c0_7, %c0_8], %9 {strides = array<i32>} : memref<32x256xbf16, #tpu.memory_space<vmem>>, vector<32x256xbf16>,
    return
  }
  func.func @transform_0(%arg0: i32) -> (i32, i32) {
    %c0_i32 = arith.constant 0 : i32
    %c0_i32_0 = arith.constant 0 : i32
    return %arg0, %c0_i32 : i32, i32
  }
  func.func @transform_1(%arg0: i32) -> (i32, i32) {
    %c0_i32 = arith.constant 0 : i32
    %c0_i32_0 = arith.constant 0 : i32
    return %arg0, %c0_i32 : i32, i32
  }
  func.func @transform_2(%arg0: i32) -> (i32, i32) {
    %c0_i32 = arith.constant 0 : i32
    %c0_i32_0 = arith.constant 0 : i32
    %c0_i32_1 = arith.constant 0 : i32
    return %c0_i32, %c0_i32_0 : i32, i32
  }
  func.func @transform_3(%arg0: i32) -> (i32, i32) {
    %c0_i32 = arith.constant 0 : i32
    %c0_i32_0 = arith.constant 0 : i32
    %c0_i32_1 = arith.constant 0 : i32
    return %c0_i32, %c0_i32_0 : i32, i32
  }
  func.func @transform_4(%arg0: i32) -> (i32, i32) {
    %c0_i32 = arith.constant 0 : i32
    %c0_i32_0 = arith.constant 0 : i32
    return %arg0, %c0_i32 : i32, i32
  }
}

module attributes {stable_mosaic.version = 11 : i64} {
  func.func @_attn_kernel(%arg0: i32, %arg1: memref<1x16x256xbf16, #tpu.memory_space<vmem>>, %arg2: memref<1x16x256xbf16, #tpu.memory_space<vmem>>, %arg3: memref<1x16x256xbf16, #tpu.memory_space<vmem>>, %arg4: memref<16x128xf32, #tpu.memory_space<vmem>>, %arg5: memref<16x128xf32, #tpu.memory_space<vmem>>, %arg6: memref<1x16xf32, #tpu.memory_space<vmem>>, %arg7: memref<1x16x256xbf16, #tpu.memory_space<vmem>>) attributes {dimension_semantics = [#tpu.dimension_semantics<parallel>], iteration_bounds = array<i64: 2>, scalar_prefetch = 0 : i64, scratch_operands = 0 : i64, tpu.core_type = #tpu.core_type<tc>, window_params = [{transform_indices = @transform_0, window_bounds = array<i64: 1, 16, 256>}, {transform_indices = @transform_1, window_bounds = array<i64: 1, 16, 256>}, {transform_indices = @transform_2, window_bounds = array<i64: 1, 16, 256>}, {pipeline_mode = #tpu.pipeline_mode<synchronous>, transform_indices = @transform_3, window_bounds = array<i64: 16, 128>}, {pipeline_mode = #tpu.pipeline_mode<synchronous>, transform_indices = @transform_4, window_bounds = array<i64: 16, 128>}, {pipeline_mode = #tpu.pipeline_mode<synchronous>, transform_indices = @transform_5, window_bounds = array<i64: 1, 16>}, {transform_indices = @transform_6, window_bounds = array<i64: 1, 16, 256>}]} {
    %c0 = arith.constant 0 : index
    %c0_0 = arith.constant 0 : index
    %c0_1 = arith.constant 0 : index
    %0 = vector.load %arg1[%c0, %c0_0, %c0_1] : memref<1x16x256xbf16, #tpu.memory_space<vmem>>, vector<1x16x256xbf16>
    %1 = vector.shape_cast %0 : vector<1x16x256xbf16> to vector<16x256xbf16>
    %c0_2 = arith.constant 0 : index
    %c0_3 = arith.constant 0 : index
    %c0_4 = arith.constant 0 : index
    %2 = vector.load %arg2[%c0_2, %c0_3, %c0_4] : memref<1x16x256xbf16, #tpu.memory_space<vmem>>, vector<1x16x256xbf16>
    %3 = vector.shape_cast %2 : vector<1x16x256xbf16> to vector<16x256xbf16>
    %c0_5 = arith.constant 0 : index
    %c0_6 = arith.constant 0 : index
    %c0_7 = arith.constant 0 : index
    %4 = vector.load %arg3[%c0_5, %c0_6, %c0_7] : memref<1x16x256xbf16, #tpu.memory_space<vmem>>, vector<1x16x256xbf16>
    %5 = vector.shape_cast %4 : vector<1x16x256xbf16> to vector<16x256xbf16>
    %c0_8 = arith.constant 0 : index
    %c0_9 = arith.constant 0 : index
    %6 = vector.load %arg4[%c0_8, %c0_9] : memref<16x128xf32, #tpu.memory_space<vmem>>, vector<16x128xf32>
    %c0_10 = arith.constant 0 : index
    %c0_11 = arith.constant 0 : index
    %7 = vector.load %arg5[%c0_10, %c0_11] : memref<16x128xf32, #tpu.memory_space<vmem>>, vector<16x128xf32>
    %c0_12 = arith.constant 0 : index
    %c0_13 = arith.constant 0 : index
    %8 = vector.load %arg6[%c0_12, %c0_13] : memref<1x16xf32, #tpu.memory_space<vmem>>, vector<1x16xf32>
    %9 = vector.extract_strided_slice %1 {offsets = [0, 0], sizes = [16, 128], strides = [1, 1]} : vector<16x256xbf16> to vector<16x128xbf16>
    %10 = arith.extf %9 : vector<16x128xbf16> to vector<16x128xf32>
    %11 = vector.extract_strided_slice %3 {offsets = [0, 0], sizes = [16, 128], strides = [1, 1]} : vector<16x256xbf16> to vector<16x128xbf16>
    %12 = arith.extf %11 : vector<16x128xbf16> to vector<16x128xf32>
    %13 = vector.extract_strided_slice %5 {offsets = [0, 0], sizes = [16, 128], strides = [1, 1]} : vector<16x256xbf16> to vector<16x128xbf16>
    %14 = arith.mulf %10, %6 : vector<16x128xf32>
    %c64_i32 = arith.constant 64 : i32
    %15 = tpu.dynamic_rotate %10 by %c64_i32 dim 1 : vector<16x128xf32>, i32 -> vector<16x128xf32>
    %16 = arith.mulf %15, %7 : vector<16x128xf32>
    %17 = arith.addf %14, %16 : vector<16x128xf32>
    %18 = arith.truncf %17 : vector<16x128xf32> to vector<16x128xbf16>
    %19 = arith.mulf %12, %6 : vector<16x128xf32>
    %c64_i32_14 = arith.constant 64 : i32
    %20 = tpu.dynamic_rotate %12 by %c64_i32_14 dim 1 : vector<16x128xf32>, i32 -> vector<16x128xf32>
    %21 = arith.mulf %20, %7 : vector<16x128xf32>
    %22 = arith.addf %19, %21 : vector<16x128xf32>
    %23 = arith.truncf %22 : vector<16x128xf32> to vector<16x128xbf16>
    %cst = arith.constant dense<0.000000e+00> : vector<16x16xf32>
    %24 = tpu.matmul %18, %23, %cst {dimension_numbers = #tpu.dot_dimension_numbers<[1], [1], [0], [0], [0, 0, 1, 0], [], []>} : vector<16x128xbf16>, vector<16x128xbf16>, vector<16x16xf32> -> vector<16x16xf32>
    %cst_15 = arith.constant 0.0883883461 : f32
    %25 = vector.broadcast %cst_15 : f32 to vector<16x16xf32>
    %26 = arith.mulf %24, %25 : vector<16x16xf32>
    %27 = vector.broadcast %8 : vector<1x16xf32> to vector<16x16xf32>
    %28 = arith.addf %26, %27 : vector<16x16xf32>
    %cst_16 = arith.constant dense<0xFF800000> : vector<16xf32>
    %29 = vector.multi_reduction <maximumf>, %28, %cst_16 [1] : vector<16x16xf32> to vector<16xf32>
    %30 = vector.shape_cast %29 : vector<16xf32> to vector<16x1xf32>
    %31 = vector.broadcast %30 : vector<16x1xf32> to vector<16x16xf32>
    %32 = arith.subf %28, %31 : vector<16x16xf32>
    %33 = math.exp %32 : vector<16x16xf32>
    %cst_17 = arith.constant dense<0.000000e+00> : vector<16xf32>
    %34 = vector.multi_reduction <add>, %33, %cst_17 [1] : vector<16x16xf32> to vector<16xf32>
    %35 = vector.shape_cast %34 : vector<16xf32> to vector<16x1xf32>
    %36 = tpu.reciprocal %35 {approx = true} : vector<16x1xf32> -> vector<16x1xf32>
    %37 = vector.broadcast %36 : vector<16x1xf32> to vector<16x16xf32>
    %38 = arith.mulf %33, %37 : vector<16x16xf32>
    %39 = arith.truncf %38 : vector<16x16xf32> to vector<16x16xbf16>
    %cst_18 = arith.constant dense<0.000000e+00> : vector<16x128xf32>
    %40 = tpu.matmul %39, %13, %cst_18 {dimension_numbers = #tpu.dot_dimension_numbers<[1], [0], [0], [1], [0, 0, 1, 1], [], []>} : vector<16x16xbf16>, vector<16x128xbf16>, vector<16x128xf32> -> vector<16x128xf32>
    %41 = vector.extract_strided_slice %1 {offsets = [0, 128], sizes = [16, 128], strides = [1, 1]} : vector<16x256xbf16> to vector<16x128xbf16>
    %42 = arith.extf %41 : vector<16x128xbf16> to vector<16x128xf32>
    %43 = vector.extract_strided_slice %3 {offsets = [0, 128], sizes = [16, 128], strides = [1, 1]} : vector<16x256xbf16> to vector<16x128xbf16>
    %44 = arith.extf %43 : vector<16x128xbf16> to vector<16x128xf32>
    %45 = vector.extract_strided_slice %5 {offsets = [0, 128], sizes = [16, 128], strides = [1, 1]} : vector<16x256xbf16> to vector<16x128xbf16>
    %46 = arith.mulf %42, %6 : vector<16x128xf32>
    %c64_i32_19 = arith.constant 64 : i32
    %47 = tpu.dynamic_rotate %42 by %c64_i32_19 dim 1 : vector<16x128xf32>, i32 -> vector<16x128xf32>
    %48 = arith.mulf %47, %7 : vector<16x128xf32>
    %49 = arith.addf %46, %48 : vector<16x128xf32>
    %50 = arith.truncf %49 : vector<16x128xf32> to vector<16x128xbf16>
    %51 = arith.mulf %44, %6 : vector<16x128xf32>
    %c64_i32_20 = arith.constant 64 : i32
    %52 = tpu.dynamic_rotate %44 by %c64_i32_20 dim 1 : vector<16x128xf32>, i32 -> vector<16x128xf32>
    %53 = arith.mulf %52, %7 : vector<16x128xf32>
    %54 = arith.addf %51, %53 : vector<16x128xf32>
    %55 = arith.truncf %54 : vector<16x128xf32> to vector<16x128xbf16>
    %cst_21 = arith.constant dense<0.000000e+00> : vector<16x16xf32>
    %56 = tpu.matmul %50, %55, %cst_21 {dimension_numbers = #tpu.dot_dimension_numbers<[1], [1], [0], [0], [0, 0, 1, 0], [], []>} : vector<16x128xbf16>, vector<16x128xbf16>, vector<16x16xf32> -> vector<16x16xf32>
    %cst_22 = arith.constant 0.0883883461 : f32
    %57 = vector.broadcast %cst_22 : f32 to vector<16x16xf32>
    %58 = arith.mulf %56, %57 : vector<16x16xf32>
    %59 = vector.broadcast %8 : vector<1x16xf32> to vector<16x16xf32>
    %60 = arith.addf %58, %59 : vector<16x16xf32>
    %cst_23 = arith.constant dense<0xFF800000> : vector<16xf32>
    %61 = vector.multi_reduction <maximumf>, %60, %cst_23 [1] : vector<16x16xf32> to vector<16xf32>
    %62 = vector.shape_cast %61 : vector<16xf32> to vector<16x1xf32>
    %63 = vector.broadcast %62 : vector<16x1xf32> to vector<16x16xf32>
    %64 = arith.subf %60, %63 : vector<16x16xf32>
    %65 = math.exp %64 : vector<16x16xf32>
    %cst_24 = arith.constant dense<0.000000e+00> : vector<16xf32>
    %66 = vector.multi_reduction <add>, %65, %cst_24 [1] : vector<16x16xf32> to vector<16xf32>
    %67 = vector.shape_cast %66 : vector<16xf32> to vector<16x1xf32>
    %68 = tpu.reciprocal %67 {approx = true} : vector<16x1xf32> -> vector<16x1xf32>
    %69 = vector.broadcast %68 : vector<16x1xf32> to vector<16x16xf32>
    %70 = arith.mulf %65, %69 : vector<16x16xf32>
    %71 = arith.truncf %70 : vector<16x16xf32> to vector<16x16xbf16>
    %cst_25 = arith.constant dense<0.000000e+00> : vector<16x128xf32>
    %72 = tpu.matmul %71, %45, %cst_25 {dimension_numbers = #tpu.dot_dimension_numbers<[1], [0], [0], [1], [0, 0, 1, 1], [], []>} : vector<16x16xbf16>, vector<16x128xbf16>, vector<16x128xf32> -> vector<16x128xf32>
    %73 = tpu.concatenate %40, %72 in 1 : vector<16x128xf32>, vector<16x128xf32> -> vector<16x256xf32>
    %74 = arith.truncf %73 : vector<16x256xf32> to vector<16x256xbf16>
    %c0_26 = arith.constant 0 : index
    %c0_27 = arith.constant 0 : index
    %c0_28 = arith.constant 0 : index
    %75 = vector.load %arg7[%c0_26, %c0_27, %c0_28] : memref<1x16x256xbf16, #tpu.memory_space<vmem>>, vector<1x16x256xbf16>
    %76 = vector.shape_cast %75 : vector<1x16x256xbf16> to vector<16x256xbf16>
    %77 = vector.shape_cast %74 : vector<16x256xbf16> to vector<1x16x256xbf16>
    tpu.vector_store %arg7[%c0_26, %c0_27, %c0_28], %77 {strides = array<i32>} : memref<1x16x256xbf16, #tpu.memory_space<vmem>>, vector<1x16x256xbf16>,
    return
  }
  func.func @transform_0(%arg0: i32) -> (i32, i32, i32) {
    %c0_i32 = arith.constant 0 : i32
    %c0_i32_0 = arith.constant 0 : i32
    %c0_i32_1 = arith.constant 0 : i32
    return %arg0, %c0_i32, %c0_i32_0 : i32, i32, i32
  }
  func.func @transform_1(%arg0: i32) -> (i32, i32, i32) {
    %c0_i32 = arith.constant 0 : i32
    %c1_i32 = arith.constant 1 : i32
    %c0_i32_0 = arith.constant 0 : i32
    return %arg0, %c0_i32, %c1_i32 : i32, i32, i32
  }
  func.func @transform_2(%arg0: i32) -> (i32, i32, i32) {
    %c0_i32 = arith.constant 0 : i32
    %c2_i32 = arith.constant 2 : i32
    %c0_i32_0 = arith.constant 0 : i32
    return %arg0, %c0_i32, %c2_i32 : i32, i32, i32
  }
  func.func @transform_3(%arg0: i32) -> (i32, i32) {
    %c0_i32 = arith.constant 0 : i32
    %c0_i32_0 = arith.constant 0 : i32
    %c0_i32_1 = arith.constant 0 : i32
    return %c0_i32, %c0_i32_0 : i32, i32
  }
  func.func @transform_4(%arg0: i32) -> (i32, i32) {
    %c0_i32 = arith.constant 0 : i32
    %c0_i32_0 = arith.constant 0 : i32
    %c0_i32_1 = arith.constant 0 : i32
    return %c0_i32, %c0_i32_0 : i32, i32
  }
  func.func @transform_5(%arg0: i32) -> (i32, i32) {
    %c0_i32 = arith.constant 0 : i32
    %c0_i32_0 = arith.constant 0 : i32
    %c0_i32_1 = arith.constant 0 : i32
    return %c0_i32, %c0_i32_0 : i32, i32
  }
  func.func @transform_6(%arg0: i32) -> (i32, i32, i32) {
    %c0_i32 = arith.constant 0 : i32
    %c0_i32_0 = arith.constant 0 : i32
    %c0_i32_1 = arith.constant 0 : i32
    return %arg0, %c0_i32, %c0_i32_0 : i32, i32, i32
  }
}

module attributes {stable_mosaic.version = 11 : i64} {
  func.func @_norm_swiglu_residual_kernel(%arg0: i32, %arg1: i32, %arg2: memref<32x256xbf16, #tpu.memory_space<vmem>>, %arg3: memref<1x256xf32, #tpu.memory_space<vmem>>, %arg4: memref<256x512xbf16, #tpu.memory_space<vmem>>, %arg5: memref<256x512xbf16, #tpu.memory_space<vmem>>, %arg6: memref<512x256xbf16, #tpu.memory_space<vmem>>, %arg7: memref<1x256xf32, #tpu.memory_space<vmem>>, %arg8: memref<32x256xbf16, #tpu.memory_space<vmem>>, %arg9: memref<32x256xf32, #tpu.memory_space<vmem>>) attributes {dimension_semantics = [#tpu.dimension_semantics<parallel>, #tpu.dimension_semantics<arbitrary>], iteration_bounds = array<i64: 1, 2>, scalar_prefetch = 0 : i64, scratch_operands = 1 : i64, tpu.core_type = #tpu.core_type<tc>, window_params = [{transform_indices = @transform_0, window_bounds = array<i64: 32, 256>}, {pipeline_mode = #tpu.pipeline_mode<synchronous>, transform_indices = @transform_1, window_bounds = array<i64: 1, 256>}, {transform_indices = @transform_2, window_bounds = array<i64: 256, 512>}, {transform_indices = @transform_3, window_bounds = array<i64: 256, 512>}, {transform_indices = @transform_4, window_bounds = array<i64: 512, 256>}, {pipeline_mode = #tpu.pipeline_mode<synchronous>, transform_indices = @transform_5, window_bounds = array<i64: 1, 256>}, {transform_indices = @transform_6, window_bounds = array<i64: 32, 256>}]} {
    %c0_i32 = arith.constant 0 : i32
    %0 = arith.cmpi eq, %arg1, %c0_i32 : i32
    %1 = arith.extui %0 : i1 to i32
    %c0_i32_0 = arith.constant 0 : i32
    %2 = arith.cmpi ne, %1, %c0_i32_0 : i32
    scf.if %2 {
      %cst_21 = arith.constant 0.000000e+00 : f32
      %39 = vector.broadcast %cst_21 : f32 to vector<32x256xf32>
      %c0_22 = arith.constant 0 : index
      %c0_23 = arith.constant 0 : index
      %40 = vector.load %arg9[%c0_22, %c0_23] : memref<32x256xf32, #tpu.memory_space<vmem>>, vector<32x256xf32>
      tpu.vector_store %arg9[%c0_22, %c0_23], %39 {strides = array<i32>} : memref<32x256xf32, #tpu.memory_space<vmem>>, vector<32x256xf32>,
    } else {
    }
    %c0 = arith.constant 0 : index
    %c0_1 = arith.constant 0 : index
    %3 = vector.load %arg2[%c0, %c0_1] : memref<32x256xbf16, #tpu.memory_space<vmem>>, vector<32x256xbf16>
    %4 = arith.extf %3 : vector<32x256xbf16> to vector<32x256xf32>
    %5 = arith.mulf %4, %4 : vector<32x256xf32>
    %cst = arith.constant dense<0.000000e+00> : vector<32xf32>
    %6 = vector.multi_reduction <add>, %5, %cst [1] : vector<32x256xf32> to vector<32xf32>
    %7 = vector.shape_cast %6 : vector<32xf32> to vector<32x1xf32>
    %cst_2 = arith.constant 2.560000e+02 : f32
    %8 = vector.broadcast %cst_2 : f32 to vector<32x1xf32>
    %9 = arith.divf %7, %8 : vector<32x1xf32>
    %cst_3 = arith.constant 9.99999997E-7 : f32
    %10 = vector.broadcast %cst_3 : f32 to vector<32x1xf32>
    %11 = arith.addf %9, %10 : vector<32x1xf32>
    %12 = math.rsqrt %11 : vector<32x1xf32>
    %13 = vector.broadcast %12 : vector<32x1xf32> to vector<32x256xf32>
    %14 = arith.mulf %4, %13 : vector<32x256xf32>
    %c0_4 = arith.constant 0 : index
    %c0_5 = arith.constant 0 : index
    %15 = vector.load %arg3[%c0_4, %c0_5] : memref<1x256xf32, #tpu.memory_space<vmem>>, vector<1x256xf32>
    %16 = vector.broadcast %15 : vector<1x256xf32> to vector<32x256xf32>
    %17 = arith.mulf %14, %16 : vector<32x256xf32>
    %18 = arith.truncf %17 : vector<32x256xf32> to vector<32x256xbf16>
    %c0_6 = arith.constant 0 : index
    %c0_7 = arith.constant 0 : index
    %19 = vector.load %arg4[%c0_6, %c0_7] : memref<256x512xbf16, #tpu.memory_space<vmem>>, vector<256x512xbf16>
    %cst_8 = arith.constant dense<0.000000e+00> : vector<32x512xf32>
    %20 = tpu.matmul %18, %19, %cst_8 {dimension_numbers = #tpu.dot_dimension_numbers<[1], [0], [0], [1], [0, 0, 1, 1], [], []>} : vector<32x256xbf16>, vector<256x512xbf16>, vector<32x512xf32> -> vector<32x512xf32>
    %c0_9 = arith.constant 0 : index
    %c0_10 = arith.constant 0 : index
    %21 = vector.load %arg5[%c0_9, %c0_10] : memref<256x512xbf16, #tpu.memory_space<vmem>>, vector<256x512xbf16>
    %cst_11 = arith.constant dense<0.000000e+00> : vector<32x512xf32>
    %22 = tpu.matmul %18, %21, %cst_11 {dimension_numbers = #tpu.dot_dimension_numbers<[1], [0], [0], [1], [0, 0, 1, 1], [], []>} : vector<32x256xbf16>, vector<256x512xbf16>, vector<32x512xf32> -> vector<32x512xf32>
    %23 = arith.negf %20 : vector<32x512xf32>
    %24 = math.exp %23 : vector<32x512xf32>
    %cst_12 = arith.constant 1.000000e+00 : f32
    %25 = vector.broadcast %cst_12 : f32 to vector<32x512xf32>
    %26 = arith.addf %25, %24 : vector<32x512xf32>
    %27 = arith.divf %25, %26 : vector<32x512xf32>
    %28 = arith.mulf %20, %27 : vector<32x512xf32>
    %29 = arith.mulf %28, %22 : vector<32x512xf32>
    %30 = arith.truncf %29 : vector<32x512xf32> to vector<32x512xbf16>
    %c0_13 = arith.constant 0 : index
    %c0_14 = arith.constant 0 : index
    %31 = vector.load %arg9[%c0_13, %c0_14] : memref<32x256xf32, #tpu.memory_space<vmem>>, vector<32x256xf32>
    %c0_15 = arith.constant 0 : index
    %c0_16 = arith.constant 0 : index
    %32 = vector.load %arg6[%c0_15, %c0_16] : memref<512x256xbf16, #tpu.memory_space<vmem>>, vector<512x256xbf16>
    %cst_17 = arith.constant dense<0.000000e+00> : vector<32x256xf32>
    %33 = tpu.matmul %30, %32, %cst_17 {dimension_numbers = #tpu.dot_dimension_numbers<[1], [0], [0], [1], [0, 0, 1, 1], [], []>} : vector<32x512xbf16>, vector<512x256xbf16>, vector<32x256xf32> -> vector<32x256xf32>
    %34 = arith.addf %31, %33 : vector<32x256xf32>
    %c0_18 = arith.constant 0 : index
    %c0_19 = arith.constant 0 : index
    %35 = vector.load %arg9[%c0_18, %c0_19] : memref<32x256xf32, #tpu.memory_space<vmem>>, vector<32x256xf32>
    tpu.vector_store %arg9[%c0_18, %c0_19], %34 {strides = array<i32>} : memref<32x256xf32, #tpu.memory_space<vmem>>, vector<32x256xf32>,
    %c1_i32 = arith.constant 1 : i32
    %36 = arith.cmpi eq, %arg1, %c1_i32 : i32
    %37 = arith.extui %36 : i1 to i32
    %c0_i32_20 = arith.constant 0 : i32
    %38 = arith.cmpi ne, %37, %c0_i32_20 : i32
    scf.if %38 {
      %c0_21 = arith.constant 0 : index
      %c0_22 = arith.constant 0 : index
      %39 = vector.load %arg7[%c0_21, %c0_22] : memref<1x256xf32, #tpu.memory_space<vmem>>, vector<1x256xf32>
      %c0_23 = arith.constant 0 : index
      %c0_24 = arith.constant 0 : index
      %40 = vector.load %arg9[%c0_23, %c0_24] : memref<32x256xf32, #tpu.memory_space<vmem>>, vector<32x256xf32>
      %41 = vector.broadcast %39 : vector<1x256xf32> to vector<32x256xf32>
      %42 = arith.mulf %41, %40 : vector<32x256xf32>
      %43 = arith.addf %4, %42 : vector<32x256xf32>
      %44 = arith.truncf %43 : vector<32x256xf32> to vector<32x256xbf16>
      %c0_25 = arith.constant 0 : index
      %c0_26 = arith.constant 0 : index
      %45 = vector.load %arg8[%c0_25, %c0_26] : memref<32x256xbf16, #tpu.memory_space<vmem>>, vector<32x256xbf16>
      tpu.vector_store %arg8[%c0_25, %c0_26], %44 {strides = array<i32>} : memref<32x256xbf16, #tpu.memory_space<vmem>>, vector<32x256xbf16>,
    } else {
    }
    return
  }
  func.func @transform_0(%arg0: i32, %arg1: i32) -> (i32, i32) {
    %c0_i32 = arith.constant 0 : i32
    %c0_i32_0 = arith.constant 0 : i32
    return %arg0, %c0_i32 : i32, i32
  }
  func.func @transform_1(%arg0: i32, %arg1: i32) -> (i32, i32) {
    %c0_i32 = arith.constant 0 : i32
    %c0_i32_0 = arith.constant 0 : i32
    %c0_i32_1 = arith.constant 0 : i32
    return %c0_i32, %c0_i32_0 : i32, i32
  }
  func.func @transform_2(%arg0: i32, %arg1: i32) -> (i32, i32) {
    %c0_i32 = arith.constant 0 : i32
    %c0_i32_0 = arith.constant 0 : i32
    return %c0_i32, %arg1 : i32, i32
  }
  func.func @transform_3(%arg0: i32, %arg1: i32) -> (i32, i32) {
    %c0_i32 = arith.constant 0 : i32
    %c0_i32_0 = arith.constant 0 : i32
    return %c0_i32, %arg1 : i32, i32
  }
  func.func @transform_4(%arg0: i32, %arg1: i32) -> (i32, i32) {
    %c0_i32 = arith.constant 0 : i32
    %c0_i32_0 = arith.constant 0 : i32
    return %arg1, %c0_i32 : i32, i32
  }
  func.func @transform_5(%arg0: i32, %arg1: i32) -> (i32, i32) {
    %c0_i32 = arith.constant 0 : i32
    %c0_i32_0 = arith.constant 0 : i32
    %c0_i32_1 = arith.constant 0 : i32
    return %c0_i32, %c0_i32_0 : i32, i32
  }
  func.func @transform_6(%arg0: i32, %arg1: i32) -> (i32, i32) {
    %c0_i32 = arith.constant 0 : i32
    %c0_i32_0 = arith.constant 0 : i32
    return %arg0, %c0_i32 : i32, i32
  }
}

module attributes {stable_mosaic.version = 11 : i64} {
  func.func @_rmsnorm_kernel(%arg0: i32, %arg1: memref<32x256xbf16, #tpu.memory_space<vmem>>, %arg2: memref<1x256xf32, #tpu.memory_space<vmem>>, %arg3: memref<32x256xf32, #tpu.memory_space<vmem>>) attributes {dimension_semantics = [#tpu.dimension_semantics<parallel>], iteration_bounds = array<i64: 1>, scalar_prefetch = 0 : i64, scratch_operands = 0 : i64, tpu.core_type = #tpu.core_type<tc>, window_params = [{transform_indices = @transform_0, window_bounds = array<i64: 32, 256>}, {pipeline_mode = #tpu.pipeline_mode<synchronous>, transform_indices = @transform_1, window_bounds = array<i64: 1, 256>}, {transform_indices = @transform_2, window_bounds = array<i64: 32, 256>}]} {
    %c0 = arith.constant 0 : index
    %c0_0 = arith.constant 0 : index
    %0 = vector.load %arg1[%c0, %c0_0] : memref<32x256xbf16, #tpu.memory_space<vmem>>, vector<32x256xbf16>
    %1 = arith.extf %0 : vector<32x256xbf16> to vector<32x256xf32>
    %2 = arith.mulf %1, %1 : vector<32x256xf32>
    %cst = arith.constant dense<0.000000e+00> : vector<32xf32>
    %3 = vector.multi_reduction <add>, %2, %cst [1] : vector<32x256xf32> to vector<32xf32>
    %4 = vector.shape_cast %3 : vector<32xf32> to vector<32x1xf32>
    %cst_1 = arith.constant 2.560000e+02 : f32
    %5 = vector.broadcast %cst_1 : f32 to vector<32x1xf32>
    %6 = arith.divf %4, %5 : vector<32x1xf32>
    %cst_2 = arith.constant 9.99999997E-7 : f32
    %7 = vector.broadcast %cst_2 : f32 to vector<32x1xf32>
    %8 = arith.addf %6, %7 : vector<32x1xf32>
    %9 = math.rsqrt %8 : vector<32x1xf32>
    %10 = vector.broadcast %9 : vector<32x1xf32> to vector<32x256xf32>
    %11 = arith.mulf %1, %10 : vector<32x256xf32>
    %c0_3 = arith.constant 0 : index
    %c0_4 = arith.constant 0 : index
    %12 = vector.load %arg2[%c0_3, %c0_4] : memref<1x256xf32, #tpu.memory_space<vmem>>, vector<1x256xf32>
    %13 = vector.broadcast %12 : vector<1x256xf32> to vector<32x256xf32>
    %14 = arith.mulf %11, %13 : vector<32x256xf32>
    %c0_5 = arith.constant 0 : index
    %c0_6 = arith.constant 0 : index
    %15 = vector.load %arg3[%c0_5, %c0_6] : memref<32x256xf32, #tpu.memory_space<vmem>>, vector<32x256xf32>
    tpu.vector_store %arg3[%c0_5, %c0_6], %14 {strides = array<i32>} : memref<32x256xf32, #tpu.memory_space<vmem>>, vector<32x256xf32>,
    return
  }
  func.func @transform_0(%arg0: i32) -> (i32, i32) {
    %c0_i32 = arith.constant 0 : i32
    %c0_i32_0 = arith.constant 0 : i32
    return %arg0, %c0_i32 : i32, i32
  }
  func.func @transform_1(%arg0: i32) -> (i32, i32) {
    %c0_i32 = arith.constant 0 : i32
    %c0_i32_0 = arith.constant 0 : i32
    %c0_i32_1 = arith.constant 0 : i32
    return %c0_i32, %c0_i32_0 : i32, i32
  }
  func.func @transform_2(%arg0: i32) -> (i32, i32) {
    %c0_i32 = arith.constant 0 : i32
    %c0_i32_0 = arith.constant 0 : i32
    return %arg0, %c0_i32 : i32, i32
  }
}

</mosaic_0001>

<llo_original>
// kernel: tpu_custom_call.1
$region0: #{tpu_custom_call.1}
  #allocation0 [shape = 'u32[]', space=smem, size = 0x4, offset = 0x4, fixed_abs, tag = 'smem constant byte address 0x4 - core index']
  #allocation1 [shape = 'u32[144,128]{1,0:T(1,128)}', space=vmem, size = 0x12000, scoped, tag = 'internal scratch']
  %s0 = inlined_call_operand.hbm [shape: f32[16,128], index: 0, kind: input, shape index: {}]
  %s1 = inlined_call_operand.hbm [shape: f32[8,128], index: 1, kind: input, shape index: {}]
  %s2 = inlined_call_operand.hbm [shape: f32[16,128], index: 2, kind: output, shape index: {}]
  %s3 = sld [smem:[#allocation0]]
  $region49: #{tpu_custom_call.1} parent=0
    _
  %s5 = ssub.s32 1, %s3
  %s6 = scalar_select 0, %s5, %s3
  $region1: #{tpu_custom_call.1} parent=0
    #allocation2 [shape = 'u8[8192]{0}', space=vmem, size = 0x2000, scoped, tag = 'input window, operand 0']
    #allocation3 [shape = 's32[2]{0}', space=sflag, size = 0x8, scoped, tag = 'scoped memory for tpu_custom_call.1']
    #allocation4 [shape = 's32[2]{0}', space=sflag, size = 0x8, scoped, tag = 'scoped memory for tpu_custom_call.1']
    #allocation5 [shape = 'u8[4096]{0}', space=vmem, size = 0x1000, scoped, tag = 'input window, operand 1, single buffered']
    #allocation6 [shape = 's32[1]{0}', space=sflag, size = 0x4, scoped, tag = 'scoped memory for tpu_custom_call.1']
    #allocation7 [shape = 'u8[8192]{0}', space=vmem, size = 0x2000, scoped, tag = 'output window, operand 0']
    %7 = vsyncpa [#allocation3], 0
    %s8 = scalar_lea.sflag [#allocation3], 1
    %9 = vsyncpa %s8, 0
    %10 = vsyncpa [#allocation6], 0
    %11 = vsyncpa [#allocation4], 0
    %s12 = scalar_lea.sflag [#allocation4], 1
    %13 = vsyncpa %s12, 0
    loop: start=0, step=1, limit=4
    $region2: #{tpu_custom_call.1} parent=1 // loop_pre_header
      _
    $region3: #{tpu_custom_call.1} parent=1 // loop_header
      %s15 = sphi 0, %s19
      %p16 = scmp.ge.s32.totalorder %s15, 4
      %s25 = sphi 0, %s27
      %s28 = sphi 0, %s25
      %s29 = sphi 0, %s28
      %s45 = sphi 0, %s29
      %s49 = sphi 0, %s49
      %s51 = sphi 0, %s49
      %s52 = sphi 0, %s51
      %s66 = sphi 0, %s52
      %s72 = sphi 0, %s74
      %s75 = sphi 0, %s72
      %s76 = sphi 0, %s75
      %s92 = sphi 0, %s76
    $region4: #{tpu_custom_call.1} parent=1 // loop_header_branch
      %18 = sbr.rel (%p16) target = $region8
    $region5: #{tpu_custom_call.1} parent=1 // loop_body
      %s20 = ssub.s32 %s15, 1
      %s21 = ssub.s32 %s15, 2
      %s22 = sadd.s32 %s15, 1
      %s23 = ssub.s32 %s15, %s22
      %p24 = scmp.eq.s32.totalorder %s23, 0
      %s26 = sadd.s32 %s25, 1
      %s27 = scalar_select %p24, %s25, %s26
      %p30 = pneg %p24
      %p31 = scmp.eq.s32.totalorder %s15, 1
      %p32 = por %p30, %p31
      %p33 = scmp.ne.s32.totalorder %s25, %s28
      %p34 = scmp.eq.s32.totalorder %s15, 0
      %p35 = por %p33, %p34
      %p36 = scmp.ne.s32.totalorder %s25, %s28
      %p37 = scmp.eq.s32.totalorder %s20, 1
      %p38 = por %p36, %p37
      %p39 = scmp.ne.s32.totalorder %s28, %s29
      %p40 = scmp.eq.s32.totalorder %s20, 0
      %p41 = por %p39, %p40
      %p42 = scmp.ne.s32.totalorder %s28, %s29
      %p43 = scmp.eq.s32.totalorder %s21, 1
      %p44 = por %p42, %p43
      %p46 = scmp.ne.s32.totalorder %s29, %s45
      %p47 = scmp.eq.s32.totalorder %s21, 0
      %p48 = por %p46, %p47
      %s50 = sadd.s32 %s49, 1
      %p53 = scmp.eq.s32.totalorder %s15, 1
      %p54 = scmp.ne.s32.totalorder %s49, %s51
      %p55 = scmp.eq.s32.totalorder %s15, 0
      %p56 = por %p54, %p55
      %p57 = scmp.ne.s32.totalorder %s49, %s51
      %p58 = scmp.eq.s32.totalorder %s20, 1
      %p59 = por %p57, %p58
      %p60 = scmp.ne.s32.totalorder %s51, %s52
      %p61 = scmp.eq.s32.totalorder %s20, 0
      %p62 = por %p60, %p61
      %p63 = scmp.ne.s32.totalorder %s51, %s52
      %p64 = scmp.eq.s32.totalorder %s21, 1
      %p65 = por %p63, %p64
      %p67 = scmp.ne.s32.totalorder %s52, %s66
      %p68 = scmp.eq.s32.totalorder %s21, 0
      %p69 = por %p67, %p68
      %s70 = ssub.s32 %s15, %s22
      %p71 = scmp.eq.s32.totalorder %s70, 0
      %s73 = sadd.s32 %s72, 1
      %s74 = scalar_select %p71, %s72, %s73
      %p77 = pneg %p71
      %p78 = scmp.eq.s32.totalorder %s15, 1
      %p79 = por %p77, %p78
      %p80 = scmp.ne.s32.totalorder %s72, %s75
      %p81 = scmp.eq.s32.totalorder %s15, 0
      %p82 = por %p80, %p81
      %p83 = scmp.ne.s32.totalorder %s72, %s75
      %p84 = scmp.eq.s32.totalorder %s20, 1
      %p85 = por %p83, %p84
      %p86 = scmp.ne.s32.totalorder %s75, %s76
      %p87 = scmp.eq.s32.totalorder %s20, 0
      %p88 = por %p86, %p87
      %p89 = scmp.ne.s32.totalorder %s75, %s76
      %p90 = scmp.eq.s32.totalorder %s21, 1
      %p91 = por %p89, %p90
      %p93 = scmp.ne.s32.totalorder %s76, %s92
      %p94 = scmp.eq.s32.totalorder %s21, 0
      %p95 = por %p93, %p94
      %p96 = scmp.le.s32.totalorder 1, %s15
      %p97 = scmp.lt.s32.totalorder %s15, 3
      %p98 = pnand %p96, %p97
      %p99 = pneg %p98
      // Predicated region
      $region9: #{tpu_custom_call.1} parent=5 // pred_check
        _
      $region10: #{tpu_custom_call.1} parent=5 // pred_check_branch
        %101 = sbr.rel (%p98) target = $region12
      $region11: #{tpu_custom_call.1} parent=5 // pred_region
        %s102 = ssub.s32 %s15, 1
        // Predicated region
        $region13: #{tpu_custom_call.1} parent=11 // pred_check
          %p103 = pneg %p62
        $region14: #{tpu_custom_call.1} parent=11 // pred_check_branch
          %105 = sbr.rel (%p103) target = $region16
        $region15: #{tpu_custom_call.1} parent=11 // pred_region
          %s107 = ssub.s32 128, 128
          %108 = vsyncadd [#allocation6], %s107
          %s110 = sshll.u32 [#allocation5], 4
          %s111 = int_to_ptr.vmem [resolvable:$true] %s110
          %113 = dma.hbm_to_vmem [thread:$0]  %s1, 128, %s111, [#allocation6]
        $region16: #{tpu_custom_call.1} parent=11 // pred_fallthru
          _
      $region12: #{tpu_custom_call.1} parent=5 // pred_fallthru
        _
      %p114 = scmp.lt.s32.totalorder %s15, 2
      // Predicated region
      $region17: #{tpu_custom_call.1} parent=5 // pred_check
        %p115 = pneg %p114
      $region18: #{tpu_custom_call.1} parent=5 // pred_check_branch
        %117 = sbr.rel (%p115) target = $region20
      $region19: #{tpu_custom_call.1} parent=5 // pred_region
        // Predicated region
        $region21: #{tpu_custom_call.1} parent=19 // pred_check
          %p118 = pneg %p35
        $region22: #{tpu_custom_call.1} parent=19 // pred_check_branch
          %120 = sbr.rel (%p118) target = $region24
        $region23: #{tpu_custom_call.1} parent=19 // pred_region
          %s121 = sand.u32 %s25, 1
          %s122 = scalar_lea.sflag [#allocation3], %s121
          %s123 = sand.u32 %s25, 1
          %s124 = smul.addr %s123, 8
          %s125 = scalar_lea.vmem [#allocation2], %s124
          %s127 = ssub.s32 128, 128
          %128 = vsyncadd %s122, %s127
          %s129 = smul.addr %s15, 128
          %s130 = scalar_lea.hbm %s0, %s129
          %s132 = sshll.u32 %s125, 4
          %s133 = int_to_ptr.vmem [resolvable:$true] %s132
          %135 = dma.hbm_to_vmem [thread:$0]  %s130, 128, %s133, %s122
        $region24: #{tpu_custom_call.1} parent=19 // pred_fallthru
          _
      $region20: #{tpu_custom_call.1} parent=5 // pred_fallthru
        _
      %p136 = scmp.le.s32.totalorder 1, %s15
      %p137 = scmp.lt.s32.totalorder %s15, 3
      %p138 = pnand %p136, %p137
      %p139 = pneg %p138
      // Predicated region
      $region25: #{tpu_custom_call.1} parent=5 // pred_check
        _
      $region26: #{tpu_custom_call.1} parent=5 // pred_check_branch
        %141 = sbr.rel (%p138) target = $region28
      $region27: #{tpu_custom_call.1} parent=5 // pred_region
        %s142 = ssub.s32 %s15, 1
        %s143 = sand.u32 %s28, 1
        %s144 = scalar_lea.sflag [#allocation3], %s143
        %s145 = sand.u32 %s28, 1
        %s146 = smul.addr %s145, 8
        %s147 = scalar_lea.vmem [#allocation2], %s146
        // Predicated region
        $region29: #{tpu_custom_call.1} parent=27 // pred_check
          %p148 = pneg %p41
        $region30: #{tpu_custom_call.1} parent=27 // pred_check_branch
          %150 = sbr.rel (%p148) target = $region32
        $region31: #{tpu_custom_call.1} parent=27 // pred_region
          %151 = dma.done %s144, 128
        $region32: #{tpu_custom_call.1} parent=27 // pred_fallthru
          _
        // Predicated region
        $region33: #{tpu_custom_call.1} parent=27 // pred_check
          %p152 = pneg %p62
        $region34: #{tpu_custom_call.1} parent=27 // pred_check_branch
          %154 = sbr.rel (%p152) target = $region36
        $region35: #{tpu_custom_call.1} parent=27 // pred_region
          %155 = dma.done [#allocation6], 128
        $region36: #{tpu_custom_call.1} parent=27 // pred_fallthru
          _
        %s156 = sand.u32 %s28, 1
        %s157 = scalar_lea.sflag [#allocation3], %s156
        %s158 = sand.u32 %s28, 1
        %s159 = smul.addr %s158, 8
        %s160 = scalar_lea.vmem [#allocation2], %s159
        %p161 = pneg %p41
        %p162 = pneg %p38
        %p163 = pneg %p62
        %p164 = pneg %p59
        %p165 = pneg %p88
        %p166 = pneg %p85
        %s167 = sand.u32 %s75, 1
        %s168 = scalar_lea.sflag [#allocation4], %s167
        %s169 = sand.u32 %s75, 1
        %s170 = smul.addr %s169, 8
        %s171 = scalar_lea.vmem [#allocation7], %s170
        %v172 = vld [vmem:[%s147] sm:$0xff]
        %v173 = vld [vmem:[#allocation5] sm:$0xff]
        %v174 = vadd.f32 %v172, %v173
        %175 = vst [vmem:[%s171] sm:$0xff] %v174
        %s176 = sand.u32 %s75, 1
        %s177 = scalar_lea.sflag [#allocation4], %s176
        %s178 = sand.u32 %s75, 1
        %s179 = smul.addr %s178, 8
        %s180 = scalar_lea.vmem [#allocation7], %s179
        // Predicated region
        $region37: #{tpu_custom_call.1} parent=27 // pred_check
          %p181 = pneg %p85
        $region38: #{tpu_custom_call.1} parent=27 // pred_check_branch
          %183 = sbr.rel (%p181) target = $region40
        $region39: #{tpu_custom_call.1} parent=27 // pred_region
          %s185 = ssub.s32 128, 128
          %186 = vsyncadd %s177, %s185
          %s187 = smul.addr %s20, 128
          %s188 = scalar_lea.hbm %s2, %s187
          %s190 = sshll.u32 %s180, 4
          %s191 = int_to_ptr.vmem [resolvable:$true] %s190
          %193 = dma.vmem_to_hbm [thread:$0]  %s191, 128, %s188, %s177
        $region40: #{tpu_custom_call.1} parent=27 // pred_fallthru
          _
      $region28: #{tpu_custom_call.1} parent=5 // pred_fallthru
        _
      %p194 = scmp.le.s32.totalorder 2, %s15
      // Predicated region
      $region41: #{tpu_custom_call.1} parent=5 // pred_check
        %p195 = pneg %p194
      $region42: #{tpu_custom_call.1} parent=5 // pred_check_branch
        %197 = sbr.rel (%p195) target = $region44
      $region43: #{tpu_custom_call.1} parent=5 // pred_region
        %s198 = ssub.s32 %s15, 2
        // Predicated region
        $region45: #{tpu_custom_call.1} parent=43 // pred_check
          %p199 = pneg %p91
        $region46: #{tpu_custom_call.1} parent=43 // pred_check_branch
          %201 = sbr.rel (%p199) target = $region48
        $region47: #{tpu_custom_call.1} parent=43 // pred_region
          %s202 = sand.u32 %s76, 1
          %s203 = scalar_lea.sflag [#allocation4], %s202
          %s204 = sand.u32 %s76, 1
          %s205 = smul.addr %s204, 8
          %s206 = scalar_lea.vmem [#allocation7], %s205
          %207 = dma.done %s203, 128
        $region48: #{tpu_custom_call.1} parent=43 // pred_fallthru
          _
      $region44: #{tpu_custom_call.1} parent=5 // pred_fallthru
        _
    $region6: #{tpu_custom_call.1} parent=1 // loop_footer
      %s19 = sadd.s32 1, %s15
    $region7: #{tpu_custom_call.1} parent=1 // loop_footer_branch
      %14 = sbr.rel target = $region3
    $region8: #{tpu_custom_call.1} parent=1 // loop_exit
      _
    %208 = vsyncpa [#allocation3], 1
    %s209 = scalar_lea.sflag [#allocation3], 1
    %210 = vsyncpa %s209, 1
    %211 = vsyncpa [#allocation6], 1
    %212 = vsyncpa [#allocation4], 1
    %s213 = scalar_lea.sflag [#allocation4], 1
    %214 = vsyncpa %s213, 1

// kernel: vit_mim_forward.10
$region0: #{vit_mim_forward.10}
  #allocation0 [shape = 'u32[]', space=smem, size = 0x4, offset = 0x4, fixed_abs, tag = 'smem constant byte address 0x4 - core index']
  #allocation1 [shape = 'u32[144,128]{1,0:T(1,128)}', space=vmem, size = 0x12000, scoped, tag = 'internal scratch']
  %s0 = inlined_call_operand.vmem [shape: f32[8,768], index: 0, kind: input, shape index: {}]
  %s1 = inlined_call_operand.hbm [shape: bf16[768,256], index: 1, kind: input, shape index: {}]
  %s2 = inlined_call_operand.vmem [shape: f32[1,256], index: 2, kind: input, shape index: {}]
  %s3 = inlined_call_operand.vmem [shape: f32[8,256], index: 3, kind: output, shape index: {}]
  %s4 = sld [smem:[#allocation0]]
  $region26: #{vit_mim_forward.10} parent=0
    _
  %s6 = ssub.s32 1, %s4
  %s7 = scalar_select 0, %s6, %s4
  $region1: #{vit_mim_forward.10} parent=0
    #allocation2 [shape = 'u8[393216]{0}', space=vmem, size = 0x60000, scoped, tag = 'input window, operand 1, single buffered']
    #allocation3 [shape = 's32[1]{0}', space=sflag, size = 0x4, scoped, tag = 'scoped memory for vit_mim_forward.10']
    %8 = vsyncpa [#allocation3], 0
    // Predicated region
    $region2: #{vit_mim_forward.10} parent=1 // pred_check
      _
    $region3: #{vit_mim_forward.10} parent=1 // pred_check_branch
      %10 = sbr.rel (0) target = $region5
    $region4: #{vit_mim_forward.10} parent=1 // pred_region
      _
    $region5: #{vit_mim_forward.10} parent=1 // pred_fallthru
      _
    // Predicated region
    $region6: #{vit_mim_forward.10} parent=1 // pred_check
      _
    $region7: #{vit_mim_forward.10} parent=1 // pred_check_branch
      %12 = sbr.rel (0) target = $region9
    $region8: #{vit_mim_forward.10} parent=1 // pred_region
      %s14 = ssub.s32 12288, 12288
      %15 = vsyncadd [#allocation3], %s14
      %s16 = sshll.u32 [#allocation2], 4
      %s17 = int_to_ptr.vmem [resolvable:$true] %s16
      %22 = dma.hbm_to_vmem [thread:$0]  %s1, 12288, %s17, [#allocation3], 128, 128, 8
    $region9: #{vit_mim_forward.10} parent=1 // pred_fallthru
      _
    // Predicated region
    $region10: #{vit_mim_forward.10} parent=1 // pred_check
      _
    $region11: #{vit_mim_forward.10} parent=1 // pred_check_branch
      %24 = sbr.rel (0) target = $region13
    $region12: #{vit_mim_forward.10} parent=1 // pred_region
      _
    $region13: #{vit_mim_forward.10} parent=1 // pred_fallthru
      _
    // Predicated region
    $region14: #{vit_mim_forward.10} parent=1 // pred_check
      _
    $region15: #{vit_mim_forward.10} parent=1 // pred_check_branch
      %26 = sbr.rel (0) target = $region17
    $region16: #{vit_mim_forward.10} parent=1 // pred_region
      %27 = dma.done [#allocation3], 12288
    $region17: #{vit_mim_forward.10} parent=1 // pred_fallthru
      _
    %v28 = vld [vmem:[%s0] sm:$0xff]
    %v29 = vld [vmem:[%s0 + $0x8] sm:$0xff]
    %v30 = vld [vmem:[%s0 + $0x10] sm:$0xff]
    %v31 = vld [vmem:[%s0 + $0x18] sm:$0xff]
    %v32 = vld [vmem:[%s0 + $0x20] sm:$0xff]
    %v33 = vld [vmem:[%s0 + $0x28] sm:$0xff]
    %v34 = vpack.c.bf16 %v28, %v28
    %v35 = vpack.c.bf16 %v29, %v29
    %v36 = vpack.c.bf16 %v30, %v30
    %v37 = vpack.c.bf16 %v31, %v31
    %v38 = vpack.c.bf16 %v32, %v32
    %v39 = vpack.c.bf16 %v33, %v33
    %v40 = vld [vmem:[#allocation2] sm:$0xff]
    %v41 = vld [vmem:[#allocation2 + $0x8] sm:$0xff]
    %v42 = vld [vmem:[#allocation2 + $0x10] sm:$0xff]
    %v43 = vld [vmem:[#allocation2 + $0x18] sm:$0xff]
    %v44 = vld [vmem:[#allocation2 + $0x20] sm:$0xff]
    %v45 = vld [vmem:[#allocation2 + $0x28] sm:$0xff]
    %v46 = vld [vmem:[#allocation2 + $0x30] sm:$0xff]
    %v47 = vld [vmem:[#allocation2 + $0x38] sm:$0xff]
    %v48 = vld [vmem:[#allocation2 + $0x40] sm:$0xff]
    %v49 = vld [vmem:[#allocation2 + $0x48] sm:$0xff]
    %v50 = vld [vmem:[#allocation2 + $0x50] sm:$0xff]
    %v51 = vld [vmem:[#allocation2 + $0x58] sm:$0xff]
    %v52 = vld [vmem:[#allocation2 + $0x60] sm:$0xff]
    %v53 = vld [vmem:[#allocation2 + $0x68] sm:$0xff]
    %v54 = vld [vmem:[#allocation2 + $0x70] sm:$0xff]
    %v55 = vld [vmem:[#allocation2 + $0x78] sm:$0xff]
    %v56 = vld [vmem:[#allocation2 + $0x80] sm:$0xff]
    %v57 = vld [vmem:[#allocation2 + $0x88] sm:$0xff]
    %v58 = vld [vmem:[#allocation2 + $0x90] sm:$0xff]
    %v59 = vld [vmem:[#allocation2 + $0x98] sm:$0xff]
    %v60 = vld [vmem:[#allocation2 + $0xa0] sm:$0xff]
    %v61 = vld [vmem:[#allocation2 + $0xa8] sm:$0xff]
    %v62 = vld [vmem:[#allocation2 + $0xb0] sm:$0xff]
    %v63 = vld [vmem:[#allocation2 + $0xb8] sm:$0xff]
    %v64 = vld [vmem:[#allocation2 + $0xc0] sm:$0xff]
    %v65 = vld [vmem:[#allocation2 + $0xc8] sm:$0xff]
    %v66 = vld [vmem:[#allocation2 + $0xd0] sm:$0xff]
    %v67 = vld [vmem:[#allocation2 + $0xd8] sm:$0xff]
    %v68 = vld [vmem:[#allocation2 + $0xe0] sm:$0xff]
    %v69 = vld [vmem:[#allocation2 + $0xe8] sm:$0xff]
    %v70 = vld [vmem:[#allocation2 + $0xf0] sm:$0xff]
    %v71 = vld [vmem:[#allocation2 + $0xf8] sm:$0xff]
    %v72 = vld [vmem:[#allocation2 + $0x100] sm:$0xff]
    %v73 = vld [vmem:[#allocation2 + $0x108] sm:$0xff]
    %v74 = vld [vmem:[#allocation2 + $0x110] sm:$0xff]
    %v75 = vld [vmem:[#allocation2 + $0x118] sm:$0xff]
    %v76 = vld [vmem:[#allocation2 + $0x120] sm:$0xff]
    %v77 = vld [vmem:[#allocation2 + $0x128] sm:$0xff]
    %v78 = vld [vmem:[#allocation2 + $0x130] sm:$0xff]
    %v79 = vld [vmem:[#allocation2 + $0x138] sm:$0xff]
    %v80 = vld [vmem:[#allocation2 + $0x140] sm:$0xff]
    %v81 = vld [vmem:[#allocation2 + $0x148] sm:$0xff]
    %v82 = vld [vmem:[#allocation2 + $0x150] sm:$0xff]
    %v83 = vld [vmem:[#allocation2 + $0x158] sm:$0xff]
    %v84 = vld [vmem:[#allocation2 + $0x160] sm:$0xff]
    %v85 = vld [vmem:[#allocation2 + $0x168] sm:$0xff]
    %v86 = vld [vmem:[#allocation2 + $0x170] sm:$0xff]
    %v87 = vld [vmem:[#allocation2 + $0x178] sm:$0xff]
    %v88 = vld [vmem:[#allocation2 + $0x180] sm:$0xff]
    %v89 = vld [vmem:[#allocation2 + $0x188] sm:$0xff]
    %v90 = vld [vmem:[#allocation2 + $0x190] sm:$0xff]
    %v91 = vld [vmem:[#allocation2 + $0x198] sm:$0xff]
    %v92 = vld [vmem:[#allocation2 + $0x1a0] sm:$0xff]
    %v93 = vld [vmem:[#allocation2 + $0x1a8] sm:$0xff]
    %v94 = vld [vmem:[#allocation2 + $0x1b0] sm:$0xff]
    %v95 = vld [vmem:[#allocation2 + $0x1b8] sm:$0xff]
    %v96 = vld [vmem:[#allocation2 + $0x1c0] sm:$0xff]
    %v97 = vld [vmem:[#allocation2 + $0x1c8] sm:$0xff]
    %v98 = vld [vmem:[#allocation2 + $0x1d0] sm:$0xff]
    %v99 = vld [vmem:[#allocation2 + $0x1d8] sm:$0xff]
    %v100 = vld [vmem:[#allocation2 + $0x1e0] sm:$0xff]
    %v101 = vld [vmem:[#allocation2 + $0x1e8] sm:$0xff]
    %v102 = vld [vmem:[#allocation2 + $0x1f0] sm:$0xff]
    %v103 = vld [vmem:[#allocation2 + $0x1f8] sm:$0xff]
    %v104 = vld [vmem:[#allocation2 + $0x200] sm:$0xff]
    %v105 = vld [vmem:[#allocation2 + $0x208] sm:$0xff]
    %v106 = vld [vmem:[#allocation2 + $0x210] sm:$0xff]
    %v107 = vld [vmem:[#allocation2 + $0x218] sm:$0xff]
    %v108 = vld [vmem:[#allocation2 + $0x220] sm:$0xff]
    %v109 = vld [vmem:[#allocation2 + $0x228] sm:$0xff]
    %v110 = vld [vmem:[#allocation2 + $0x230] sm:$0xff]
    %v111 = vld [vmem:[#allocation2 + $0x238] sm:$0xff]
    %v112 = vld [vmem:[#allocation2 + $0x240] sm:$0xff]
    %v113 = vld [vmem:[#allocation2 + $0x248] sm:$0xff]
    %v114 = vld [vmem:[#allocation2 + $0x250] sm:$0xff]
    %v115 = vld [vmem:[#allocation2 + $0x258] sm:$0xff]
    %v116 = vld [vmem:[#allocation2 + $0x260] sm:$0xff]
    %v117 = vld [vmem:[#allocation2 + $0x268] sm:$0xff]
    %v118 = vld [vmem:[#allocation2 + $0x270] sm:$0xff]
    %v119 = vld [vmem:[#allocation2 + $0x278] sm:$0xff]
    %v120 = vld [vmem:[#allocation2 + $0x280] sm:$0xff]
    %v121 = vld [vmem:[#allocation2 + $0x288] sm:$0xff]
    %v122 = vld [vmem:[#allocation2 + $0x290] sm:$0xff]
    %v123 = vld [vmem:[#allocation2 + $0x298] sm:$0xff]
    %v124 = vld [vmem:[#allocation2 + $0x2a0] sm:$0xff]
    %v125 = vld [vmem:[#allocation2 + $0x2a8] sm:$0xff]
    %v126 = vld [vmem:[#allocation2 + $0x2b0] sm:$0xff]
    %v127 = vld [vmem:[#allocation2 + $0x2b8] sm:$0xff]
    %v128 = vld [vmem:[#allocation2 + $0x2c0] sm:$0xff]
    %v129 = vld [vmem:[#allocation2 + $0x2c8] sm:$0xff]
    %v130 = vld [vmem:[#allocation2 + $0x2d0] sm:$0xff]
    %v131 = vld [vmem:[#allocation2 + $0x2d8] sm:$0xff]
    %v132 = vld [vmem:[#allocation2 + $0x2e0] sm:$0xff]
    %v133 = vld [vmem:[#allocation2 + $0x2e8] sm:$0xff]
    %v134 = vld [vmem:[#allocation2 + $0x2f0] sm:$0xff]
    %v135 = vld [vmem:[#allocation2 + $0x2f8] sm:$0xff]
    %v136 = vld [vmem:[%s2] sm:$0x3]
    %v138 = vlaneseq
    %v139 = vshrl.u32 %v138, 7
    %v140 = vsub.s32 0, %v139
    %v141 = vrot.slane %v136, %v140
    %v142 = vlaneseq
    %v143 = vshrl.u32 %v142, 7
    %v144 = vsub.s32 1, %v143
    %v145 = vrot.slane %v136, %v144
    %v244 = vunpack.c.l.b16 %v40
    %v245 = vunpack.c.h.b16 %v40
    %v246 = vunpack.c.l.b16 %v41
    %v247 = vunpack.c.h.b16 %v41
    %v248 = vunpack.c.l.b16 %v42
    %v249 = vunpack.c.h.b16 %v42
    %v250 = vunpack.c.l.b16 %v43
    %v251 = vunpack.c.h.b16 %v43
    %v252 = vunpack.c.l.b16 %v44
    %v253 = vunpack.c.h.b16 %v44
    %v254 = vunpack.c.l.b16 %v45
    %v255 = vunpack.c.h.b16 %v45
    %v256 = vunpack.c.l.b16 %v46
    %v257 = vunpack.c.h.b16 %v46
    %v258 = vunpack.c.l.b16 %v47
    %v259 = vunpack.c.h.b16 %v47
    %v260 = vunpack.c.l.b16 %v48
    %v261 = vunpack.c.h.b16 %v48
    %v262 = vunpack.c.l.b16 %v49
    %v263 = vunpack.c.h.b16 %v49
    %v264 = vunpack.c.l.b16 %v50
    %v265 = vunpack.c.h.b16 %v50
    %v266 = vunpack.c.l.b16 %v51
    %v267 = vunpack.c.h.b16 %v51
    %v268 = vunpack.c.l.b16 %v52
    %v269 = vunpack.c.h.b16 %v52
    %v270 = vunpack.c.l.b16 %v53
    %v271 = vunpack.c.h.b16 %v53
    %v272 = vunpack.c.l.b16 %v54
    %v273 = vunpack.c.h.b16 %v54
    %v274 = vunpack.c.l.b16 %v55
    %v275 = vunpack.c.h.b16 %v55
    %v276 = vunpack.c.l.b16 %v56
    %v277 = vunpack.c.h.b16 %v56
    %v278 = vunpack.c.l.b16 %v57
    %v279 = vunpack.c.h.b16 %v57
    %v280 = vunpack.c.l.b16 %v58
    %v281 = vunpack.c.h.b16 %v58
    %v282 = vunpack.c.l.b16 %v59
    %v283 = vunpack.c.h.b16 %v59
    %v284 = vunpack.c.l.b16 %v60
    %v285 = vunpack.c.h.b16 %v60
    %v286 = vunpack.c.l.b16 %v61
    %v287 = vunpack.c.h.b16 %v61
    %v288 = vunpack.c.l.b16 %v62
    %v289 = vunpack.c.h.b16 %v62
    %v290 = vunpack.c.l.b16 %v63
    %v291 = vunpack.c.h.b16 %v63
    %v292 = vunpack.c.l.b16 %v64
    %v293 = vunpack.c.h.b16 %v64
    %v294 = vunpack.c.l.b16 %v65
    %v295 = vunpack.c.h.b16 %v65
    %v296 = vunpack.c.l.b16 %v66
    %v297 = vunpack.c.h.b16 %v66
    %v298 = vunpack.c.l.b16 %v67
    %v299 = vunpack.c.h.b16 %v67
    %v300 = vunpack.c.l.b16 %v68
    %v301 = vunpack.c.h.b16 %v68
    %v302 = vunpack.c.l.b16 %v69
    %v303 = vunpack.c.h.b16 %v69
    %v304 = vunpack.c.l.b16 %v70
    %v305 = vunpack.c.h.b16 %v70
    %v306 = vunpack.c.l.b16 %v71
    %v307 = vunpack.c.h.b16 %v71
    %v308 = vunpack.c.l.b16 %v72
    %v309 = vunpack.c.h.b16 %v72
    %v310 = vunpack.c.l.b16 %v73
    %v311 = vunpack.c.h.b16 %v73
    %v312 = vunpack.c.l.b16 %v74
    %v313 = vunpack.c.h.b16 %v74
    %v314 = vunpack.c.l.b16 %v75
    %v315 = vunpack.c.h.b16 %v75
    %v316 = vunpack.c.l.b16 %v76
    %v317 = vunpack.c.h.b16 %v76
    %v318 = vunpack.c.l.b16 %v77
    %v319 = vunpack.c.h.b16 %v77
    %v320 = vunpack.c.l.b16 %v78
    %v321 = vunpack.c.h.b16 %v78
    %v322 = vunpack.c.l.b16 %v79
    %v323 = vunpack.c.h.b16 %v79
    %v324 = vunpack.c.l.b16 %v80
    %v325 = vunpack.c.h.b16 %v80
    %v326 = vunpack.c.l.b16 %v81
    %v327 = vunpack.c.h.b16 %v81
    %v328 = vunpack.c.l.b16 %v82
    %v329 = vunpack.c.h.b16 %v82
    %v330 = vunpack.c.l.b16 %v83
    %v331 = vunpack.c.h.b16 %v83
    %v332 = vunpack.c.l.b16 %v84
    %v333 = vunpack.c.h.b16 %v84
    %v334 = vunpack.c.l.b16 %v85
    %v335 = vunpack.c.h.b16 %v85
    %v336 = vunpack.c.l.b16 %v86
    %v337 = vunpack.c.h.b16 %v86
    %v338 = vunpack.c.l.b16 %v87
    %v339 = vunpack.c.h.b16 %v87
    %v340 = vunpack.c.l.b16 %v88
    %v341 = vunpack.c.h.b16 %v88
    %v342 = vunpack.c.l.b16 %v89
    %v343 = vunpack.c.h.b16 %v89
    %v344 = vunpack.c.l.b16 %v90
    %v345 = vunpack.c.h.b16 %v90
    %v346 = vunpack.c.l.b16 %v91
    %v347 = vunpack.c.h.b16 %v91
    %v348 = vunpack.c.l.b16 %v92
    %v349 = vunpack.c.h.b16 %v92
    %v350 = vunpack.c.l.b16 %v93
    %v351 = vunpack.c.h.b16 %v93
    %v352 = vunpack.c.l.b16 %v94
    %v353 = vunpack.c.h.b16 %v94
    %v354 = vunpack.c.l.b16 %v95
    %v355 = vunpack.c.h.b16 %v95
    %v356 = vunpack.c.l.b16 %v96
    %v357 = vunpack.c.h.b16 %v96
    %v358 = vunpack.c.l.b16 %v97
    %v359 = vunpack.c.h.b16 %v97
    %v360 = vunpack.c.l.b16 %v98
    %v361 = vunpack.c.h.b16 %v98
    %v362 = vunpack.c.l.b16 %v99
    %v363 = vunpack.c.h.b16 %v99
    %v364 = vunpack.c.l.b16 %v100
    %v365 = vunpack.c.h.b16 %v100
    %v366 = vunpack.c.l.b16 %v101
    %v367 = vunpack.c.h.b16 %v101
    %v368 = vunpack.c.l.b16 %v102
    %v369 = vunpack.c.h.b16 %v102
    %v370 = vunpack.c.l.b16 %v103
    %v371 = vunpack.c.h.b16 %v103
    %v372 = vunpack.c.l.b16 %v104
    %v373 = vunpack.c.h.b16 %v104
    %v374 = vunpack.c.l.b16 %v105
    %v375 = vunpack.c.h.b16 %v105
    %v376 = vunpack.c.l.b16 %v106
    %v377 = vunpack.c.h.b16 %v106
    %v378 = vunpack.c.l.b16 %v107
    %v379 = vunpack.c.h.b16 %v107
    %v380 = vunpack.c.l.b16 %v108
    %v381 = vunpack.c.h.b16 %v108
    %v382 = vunpack.c.l.b16 %v109
    %v383 = vunpack.c.h.b16 %v109
    %v384 = vunpack.c.l.b16 %v110
    %v385 = vunpack.c.h.b16 %v110
    %v386 = vunpack.c.l.b16 %v111
    %v387 = vunpack.c.h.b16 %v111
    %v388 = vunpack.c.l.b16 %v112
    %v389 = vunpack.c.h.b16 %v112
    %v390 = vunpack.c.l.b16 %v113
    %v391 = vunpack.c.h.b16 %v113
    %v392 = vunpack.c.l.b16 %v114
    %v393 = vunpack.c.h.b16 %v114
    %v394 = vunpack.c.l.b16 %v115
    %v395 = vunpack.c.h.b16 %v115
    %v396 = vunpack.c.l.b16 %v116
    %v397 = vunpack.c.h.b16 %v116
    %v398 = vunpack.c.l.b16 %v117
    %v399 = vunpack.c.h.b16 %v117
    %v400 = vunpack.c.l.b16 %v118
    %v401 = vunpack.c.h.b16 %v118
    %v402 = vunpack.c.l.b16 %v119
    %v403 = vunpack.c.h.b16 %v119
    %v404 = vunpack.c.l.b16 %v120
    %v405 = vunpack.c.h.b16 %v120
    %v406 = vunpack.c.l.b16 %v121
    %v407 = vunpack.c.h.b16 %v121
    %v408 = vunpack.c.l.b16 %v122
    %v409 = vunpack.c.h.b16 %v122
    %v410 = vunpack.c.l.b16 %v123
    %v411 = vunpack.c.h.b16 %v123
    %v412 = vunpack.c.l.b16 %v124
    %v413 = vunpack.c.h.b16 %v124
    %v414 = vunpack.c.l.b16 %v125
    %v415 = vunpack.c.h.b16 %v125
    %v416 = vunpack.c.l.b16 %v126
    %v417 = vunpack.c.h.b16 %v126
    %v418 = vunpack.c.l.b16 %v127
    %v419 = vunpack.c.h.b16 %v127
    %v420 = vunpack.c.l.b16 %v128
    %v421 = vunpack.c.h.b16 %v128
    %v422 = vunpack.c.l.b16 %v129
    %v423 = vunpack.c.h.b16 %v129
    %v424 = vunpack.c.l.b16 %v130
    %v425 = vunpack.c.h.b16 %v130
    %v426 = vunpack.c.l.b16 %v131
    %v427 = vunpack.c.h.b16 %v131
    %v428 = vunpack.c.l.b16 %v132
    %v429 = vunpack.c.h.b16 %v132
    %v430 = vunpack.c.l.b16 %v133
    %v431 = vunpack.c.h.b16 %v133
    %v432 = vunpack.c.l.b16 %v134
    %v433 = vunpack.c.h.b16 %v134
    %v434 = vunpack.c.l.b16 %v135
    %v435 = vunpack.c.h.b16 %v135
    %v436 = vpack.c.b16 %v246, %v244
    %v437 = vpack.c.b16 %v247, %v245
    %v438 = vpack.c.b16 %v250, %v248
    %v439 = vpack.c.b16 %v251, %v249
    %v440 = vpack.c.b16 %v254, %v252
    %v441 = vpack.c.b16 %v255, %v253
    %v442 = vpack.c.b16 %v258, %v256
    %v443 = vpack.c.b16 %v259, %v257
    %v444 = vpack.c.b16 %v262, %v260
    %v445 = vpack.c.b16 %v263, %v261
    %v446 = vpack.c.b16 %v266, %v264
    %v447 = vpack.c.b16 %v267, %v265
    %v448 = vpack.c.b16 %v270, %v268
    %v449 = vpack.c.b16 %v271, %v269
    %v450 = vpack.c.b16 %v274, %v272
    %v451 = vpack.c.b16 %v275, %v273
    %v452 = vpack.c.b16 %v278, %v276
    %v453 = vpack.c.b16 %v279, %v277
    %v454 = vpack.c.b16 %v282, %v280
    %v455 = vpack.c.b16 %v283, %v281
    %v456 = vpack.c.b16 %v286, %v284
    %v457 = vpack.c.b16 %v287, %v285
    %v458 = vpack.c.b16 %v290, %v288
    %v459 = vpack.c.b16 %v291, %v289
    %v460 = vpack.c.b16 %v294, %v292
    %v461 = vpack.c.b16 %v295, %v293
    %v462 = vpack.c.b16 %v298, %v296
    %v463 = vpack.c.b16 %v299, %v297
    %v464 = vpack.c.b16 %v302, %v300
    %v465 = vpack.c.b16 %v303, %v301
    %v466 = vpack.c.b16 %v306, %v304
    %v467 = vpack.c.b16 %v307, %v305
    %v468 = vpack.c.b16 %v310, %v308
    %v469 = vpack.c.b16 %v311, %v309
    %v470 = vpack.c.b16 %v314, %v312
    %v471 = vpack.c.b16 %v315, %v313
    %v472 = vpack.c.b16 %v318, %v316
    %v473 = vpack.c.b16 %v319, %v317
    %v474 = vpack.c.b16 %v322, %v320
    %v475 = vpack.c.b16 %v323, %v321
    %v476 = vpack.c.b16 %v326, %v324
    %v477 = vpack.c.b16 %v327, %v325
    %v478 = vpack.c.b16 %v330, %v328
    %v479 = vpack.c.b16 %v331, %v329
    %v480 = vpack.c.b16 %v334, %v332
    %v481 = vpack.c.b16 %v335, %v333
    %v482 = vpack.c.b16 %v338, %v336
    %v483 = vpack.c.b16 %v339, %v337
    %v484 = vpack.c.b16 %v342, %v340
    %v485 = vpack.c.b16 %v343, %v341
    %v486 = vpack.c.b16 %v346, %v344
    %v487 = vpack.c.b16 %v347, %v345
    %v488 = vpack.c.b16 %v350, %v348
    %v489 = vpack.c.b16 %v351, %v349
    %v490 = vpack.c.b16 %v354, %v352
    %v491 = vpack.c.b16 %v355, %v353
    %v492 = vpack.c.b16 %v358, %v356
    %v493 = vpack.c.b16 %v359, %v357
    %v494 = vpack.c.b16 %v362, %v360
    %v495 = vpack.c.b16 %v363, %v361
    %v496 = vpack.c.b16 %v366, %v364
    %v497 = vpack.c.b16 %v367, %v365
    %v498 = vpack.c.b16 %v370, %v368
    %v499 = vpack.c.b16 %v371, %v369
    %v500 = vpack.c.b16 %v374, %v372
    %v501 = vpack.c.b16 %v375, %v373
    %v502 = vpack.c.b16 %v378, %v376
    %v503 = vpack.c.b16 %v379, %v377
    %v504 = vpack.c.b16 %v382, %v380
    %v505 = vpack.c.b16 %v383, %v381
    %v506 = vpack.c.b16 %v386, %v384
    %v507 = vpack.c.b16 %v387, %v385
    %v508 = vpack.c.b16 %v390, %v388
    %v509 = vpack.c.b16 %v391, %v389
    %v510 = vpack.c.b16 %v394, %v392
    %v511 = vpack.c.b16 %v395, %v393
    %v512 = vpack.c.b16 %v398, %v396
    %v513 = vpack.c.b16 %v399, %v397
    %v514 = vpack.c.b16 %v402, %v400
    %v515 = vpack.c.b16 %v403, %v401
    %v516 = vpack.c.b16 %v406, %v404
    %v517 = vpack.c.b16 %v407, %v405
    %v518 = vpack.c.b16 %v410, %v408
    %v519 = vpack.c.b16 %v411, %v409
    %v520 = vpack.c.b16 %v414, %v412
    %v521 = vpack.c.b16 %v415, %v413
    %v522 = vpack.c.b16 %v418, %v416
    %v523 = vpack.c.b16 %v419, %v417
    %v524 = vpack.c.b16 %v422, %v420
    %v525 = vpack.c.b16 %v423, %v421
    %v526 = vpack.c.b16 %v426, %v424
    %v527 = vpack.c.b16 %v427, %v425
    %v528 = vpack.c.b16 %v430, %v428
    %v529 = vpack.c.b16 %v431, %v429
    %v530 = vpack.c.b16 %v434, %v432
    %v531 = vpack.c.b16 %v435, %v433
    %628 = vmatprep.subr.bf16.mxu0 %v451
    %629 = vmatpush1.bf16.msra.mxu0 %v450
    %630 = vmatprep.subr.bf16.mxu0 %v449
    %631 = vmatpush1.bf16.msra.mxu0 %v448
    %632 = vmatprep.subr.bf16.mxu0 %v447
    %633 = vmatpush1.bf16.msra.mxu0 %v446
    %634 = vmatprep.subr.bf16.mxu0 %v445
    %635 = vmatpush1.bf16.msra.mxu0 %v444
    %636 = vmatprep.subr.bf16.mxu0 %v443
    %637 = vmatpush1.bf16.msra.mxu0 %v442
    %638 = vmatprep.subr.bf16.mxu0 %v441
    %639 = vmatpush1.bf16.msra.mxu0 %v440
    %640 = vmatprep.subr.bf16.mxu0 %v439
    %641 = vmatpush1.bf16.msra.mxu0 %v438
    %642 = vmatprep.subr.bf16.mxu0 %v437
    %643 = vmatpush1.bf16.msra.mxu0 %v436
    %644 = vmatprep.subr.bf16.mxu0 %v467
    %645 = vmatpush2.bf16.msra.mxu0 %v466
    %646 = vmatprep.subr.bf16.mxu0 %v465
    %647 = vmatpush2.bf16.msra.mxu0 %v464
    %648 = vmatprep.subr.bf16.mxu0 %v463
    %649 = vmatpush2.bf16.msra.mxu0 %v462
    %650 = vmatprep.subr.bf16.mxu0 %v461
    %651 = vmatpush2.bf16.msra.mxu0 %v460
    %652 = vmatprep.subr.bf16.mxu0 %v459
    %653 = vmatpush2.bf16.msra.mxu0 %v458
    %654 = vmatprep.subr.bf16.mxu0 %v457
    %655 = vmatpush2.bf16.msra.mxu0 %v456
    %656 = vmatprep.subr.bf16.mxu0 %v455
    %657 = vmatpush2.bf16.msra.mxu0 %v454
    %658 = vmatprep.subr.bf16.mxu0 %v453
    %659 = vmatpush2.bf16.msra.mxu0 %v452
    %660 = vmatprep.mubr.bf16.mxu0 %v35
    %661 = vmatmul.mubr.bf16.gmra.mxu0 %v34
    %v662 = vpop.f32.mrf.mxu0
    %v663 = vadd.f32 %v141, %v662
    %v664 = vpop.f32.mrf.mxu0
    %v665 = vadd.f32 %v145, %v664
    %v666 = vpop.f32.mrf.mxu0
    %v667 = vpop.f32.mrf.mxu0
    %668 = vdwg.mxu0
    %669 = vmatprep.subr.bf16.mxu0 %v483
    %670 = vmatpush1.bf16.msra.mxu0 %v482
    %671 = vmatprep.subr.bf16.mxu0 %v481
    %672 = vmatpush1.bf16.msra.mxu0 %v480
    %673 = vmatprep.subr.bf16.mxu0 %v479
    %674 = vmatpush1.bf16.msra.mxu0 %v478
    %675 = vmatprep.subr.bf16.mxu0 %v477
    %676 = vmatpush1.bf16.msra.mxu0 %v476
    %677 = vmatprep.subr.bf16.mxu0 %v475
    %678 = vmatpush1.bf16.msra.mxu0 %v474
    %679 = vmatprep.subr.bf16.mxu0 %v473
    %680 = vmatpush1.bf16.msra.mxu0 %v472
    %681 = vmatprep.subr.bf16.mxu0 %v471
    %682 = vmatpush1.bf16.msra.mxu0 %v470
    %683 = vmatprep.subr.bf16.mxu0 %v469
    %684 = vmatpush1.bf16.msra.mxu0 %v468
    %685 = vmatprep.subr.bf16.mxu0 %v499
    %686 = vmatpush2.bf16.msra.mxu0 %v498
    %687 = vmatprep.subr.bf16.mxu0 %v497
    %688 = vmatpush2.bf16.msra.mxu0 %v496
    %689 = vmatprep.subr.bf16.mxu0 %v495
    %690 = vmatpush2.bf16.msra.mxu0 %v494
    %691 = vmatprep.subr.bf16.mxu0 %v493
    %692 = vmatpush2.bf16.msra.mxu0 %v492
    %693 = vmatprep.subr.bf16.mxu0 %v491
    %694 = vmatpush2.bf16.msra.mxu0 %v490
    %695 = vmatprep.subr.bf16.mxu0 %v489
    %696 = vmatpush2.bf16.msra.mxu0 %v488
    %697 = vmatprep.subr.bf16.mxu0 %v487
    %698 = vmatpush2.bf16.msra.mxu0 %v486
    %699 = vmatprep.subr.bf16.mxu0 %v485
    %700 = vmatpush2.bf16.msra.mxu0 %v484
    %701 = vmatprep.mubr.bf16.mxu0 %v37
    %702 = vmatmul.mubr.bf16.gmra.mxu0 %v36
    %v703 = vpop.f32.mrf.mxu0
    %v704 = vadd.f32 %v663, %v703
    %v705 = vpop.f32.mrf.mxu0
    %v706 = vadd.f32 %v665, %v705
    %v707 = vpop.f32.mrf.mxu0
    %v708 = vpop.f32.mrf.mxu0
    %709 = vdwg.mxu0
    %710 = vmatprep.subr.bf16.mxu0 %v515
    %711 = vmatpush1.bf16.msra.mxu0 %v514
    %712 = vmatprep.subr.bf16.mxu0 %v513
    %713 = vmatpush1.bf16.msra.mxu0 %v512
    %714 = vmatprep.subr.bf16.mxu0 %v511
    %715 = vmatpush1.bf16.msra.mxu0 %v510
    %716 = vmatprep.subr.bf16.mxu0 %v509
    %717 = vmatpush1.bf16.msra.mxu0 %v508
    %718 = vmatprep.subr.bf16.mxu0 %v507
    %719 = vmatpush1.bf16.msra.mxu0 %v506
    %720 = vmatprep.subr.bf16.mxu0 %v505
    %721 = vmatpush1.bf16.msra.mxu0 %v504
    %722 = vmatprep.subr.bf16.mxu0 %v503
    %723 = vmatpush1.bf16.msra.mxu0 %v502
    %724 = vmatprep.subr.bf16.mxu0 %v501
    %725 = vmatpush1.bf16.msra.mxu0 %v500
    %726 = vmatprep.subr.bf16.mxu0 %v531
    %727 = vmatpush2.bf16.msra.mxu0 %v530
    %728 = vmatprep.subr.bf16.mxu0 %v529
    %729 = vmatpush2.bf16.msra.mxu0 %v528
    %730 = vmatprep.subr.bf16.mxu0 %v527
    %731 = vmatpush2.bf16.msra.mxu0 %v526
    %732 = vmatprep.subr.bf16.mxu0 %v525
    %733 = vmatpush2.bf16.msra.mxu0 %v524
    %734 = vmatprep.subr.bf16.mxu0 %v523
    %735 = vmatpush2.bf16.msra.mxu0 %v522
    %736 = vmatprep.subr.bf16.mxu0 %v521
    %737 = vmatpush2.bf16.msra.mxu0 %v520
    %738 = vmatprep.subr.bf16.mxu0 %v519
    %739 = vmatpush2.bf16.msra.mxu0 %v518
    %740 = vmatprep.subr.bf16.mxu0 %v517
    %741 = vmatpush2.bf16.msra.mxu0 %v516
    %742 = vmatprep.mubr.bf16.mxu0 %v39
    %743 = vmatmul.mubr.bf16.gmra.mxu0 %v38
    %v744 = vpop.f32.mrf.mxu0
    %v745 = vadd.f32 %v704, %v744
    %v746 = vpop.f32.mrf.mxu0
    %v747 = vadd.f32 %v706, %v746
    %v748 = vpop.f32.mrf.mxu0
    %v749 = vpop.f32.mrf.mxu0
    %750 = vdwg.mxu0
    %751 = vst [vmem:[%s3] sm:$0xff] %v745
    %752 = vst [vmem:[%s3 + $0x8] sm:$0xff] %v747
    // Predicated region
    $region18: #{vit_mim_forward.10} parent=1 // pred_check
      _
    $region19: #{vit_mim_forward.10} parent=1 // pred_check_branch
      %754 = sbr.rel (0) target = $region21
    $region20: #{vit_mim_forward.10} parent=1 // pred_region
      _
    $region21: #{vit_mim_forward.10} parent=1 // pred_fallthru
      _
    // Predicated region
    $region22: #{vit_mim_forward.10} parent=1 // pred_check
      _
    $region23: #{vit_mim_forward.10} parent=1 // pred_check_branch
      %756 = sbr.rel (0) target = $region25
    $region24: #{vit_mim_forward.10} parent=1 // pred_region
      _
    $region25: #{vit_mim_forward.10} parent=1 // pred_fallthru
      _
    %757 = vsyncpa [#allocation3], 1

// kernel: vit_mim_forward.13
$region0: #{vit_mim_forward.13}
  #allocation0 [shape = 'u32[]', space=smem, size = 0x4, offset = 0x4, fixed_abs, tag = 'smem constant byte address 0x4 - core index']
  #allocation1 [shape = 'u32[144,128]{1,0:T(1,128)}', space=vmem, size = 0x12000, scoped, tag = 'internal scratch']
  %s0 = inlined_call_operand.vmem [shape: bf16[32,256], index: 0, kind: input, shape index: {}]
  %s1 = inlined_call_operand.vmem [shape: bf16[32,256], index: 1, kind: input, shape index: {}]
  %s2 = inlined_call_operand.vmem [shape: bf16[256,256], index: 2, kind: input, shape index: {}]
  %s3 = inlined_call_operand.vmem [shape: f32[1,256], index: 3, kind: input, shape index: {}]
  %s4 = inlined_call_operand.vmem [shape: bf16[32,256], index: 4, kind: output, shape index: {}]
  %s5 = sld [smem:[#allocation0]]
  $region26: #{vit_mim_forward.13} parent=0
    _
  %s7 = ssub.s32 1, %s5
  %s8 = scalar_select 0, %s7, %s5
  // Predicated region
  $region2: #{vit_mim_forward.13} parent=0 // pred_check
    _
  $region3: #{vit_mim_forward.13} parent=0 // pred_check_branch
    %10 = sbr.rel (0) target = $region5
  $region4: #{vit_mim_forward.13} parent=0 // pred_region
    _
  $region5: #{vit_mim_forward.13} parent=0 // pred_fallthru
    _
  // Predicated region
  $region6: #{vit_mim_forward.13} parent=0 // pred_check
    _
  $region7: #{vit_mim_forward.13} parent=0 // pred_check_branch
    %12 = sbr.rel (0) target = $region9
  $region8: #{vit_mim_forward.13} parent=0 // pred_region
    _
  $region9: #{vit_mim_forward.13} parent=0 // pred_fallthru
    _
  // Predicated region
  $region10: #{vit_mim_forward.13} parent=0 // pred_check
    _
  $region11: #{vit_mim_forward.13} parent=0 // pred_check_branch
    %14 = sbr.rel (0) target = $region13
  $region12: #{vit_mim_forward.13} parent=0 // pred_region
    _
  $region13: #{vit_mim_forward.13} parent=0 // pred_fallthru
    _
  // Predicated region
  $region14: #{vit_mim_forward.13} parent=0 // pred_check
    _
  $region15: #{vit_mim_forward.13} parent=0 // pred_check_branch
    %16 = sbr.rel (0) target = $region17
  $region16: #{vit_mim_forward.13} parent=0 // pred_region
    _
  $region17: #{vit_mim_forward.13} parent=0 // pred_fallthru
    _
  %v17 = vld [vmem:[%s0] sm:$0xff]
  %v18 = vld [vmem:[%s0 + $0x8] sm:$0xff]
  %v19 = vld [vmem:[%s0 + $0x10] sm:$0xff]
  %v20 = vld [vmem:[%s0 + $0x18] sm:$0xff]
  %v21 = vld [vmem:[%s2] sm:$0xff]
  %v22 = vld [vmem:[%s2 + $0x8] sm:$0xff]
  %v23 = vld [vmem:[%s2 + $0x10] sm:$0xff]
  %v24 = vld [vmem:[%s2 + $0x18] sm:$0xff]
  %v25 = vld [vmem:[%s2 + $0x20] sm:$0xff]
  %v26 = vld [vmem:[%s2 + $0x28] sm:$0xff]
  %v27 = vld [vmem:[%s2 + $0x30] sm:$0xff]
  %v28 = vld [vmem:[%s2 + $0x38] sm:$0xff]
  %v29 = vld [vmem:[%s2 + $0x40] sm:$0xff]
  %v30 = vld [vmem:[%s2 + $0x48] sm:$0xff]
  %v31 = vld [vmem:[%s2 + $0x50] sm:$0xff]
  %v32 = vld [vmem:[%s2 + $0x58] sm:$0xff]
  %v33 = vld [vmem:[%s2 + $0x60] sm:$0xff]
  %v34 = vld [vmem:[%s2 + $0x68] sm:$0xff]
  %v35 = vld [vmem:[%s2 + $0x70] sm:$0xff]
  %v36 = vld [vmem:[%s2 + $0x78] sm:$0xff]
  %v37 = vld [vmem:[%s2 + $0x80] sm:$0xff]
  %v38 = vld [vmem:[%s2 + $0x88] sm:$0xff]
  %v39 = vld [vmem:[%s2 + $0x90] sm:$0xff]
  %v40 = vld [vmem:[%s2 + $0x98] sm:$0xff]
  %v41 = vld [vmem:[%s2 + $0xa0] sm:$0xff]
  %v42 = vld [vmem:[%s2 + $0xa8] sm:$0xff]
  %v43 = vld [vmem:[%s2 + $0xb0] sm:$0xff]
  %v44 = vld [vmem:[%s2 + $0xb8] sm:$0xff]
  %v45 = vld [vmem:[%s2 + $0xc0] sm:$0xff]
  %v46 = vld [vmem:[%s2 + $0xc8] sm:$0xff]
  %v47 = vld [vmem:[%s2 + $0xd0] sm:$0xff]
  %v48 = vld [vmem:[%s2 + $0xd8] sm:$0xff]
  %v49 = vld [vmem:[%s2 + $0xe0] sm:$0xff]
  %v50 = vld [vmem:[%s2 + $0xe8] sm:$0xff]
  %v51 = vld [vmem:[%s2 + $0xf0] sm:$0xff]
  %v52 = vld [vmem:[%s2 + $0xf8] sm:$0xff]
  %v57 = vunpack.c.l.b16 %v17
  %v58 = vunpack.c.h.b16 %v17
  %v59 = vunpack.c.l.b16 %v18
  %v60 = vunpack.c.h.b16 %v18
  %v61 = vunpack.c.l.b16 %v19
  %v62 = vunpack.c.h.b16 %v19
  %v63 = vunpack.c.l.b16 %v20
  %v64 = vunpack.c.h.b16 %v20
  %v65 = vpack.c.b16 %v59, %v57
  %v66 = vpack.c.b16 %v60, %v58
  %v67 = vpack.c.b16 %v63, %v61
  %v68 = vpack.c.b16 %v64, %v62
  %v105 = vunpack.c.l.b16 %v21
  %v106 = vunpack.c.h.b16 %v21
  %v107 = vunpack.c.l.b16 %v22
  %v108 = vunpack.c.h.b16 %v22
  %v109 = vunpack.c.l.b16 %v23
  %v110 = vunpack.c.h.b16 %v23
  %v111 = vunpack.c.l.b16 %v24
  %v112 = vunpack.c.h.b16 %v24
  %v113 = vunpack.c.l.b16 %v25
  %v114 = vunpack.c.h.b16 %v25
  %v115 = vunpack.c.l.b16 %v26
  %v116 = vunpack.c.h.b16 %v26
  %v117 = vunpack.c.l.b16 %v27
  %v118 = vunpack.c.h.b16 %v27
  %v119 = vunpack.c.l.b16 %v28
  %v120 = vunpack.c.h.b16 %v28
  %v121 = vunpack.c.l.b16 %v29
  %v122 = vunpack.c.h.b16 %v29
  %v123 = vunpack.c.l.b16 %v30
  %v124 = vunpack.c.h.b16 %v30
  %v125 = vunpack.c.l.b16 %v31
  %v126 = vunpack.c.h.b16 %v31
  %v127 = vunpack.c.l.b16 %v32
  %v128 = vunpack.c.h.b16 %v32
  %v129 = vunpack.c.l.b16 %v33
  %v130 = vunpack.c.h.b16 %v33
  %v131 = vunpack.c.l.b16 %v34
  %v132 = vunpack.c.h.b16 %v34
  %v133 = vunpack.c.l.b16 %v35
  %v134 = vunpack.c.h.b16 %v35
  %v135 = vunpack.c.l.b16 %v36
  %v136 = vunpack.c.h.b16 %v36
  %v137 = vunpack.c.l.b16 %v37
  %v138 = vunpack.c.h.b16 %v37
  %v139 = vunpack.c.l.b16 %v38
  %v140 = vunpack.c.h.b16 %v38
  %v141 = vunpack.c.l.b16 %v39
  %v142 = vunpack.c.h.b16 %v39
  %v143 = vunpack.c.l.b16 %v40
  %v144 = vunpack.c.h.b16 %v40
  %v145 = vunpack.c.l.b16 %v41
  %v146 = vunpack.c.h.b16 %v41
  %v147 = vunpack.c.l.b16 %v42
  %v148 = vunpack.c.h.b16 %v42
  %v149 = vunpack.c.l.b16 %v43
  %v150 = vunpack.c.h.b16 %v43
  %v151 = vunpack.c.l.b16 %v44
  %v152 = vunpack.c.h.b16 %v44
  %v153 = vunpack.c.l.b16 %v45
  %v154 = vunpack.c.h.b16 %v45
  %v155 = vunpack.c.l.b16 %v46
  %v156 = vunpack.c.h.b16 %v46
  %v157 = vunpack.c.l.b16 %v47
  %v158 = vunpack.c.h.b16 %v47
  %v159 = vunpack.c.l.b16 %v48
  %v160 = vunpack.c.h.b16 %v48
  %v161 = vunpack.c.l.b16 %v49
  %v162 = vunpack.c.h.b16 %v49
  %v163 = vunpack.c.l.b16 %v50
  %v164 = vunpack.c.h.b16 %v50
  %v165 = vunpack.c.l.b16 %v51
  %v166 = vunpack.c.h.b16 %v51
  %v167 = vunpack.c.l.b16 %v52
  %v168 = vunpack.c.h.b16 %v52
  %v169 = vpack.c.b16 %v107, %v105
  %v170 = vpack.c.b16 %v108, %v106
  %v171 = vpack.c.b16 %v111, %v109
  %v172 = vpack.c.b16 %v112, %v110
  %v173 = vpack.c.b16 %v115, %v113
  %v174 = vpack.c.b16 %v116, %v114
  %v175 = vpack.c.b16 %v119, %v117
  %v176 = vpack.c.b16 %v120, %v118
  %v177 = vpack.c.b16 %v123, %v121
  %v178 = vpack.c.b16 %v124, %v122
  %v179 = vpack.c.b16 %v127, %v125
  %v180 = vpack.c.b16 %v128, %v126
  %v181 = vpack.c.b16 %v131, %v129
  %v182 = vpack.c.b16 %v132, %v130
  %v183 = vpack.c.b16 %v135, %v133
  %v184 = vpack.c.b16 %v136, %v134
  %v185 = vpack.c.b16 %v139, %v137
  %v186 = vpack.c.b16 %v140, %v138
  %v187 = vpack.c.b16 %v143, %v141
  %v188 = vpack.c.b16 %v144, %v142
  %v189 = vpack.c.b16 %v147, %v145
  %v190 = vpack.c.b16 %v148, %v146
  %v191 = vpack.c.b16 %v151, %v149
  %v192 = vpack.c.b16 %v152, %v150
  %v193 = vpack.c.b16 %v155, %v153
  %v194 = vpack.c.b16 %v156, %v154
  %v195 = vpack.c.b16 %v159, %v157
  %v196 = vpack.c.b16 %v160, %v158
  %v197 = vpack.c.b16 %v163, %v161
  %v198 = vpack.c.b16 %v164, %v162
  %v199 = vpack.c.b16 %v167, %v165
  %v200 = vpack.c.b16 %v168, %v166
  %233 = vmatprep.subr.bf16.mxu0 %v184
  %234 = vmatpush1.bf16.msra.mxu0 %v183
  %235 = vmatprep.subr.bf16.mxu0 %v182
  %236 = vmatpush1.bf16.msra.mxu0 %v181
  %237 = vmatprep.subr.bf16.mxu0 %v180
  %238 = vmatpush1.bf16.msra.mxu0 %v179
  %239 = vmatprep.subr.bf16.mxu0 %v178
  %240 = vmatpush1.bf16.msra.mxu0 %v177
  %241 = vmatprep.subr.bf16.mxu0 %v176
  %242 = vmatpush1.bf16.msra.mxu0 %v175
  %243 = vmatprep.subr.bf16.mxu0 %v174
  %244 = vmatpush1.bf16.msra.mxu0 %v173
  %245 = vmatprep.subr.bf16.mxu0 %v172
  %246 = vmatpush1.bf16.msra.mxu0 %v171
  %247 = vmatprep.subr.bf16.mxu0 %v170
  %248 = vmatpush1.bf16.msra.mxu0 %v169
  %249 = vmatprep.subr.bf16.mxu0 %v200
  %250 = vmatpush2.bf16.msra.mxu0 %v199
  %251 = vmatprep.subr.bf16.mxu0 %v198
  %252 = vmatpush2.bf16.msra.mxu0 %v197
  %253 = vmatprep.subr.bf16.mxu0 %v196
  %254 = vmatpush2.bf16.msra.mxu0 %v195
  %255 = vmatprep.subr.bf16.mxu0 %v194
  %256 = vmatpush2.bf16.msra.mxu0 %v193
  %257 = vmatprep.subr.bf16.mxu0 %v192
  %258 = vmatpush2.bf16.msra.mxu0 %v191
  %259 = vmatprep.subr.bf16.mxu0 %v190
  %260 = vmatpush2.bf16.msra.mxu0 %v189
  %261 = vmatprep.subr.bf16.mxu0 %v188
  %262 = vmatpush2.bf16.msra.mxu0 %v187
  %263 = vmatprep.subr.bf16.mxu0 %v186
  %264 = vmatpush2.bf16.msra.mxu0 %v185
  %265 = vmatprep.mubr.bf16.mxu0 %v66
  %266 = vmatmul.mubr.bf16.gmra.mxu0 %v65
  %v267 = vpop.f32.mrf.mxu0
  %v268 = vadd.f32 0.0, %v267
  %v269 = vpop.f32.mrf.mxu0
  %v270 = vadd.f32 0.0, %v269
  %v271 = vpop.f32.mrf.mxu0
  %v272 = vadd.f32 0.0, %v271
  %v273 = vpop.f32.mrf.mxu0
  %v274 = vadd.f32 0.0, %v273
  %275 = vmatprep.mubr.bf16.mxu0 %v68
  %276 = vmatmul.mubr.bf16.gmra.mxu0 %v67
  %v277 = vpop.f32.mrf.mxu0
  %v278 = vadd.f32 0.0, %v277
  %v279 = vpop.f32.mrf.mxu0
  %v280 = vadd.f32 0.0, %v279
  %v281 = vpop.f32.mrf.mxu0
  %v282 = vadd.f32 0.0, %v281
  %v283 = vpop.f32.mrf.mxu0
  %v284 = vadd.f32 0.0, %v283
  %285 = vdwg.mxu0
  %v286 = vld [vmem:[%s1] sm:$0xff]
  %v287 = vld [vmem:[%s1 + $0x8] sm:$0xff]
  %v288 = vld [vmem:[%s1 + $0x10] sm:$0xff]
  %v289 = vld [vmem:[%s1 + $0x18] sm:$0xff]
  %v290 = vunpack.c.l.bf16 %v286
  %v291 = vunpack.c.h.bf16 %v286
  %v292 = vunpack.c.l.bf16 %v287
  %v293 = vunpack.c.h.bf16 %v287
  %v294 = vunpack.c.l.bf16 %v288
  %v295 = vunpack.c.h.bf16 %v288
  %v296 = vunpack.c.l.bf16 %v289
  %v297 = vunpack.c.h.bf16 %v289
  %v298 = vld [vmem:[%s3] sm:$0x3]
  %v300 = vlaneseq
  %v301 = vshrl.u32 %v300, 7
  %v302 = vsub.s32 0, %v301
  %v303 = vrot.slane %v298, %v302
  %v304 = vlaneseq
  %v305 = vshrl.u32 %v304, 7
  %v306 = vsub.s32 1, %v305
  %v307 = vrot.slane %v298, %v306
  %v310 = vmul.f32 %v303, %v268
  %v311 = vmul.f32 %v307, %v270
  %v312 = vmul.f32 %v303, %v272
  %v313 = vmul.f32 %v307, %v274
  %v314 = vmul.f32 %v303, %v278
  %v315 = vmul.f32 %v307, %v280
  %v316 = vmul.f32 %v303, %v282
  %v317 = vmul.f32 %v307, %v284
  %v318 = vadd.f32 %v290, %v310
  %v319 = vadd.f32 %v291, %v311
  %v320 = vadd.f32 %v292, %v312
  %v321 = vadd.f32 %v293, %v313
  %v322 = vadd.f32 %v294, %v314
  %v323 = vadd.f32 %v295, %v315
  %v324 = vadd.f32 %v296, %v316
  %v325 = vadd.f32 %v297, %v317
  %v326 = vpack.c.bf16 %v320, %v318
  %v327 = vpack.c.bf16 %v321, %v319
  %v328 = vpack.c.bf16 %v324, %v322
  %v329 = vpack.c.bf16 %v325, %v323
  %v334 = vunpack.c.l.b16 %v326
  %v335 = vunpack.c.l.b16 %v327
  %v336 = vunpack.c.h.b16 %v326
  %v337 = vunpack.c.h.b16 %v327
  %v338 = vunpack.c.l.b16 %v328
  %v339 = vunpack.c.l.b16 %v329
  %v340 = vunpack.c.h.b16 %v328
  %v341 = vunpack.c.h.b16 %v329
  %v342 = vpack.c.b16 %v335, %v334
  %v343 = vpack.c.b16 %v337, %v336
  %v344 = vpack.c.b16 %v339, %v338
  %v345 = vpack.c.b16 %v341, %v340
  %350 = vst [vmem:[%s4] sm:$0xff] %v342
  %351 = vst [vmem:[%s4 + $0x8] sm:$0xff] %v343
  %352 = vst [vmem:[%s4 + $0x10] sm:$0xff] %v344
  %353 = vst [vmem:[%s4 + $0x18] sm:$0xff] %v345
  // Predicated region
  $region18: #{vit_mim_forward.13} parent=0 // pred_check
    _
  $region19: #{vit_mim_forward.13} parent=0 // pred_check_branch
    %355 = sbr.rel (0) target = $region21
  $region20: #{vit_mim_forward.13} parent=0 // pred_region
    _
  $region21: #{vit_mim_forward.13} parent=0 // pred_fallthru
    _
  // Predicated region
  $region22: #{vit_mim_forward.13} parent=0 // pred_check
    _
  $region23: #{vit_mim_forward.13} parent=0 // pred_check_branch
    %357 = sbr.rel (0) target = $region25
  $region24: #{vit_mim_forward.13} parent=0 // pred_region
    _
  $region25: #{vit_mim_forward.13} parent=0 // pred_fallthru
    _

// kernel: vit_mim_forward.12
$region0: #{vit_mim_forward.12}
  #allocation0 [shape = 'u32[]', space=smem, size = 0x4, offset = 0x4, fixed_abs, tag = 'smem constant byte address 0x4 - core index']
  #allocation1 [shape = 'u32[144,128]{1,0:T(1,128)}', space=vmem, size = 0x12000, scoped, tag = 'internal scratch']
  %s0 = inlined_call_operand.vmem [shape: bf16[2,16,768], index: 0, kind: input, shape index: {}, may-alias: {0,1,2}]
  %s1 = inlined_call_operand.vmem [shape: bf16[2,16,768], index: 1, kind: input, shape index: {}, may-alias: {0,1,2}]
  %s2 = inlined_call_operand.vmem [shape: bf16[2,16,768], index: 2, kind: input, shape index: {}, may-alias: {0,1,2}]
  %s3 = inlined_call_operand.vmem [shape: f32[16,128], index: 3, kind: input, shape index: {}]
  %s4 = inlined_call_operand.vmem [shape: f32[16,128], index: 4, kind: input, shape index: {}]
  %s5 = inlined_call_operand.vmem [shape: f32[1,16], index: 5, kind: input, shape index: {}]
  %s6 = inlined_call_operand.vmem [shape: bf16[2,16,256], index: 6, kind: output, shape index: {}]
  %s7 = sld [smem:[#allocation0]]
  $region171: #{vit_mim_forward.12} parent=0
    _
  %s9 = ssub.s32 1, %s7
  %s10 = scalar_select 0, %s9, %s7
  $region1: #{vit_mim_forward.12} parent=0
    #allocation2 [shape = 'u8[16384]{0}', space=vmem, size = 0x4000, scoped, tag = 'input window, operand 0']
    #allocation3 [shape = 'u8[16384]{0}', space=vmem, size = 0x4000, scoped, tag = 'input window, operand 1']
    #allocation4 [shape = 'u8[16384]{0}', space=vmem, size = 0x4000, scoped, tag = 'input window, operand 2']
    loop: start=0, step=1, limit=4
    $region2: #{vit_mim_forward.12} parent=1 // loop_pre_header
      _
    $region3: #{vit_mim_forward.12} parent=1 // loop_header
      %s12 = sphi 0, %s16
      %p13 = scmp.ge.s32.totalorder %s12, 4
      %s22 = sphi 0, %s24
      %s25 = sphi 0, %s22
      %s26 = sphi 0, %s25
      %s42 = sphi 0, %s26
      %s48 = sphi 0, %s50
      %s51 = sphi 0, %s48
      %s52 = sphi 0, %s51
      %s68 = sphi 0, %s52
      %s74 = sphi 0, %s76
      %s77 = sphi 0, %s74
      %s78 = sphi 0, %s77
      %s94 = sphi 0, %s78
      %s98 = sphi 0, %s98
      %s100 = sphi 0, %s98
      %s101 = sphi 0, %s100
      %s115 = sphi 0, %s101
      %s119 = sphi 0, %s119
      %s121 = sphi 0, %s119
      %s122 = sphi 0, %s121
      %s136 = sphi 0, %s122
      %s140 = sphi 0, %s140
      %s142 = sphi 0, %s140
      %s143 = sphi 0, %s142
      %s157 = sphi 0, %s143
      %s163 = sphi 0, %s165
      %s166 = sphi 0, %s163
      %s167 = sphi 0, %s166
      %s183 = sphi 0, %s167
    $region4: #{vit_mim_forward.12} parent=1 // loop_header_branch
      %15 = sbr.rel (%p13) target = $region8
    $region5: #{vit_mim_forward.12} parent=1 // loop_body
      %s17 = ssub.s32 %s12, 1
      %s18 = ssub.s32 %s12, 2
      %s19 = sadd.s32 %s12, 1
      %s20 = ssub.s32 %s12, %s19
      %p21 = scmp.eq.s32.totalorder %s20, 0
      %s23 = sadd.s32 %s22, 1
      %s24 = scalar_select %p21, %s22, %s23
      %p27 = pneg %p21
      %p28 = scmp.eq.s32.totalorder %s12, 1
      %p29 = por %p27, %p28
      %p30 = scmp.ne.s32.totalorder %s22, %s25
      %p31 = scmp.eq.s32.totalorder %s12, 0
      %p32 = por %p30, %p31
      %p33 = scmp.ne.s32.totalorder %s22, %s25
      %p34 = scmp.eq.s32.totalorder %s17, 1
      %p35 = por %p33, %p34
      %p36 = scmp.ne.s32.totalorder %s25, %s26
      %p37 = scmp.eq.s32.totalorder %s17, 0
      %p38 = por %p36, %p37
      %p39 = scmp.ne.s32.totalorder %s25, %s26
      %p40 = scmp.eq.s32.totalorder %s18, 1
      %p41 = por %p39, %p40
      %p43 = scmp.ne.s32.totalorder %s26, %s42
      %p44 = scmp.eq.s32.totalorder %s18, 0
      %p45 = por %p43, %p44
      %s46 = ssub.s32 %s12, %s19
      %p47 = scmp.eq.s32.totalorder %s46, 0
      %s49 = sadd.s32 %s48, 1
      %s50 = scalar_select %p47, %s48, %s49
      %p53 = pneg %p47
      %p54 = scmp.eq.s32.totalorder %s12, 1
      %p55 = por %p53, %p54
      %p56 = scmp.ne.s32.totalorder %s48, %s51
      %p57 = scmp.eq.s32.totalorder %s12, 0
      %p58 = por %p56, %p57
      %p59 = scmp.ne.s32.totalorder %s48, %s51
      %p60 = scmp.eq.s32.totalorder %s17, 1
      %p61 = por %p59, %p60
      %p62 = scmp.ne.s32.totalorder %s51, %s52
      %p63 = scmp.eq.s32.totalorder %s17, 0
      %p64 = por %p62, %p63
      %p65 = scmp.ne.s32.totalorder %s51, %s52
      %p66 = scmp.eq.s32.totalorder %s18, 1
      %p67 = por %p65, %p66
      %p69 = scmp.ne.s32.totalorder %s52, %s68
      %p70 = scmp.eq.s32.totalorder %s18, 0
      %p71 = por %p69, %p70
      %s72 = ssub.s32 %s12, %s19
      %p73 = scmp.eq.s32.totalorder %s72, 0
      %s75 = sadd.s32 %s74, 1
      %s76 = scalar_select %p73, %s74, %s75
      %p79 = pneg %p73
      %p80 = scmp.eq.s32.totalorder %s12, 1
      %p81 = por %p79, %p80
      %p82 = scmp.ne.s32.totalorder %s74, %s77
      %p83 = scmp.eq.s32.totalorder %s12, 0
      %p84 = por %p82, %p83
      %p85 = scmp.ne.s32.totalorder %s74, %s77
      %p86 = scmp.eq.s32.totalorder %s17, 1
      %p87 = por %p85, %p86
      %p88 = scmp.ne.s32.totalorder %s77, %s78
      %p89 = scmp.eq.s32.totalorder %s17, 0
      %p90 = por %p88, %p89
      %p91 = scmp.ne.s32.totalorder %s77, %s78
      %p92 = scmp.eq.s32.totalorder %s18, 1
      %p93 = por %p91, %p92
      %p95 = scmp.ne.s32.totalorder %s78, %s94
      %p96 = scmp.eq.s32.totalorder %s18, 0
      %p97 = por %p95, %p96
      %s99 = sadd.s32 %s98, 1
      %p102 = scmp.eq.s32.totalorder %s12, 1
      %p103 = scmp.ne.s32.totalorder %s98, %s100
      %p104 = scmp.eq.s32.totalorder %s12, 0
      %p105 = por %p103, %p104
      %p106 = scmp.ne.s32.totalorder %s98, %s100
      %p107 = scmp.eq.s32.totalorder %s17, 1
      %p108 = por %p106, %p107
      %p109 = scmp.ne.s32.totalorder %s100, %s101
      %p110 = scmp.eq.s32.totalorder %s17, 0
      %p111 = por %p109, %p110
      %p112 = scmp.ne.s32.totalorder %s100, %s101
      %p113 = scmp.eq.s32.totalorder %s18, 1
      %p114 = por %p112, %p113
      %p116 = scmp.ne.s32.totalorder %s101, %s115
      %p117 = scmp.eq.s32.totalorder %s18, 0
      %p118 = por %p116, %p117
      %s120 = sadd.s32 %s119, 1
      %p123 = scmp.eq.s32.totalorder %s12, 1
      %p124 = scmp.ne.s32.totalorder %s119, %s121
      %p125 = scmp.eq.s32.totalorder %s12, 0
      %p126 = por %p124, %p125
      %p127 = scmp.ne.s32.totalorder %s119, %s121
      %p128 = scmp.eq.s32.totalorder %s17, 1
      %p129 = por %p127, %p128
      %p130 = scmp.ne.s32.totalorder %s121, %s122
      %p131 = scmp.eq.s32.totalorder %s17, 0
      %p132 = por %p130, %p131
      %p133 = scmp.ne.s32.totalorder %s121, %s122
      %p134 = scmp.eq.s32.totalorder %s18, 1
      %p135 = por %p133, %p134
      %p137 = scmp.ne.s32.totalorder %s122, %s136
      %p138 = scmp.eq.s32.totalorder %s18, 0
      %p139 = por %p137, %p138
      %s141 = sadd.s32 %s140, 1
      %p144 = scmp.eq.s32.totalorder %s12, 1
      %p145 = scmp.ne.s32.totalorder %s140, %s142
      %p146 = scmp.eq.s32.totalorder %s12, 0
      %p147 = por %p145, %p146
      %p148 = scmp.ne.s32.totalorder %s140, %s142
      %p149 = scmp.eq.s32.totalorder %s17, 1
      %p150 = por %p148, %p149
      %p151 = scmp.ne.s32.totalorder %s142, %s143
      %p152 = scmp.eq.s32.totalorder %s17, 0
      %p153 = por %p151, %p152
      %p154 = scmp.ne.s32.totalorder %s142, %s143
      %p155 = scmp.eq.s32.totalorder %s18, 1
      %p156 = por %p154, %p155
      %p158 = scmp.ne.s32.totalorder %s143, %s157
      %p159 = scmp.eq.s32.totalorder %s18, 0
      %p160 = por %p158, %p159
      %s161 = ssub.s32 %s12, %s19
      %p162 = scmp.eq.s32.totalorder %s161, 0
      %s164 = sadd.s32 %s163, 1
      %s165 = scalar_select %p162, %s163, %s164
      %p168 = pneg %p162
      %p169 = scmp.eq.s32.totalorder %s12, 1
      %p170 = por %p168, %p169
      %p171 = scmp.ne.s32.totalorder %s163, %s166
      %p172 = scmp.eq.s32.totalorder %s12, 0
      %p173 = por %p171, %p172
      %p174 = scmp.ne.s32.totalorder %s163, %s166
      %p175 = scmp.eq.s32.totalorder %s17, 1
      %p176 = por %p174, %p175
      %p177 = scmp.ne.s32.totalorder %s166, %s167
      %p178 = scmp.eq.s32.totalorder %s17, 0
      %p179 = por %p177, %p178
      %p180 = scmp.ne.s32.totalorder %s166, %s167
      %p181 = scmp.eq.s32.totalorder %s18, 1
      %p182 = por %p180, %p181
      %p184 = scmp.ne.s32.totalorder %s167, %s183
      %p185 = scmp.eq.s32.totalorder %s18, 0
      %p186 = por %p184, %p185
      %p187 = scmp.le.s32.totalorder 1, %s12
      %p188 = scmp.lt.s32.totalorder %s12, 3
      %p189 = pnand %p187, %p188
      %p190 = pneg %p189
      // Predicated region
      $region9: #{vit_mim_forward.12} parent=5 // pred_check
        _
      $region10: #{vit_mim_forward.12} parent=5 // pred_check_branch
        %192 = sbr.rel (%p189) target = $region12
      $region11: #{vit_mim_forward.12} parent=5 // pred_region
        %s193 = ssub.s32 %s12, 1
        // Predicated region
        $region13: #{vit_mim_forward.12} parent=11 // pred_check
          %p194 = pneg %p111
        $region14: #{vit_mim_forward.12} parent=11 // pred_check_branch
          %196 = sbr.rel (%p194) target = $region16
        $region15: #{vit_mim_forward.12} parent=11 // pred_region
          _
        $region16: #{vit_mim_forward.12} parent=11 // pred_fallthru
          _
        // Predicated region
        $region17: #{vit_mim_forward.12} parent=11 // pred_check
          %p197 = pneg %p132
        $region18: #{vit_mim_forward.12} parent=11 // pred_check_branch
          %199 = sbr.rel (%p197) target = $region20
        $region19: #{vit_mim_forward.12} parent=11 // pred_region
          _
        $region20: #{vit_mim_forward.12} parent=11 // pred_fallthru
          _
        // Predicated region
        $region21: #{vit_mim_forward.12} parent=11 // pred_check
          %p200 = pneg %p153
        $region22: #{vit_mim_forward.12} parent=11 // pred_check_branch
          %202 = sbr.rel (%p200) target = $region24
        $region23: #{vit_mim_forward.12} parent=11 // pred_region
          _
        $region24: #{vit_mim_forward.12} parent=11 // pred_fallthru
          _
      $region12: #{vit_mim_forward.12} parent=5 // pred_fallthru
        _
      %p203 = scmp.lt.s32.totalorder %s12, 2
      // Predicated region
      $region25: #{vit_mim_forward.12} parent=5 // pred_check
        %p204 = pneg %p203
      $region26: #{vit_mim_forward.12} parent=5 // pred_check_branch
        %206 = sbr.rel (%p204) target = $region28
      $region27: #{vit_mim_forward.12} parent=5 // pred_region
        // Predicated region
        $region29: #{vit_mim_forward.12} parent=27 // pred_check
          %p207 = pneg %p32
        $region30: #{vit_mim_forward.12} parent=27 // pred_check_branch
          %209 = sbr.rel (%p207) target = $region32
        $region31: #{vit_mim_forward.12} parent=27 // pred_region
          %s210 = sand.u32 %s22, 1
          %s211 = sand.u32 %s22, 1
          %s212 = smul.addr %s211, 16
          %s213 = scalar_lea.vmem [#allocation2], %s212
          %s214 = smul.addr %s12, 12
          %s215 = smul.addr %s214, 4
          %s216 = scalar_lea.vmem %s0, %s215
          // Predicated region
          $region33: #{vit_mim_forward.12} parent=31 // pred_check
            _
          $region34: #{vit_mim_forward.12} parent=31 // pred_check_branch
            %218 = sbr.rel (0) target = $region36
          $region35: #{vit_mim_forward.12} parent=31 // pred_region
            // Predicated region
            $region37: #{vit_mim_forward.12} parent=35 // pred_check
              _
            $region38: #{vit_mim_forward.12} parent=35 // pred_check_branch
              %220 = sbr.rel (0) target = $region40
            $region39: #{vit_mim_forward.12} parent=35 // pred_region
              // Predicated region
              $region52: #{vit_mim_forward.12} parent=39 // pred_check
                _
              $region53: #{vit_mim_forward.12} parent=39 // pred_check_branch
                %238 = sbr.rel (0) target = $region55
              $region54: #{vit_mim_forward.12} parent=39 // pred_region
                loop: start=0, step=1, limit=1
                $region56: #{vit_mim_forward.12} parent=54 // loop_pre_header
                  _
                $region57: #{vit_mim_forward.12} parent=54 // loop_header
                  %s240 = sphi 0, %s244
                  %p241 = scmp.ge.s32.totalorder %s240, 1
                  %s245 = sphi %s216, %s216
                  %s246 = sphi %s213, %s213
                $region58: #{vit_mim_forward.12} parent=54 // loop_header_branch
                  %243 = sbr.rel (%p241) target = $region62
                $region59: #{vit_mim_forward.12} parent=54 // loop_body
                  %v247 = vld [vmem:[%s245] sm:$0xff]
                  %248 = vst [vmem:[%s246] sm:$0xff] %v247
                  %v249 = vld [vmem:[%s245 + $0x18] sm:$0xff]
                  %250 = vst [vmem:[%s246 + $0x8] sm:$0xff] %v249
                $region60: #{vit_mim_forward.12} parent=54 // loop_footer
                  %s244 = sadd.s32 1, %s240
                $region61: #{vit_mim_forward.12} parent=54 // loop_footer_branch
                  %239 = sbr.rel target = $region57
                $region62: #{vit_mim_forward.12} parent=54 // loop_exit
                  _
              $region55: #{vit_mim_forward.12} parent=39 // pred_fallthru
                _
              // Predicated region
              $region63: #{vit_mim_forward.12} parent=39 // pred_check
                _
              $region64: #{vit_mim_forward.12} parent=39 // pred_check_branch
                %252 = sbr.rel target = $region66
              $region65: #{vit_mim_forward.12} parent=39 // pred_region
                _
              $region66: #{vit_mim_forward.12} parent=39 // pred_fallthru
                _
            $region40: #{vit_mim_forward.12} parent=35 // pred_fallthru
              _
            // Predicated region
            $region41: #{vit_mim_forward.12} parent=35 // pred_check
              _
            $region42: #{vit_mim_forward.12} parent=35 // pred_check_branch
              %222 = sbr.rel target = $region44
            $region43: #{vit_mim_forward.12} parent=35 // pred_region
              %s224 = ssub.s32 256, 1
              loop: start=0, step=1, limit=1
              $region45: #{vit_mim_forward.12} parent=43 // loop_pre_header
                _
              $region46: #{vit_mim_forward.12} parent=43 // loop_header
                %s226 = sphi 0, %s230
                %p227 = scmp.ge.s32.totalorder %s226, 1
                %s231 = sphi %s216, %s216
                %s232 = sphi %s213, %s213
              $region47: #{vit_mim_forward.12} parent=43 // loop_header_branch
                %229 = sbr.rel (%p227) target = $region51
              $region48: #{vit_mim_forward.12} parent=43 // loop_body
                %v233 = vld [vmem:[%s231] sm:%s224]
                %234 = vst [vmem:[%s232] sm:%s224] %v233
                %v235 = vld [vmem:[%s231 + $0x18] sm:%s224]
                %236 = vst [vmem:[%s232 + $0x8] sm:%s224] %v235
              $region49: #{vit_mim_forward.12} parent=43 // loop_footer
                %s230 = sadd.s32 1, %s226
              $region50: #{vit_mim_forward.12} parent=43 // loop_footer_branch
                %225 = sbr.rel target = $region46
              $region51: #{vit_mim_forward.12} parent=43 // loop_exit
                _
            $region44: #{vit_mim_forward.12} parent=35 // pred_fallthru
              _
          $region36: #{vit_mim_forward.12} parent=31 // pred_fallthru
            _
          %253 = vnop
        $region32: #{vit_mim_forward.12} parent=27 // pred_fallthru
          _
        // Predicated region
        $region67: #{vit_mim_forward.12} parent=27 // pred_check
          %p254 = pneg %p58
        $region68: #{vit_mim_forward.12} parent=27 // pred_check_branch
          %256 = sbr.rel (%p254) target = $region70
        $region69: #{vit_mim_forward.12} parent=27 // pred_region
          %s257 = sand.u32 %s48, 1
          %s258 = sand.u32 %s48, 1
          %s259 = smul.addr %s258, 16
          %s260 = scalar_lea.vmem [#allocation3], %s259
          %s261 = smul.addr %s12, 12
          %s262 = sadd.s32 2, %s261
          %s263 = smul.addr %s262, 4
          %s264 = scalar_lea.vmem %s1, %s263
          // Predicated region
          $region71: #{vit_mim_forward.12} parent=69 // pred_check
            _
          $region72: #{vit_mim_forward.12} parent=69 // pred_check_branch
            %266 = sbr.rel (0) target = $region74
          $region73: #{vit_mim_forward.12} parent=69 // pred_region
            // Predicated region
            $region75: #{vit_mim_forward.12} parent=73 // pred_check
              _
            $region76: #{vit_mim_forward.12} parent=73 // pred_check_branch
              %268 = sbr.rel (0) target = $region78
            $region77: #{vit_mim_forward.12} parent=73 // pred_region
              // Predicated region
              $region90: #{vit_mim_forward.12} parent=77 // pred_check
                _
              $region91: #{vit_mim_forward.12} parent=77 // pred_check_branch
                %286 = sbr.rel (0) target = $region93
              $region92: #{vit_mim_forward.12} parent=77 // pred_region
                loop: start=0, step=1, limit=1
                $region94: #{vit_mim_forward.12} parent=92 // loop_pre_header
                  _
                $region95: #{vit_mim_forward.12} parent=92 // loop_header
                  %s288 = sphi 0, %s292
                  %p289 = scmp.ge.s32.totalorder %s288, 1
                  %s293 = sphi %s264, %s264
                  %s294 = sphi %s260, %s260
                $region96: #{vit_mim_forward.12} parent=92 // loop_header_branch
                  %291 = sbr.rel (%p289) target = $region100
                $region97: #{vit_mim_forward.12} parent=92 // loop_body
                  %v295 = vld [vmem:[%s293] sm:$0xff]
                  %296 = vst [vmem:[%s294] sm:$0xff] %v295
                  %v297 = vld [vmem:[%s293 + $0x18] sm:$0xff]
                  %298 = vst [vmem:[%s294 + $0x8] sm:$0xff] %v297
                $region98: #{vit_mim_forward.12} parent=92 // loop_footer
                  %s292 = sadd.s32 1, %s288
                $region99: #{vit_mim_forward.12} parent=92 // loop_footer_branch
                  %287 = sbr.rel target = $region95
                $region100: #{vit_mim_forward.12} parent=92 // loop_exit
                  _
              $region93: #{vit_mim_forward.12} parent=77 // pred_fallthru
                _
              // Predicated region
              $region101: #{vit_mim_forward.12} parent=77 // pred_check
                _
              $region102: #{vit_mim_forward.12} parent=77 // pred_check_branch
                %300 = sbr.rel target = $region104
              $region103: #{vit_mim_forward.12} parent=77 // pred_region
                _
              $region104: #{vit_mim_forward.12} parent=77 // pred_fallthru
                _
            $region78: #{vit_mim_forward.12} parent=73 // pred_fallthru
              _
            // Predicated region
            $region79: #{vit_mim_forward.12} parent=73 // pred_check
              _
            $region80: #{vit_mim_forward.12} parent=73 // pred_check_branch
              %270 = sbr.rel target = $region82
            $region81: #{vit_mim_forward.12} parent=73 // pred_region
              %s272 = ssub.s32 256, 1
              loop: start=0, step=1, limit=1
              $region83: #{vit_mim_forward.12} parent=81 // loop_pre_header
                _
              $region84: #{vit_mim_forward.12} parent=81 // loop_header
                %s274 = sphi 0, %s278
                %p275 = scmp.ge.s32.totalorder %s274, 1
                %s279 = sphi %s264, %s264
                %s280 = sphi %s260, %s260
              $region85: #{vit_mim_forward.12} parent=81 // loop_header_branch
                %277 = sbr.rel (%p275) target = $region89
              $region86: #{vit_mim_forward.12} parent=81 // loop_body
                %v281 = vld [vmem:[%s279] sm:%s272]
                %282 = vst [vmem:[%s280] sm:%s272] %v281
                %v283 = vld [vmem:[%s279 + $0x18] sm:%s272]
                %284 = vst [vmem:[%s280 + $0x8] sm:%s272] %v283
              $region87: #{vit_mim_forward.12} parent=81 // loop_footer
                %s278 = sadd.s32 1, %s274
              $region88: #{vit_mim_forward.12} parent=81 // loop_footer_branch
                %273 = sbr.rel target = $region84
              $region89: #{vit_mim_forward.12} parent=81 // loop_exit
                _
            $region82: #{vit_mim_forward.12} parent=73 // pred_fallthru
              _
          $region74: #{vit_mim_forward.12} parent=69 // pred_fallthru
            _
          %301 = vnop
        $region70: #{vit_mim_forward.12} parent=27 // pred_fallthru
          _
        // Predicated region
        $region105: #{vit_mim_forward.12} parent=27 // pred_check
          %p302 = pneg %p84
        $region106: #{vit_mim_forward.12} parent=27 // pred_check_branch
          %304 = sbr.rel (%p302) target = $region108
        $region107: #{vit_mim_forward.12} parent=27 // pred_region
          %s305 = sand.u32 %s74, 1
          %s306 = sand.u32 %s74, 1
          %s307 = smul.addr %s306, 16
          %s308 = scalar_lea.vmem [#allocation4], %s307
          %s309 = smul.addr %s12, 12
          %s310 = sadd.s32 4, %s309
          %s311 = smul.addr %s310, 4
          %s312 = scalar_lea.vmem %s2, %s311
          // Predicated region
          $region109: #{vit_mim_forward.12} parent=107 // pred_check
            _
          $region110: #{vit_mim_forward.12} parent=107 // pred_check_branch
            %314 = sbr.rel (0) target = $region112
          $region111: #{vit_mim_forward.12} parent=107 // pred_region
            // Predicated region
            $region113: #{vit_mim_forward.12} parent=111 // pred_check
              _
            $region114: #{vit_mim_forward.12} parent=111 // pred_check_branch
              %316 = sbr.rel (0) target = $region116
            $region115: #{vit_mim_forward.12} parent=111 // pred_region
              // Predicated region
              $region128: #{vit_mim_forward.12} parent=115 // pred_check
                _
              $region129: #{vit_mim_forward.12} parent=115 // pred_check_branch
                %334 = sbr.rel (0) target = $region131
              $region130: #{vit_mim_forward.12} parent=115 // pred_region
                loop: start=0, step=1, limit=1
                $region132: #{vit_mim_forward.12} parent=130 // loop_pre_header
                  _
                $region133: #{vit_mim_forward.12} parent=130 // loop_header
                  %s336 = sphi 0, %s340
                  %p337 = scmp.ge.s32.totalorder %s336, 1
                  %s341 = sphi %s312, %s312
                  %s342 = sphi %s308, %s308
                $region134: #{vit_mim_forward.12} parent=130 // loop_header_branch
                  %339 = sbr.rel (%p337) target = $region138
                $region135: #{vit_mim_forward.12} parent=130 // loop_body
                  %v343 = vld [vmem:[%s341] sm:$0xff]
                  %344 = vst [vmem:[%s342] sm:$0xff] %v343
                  %v345 = vld [vmem:[%s341 + $0x18] sm:$0xff]
                  %346 = vst [vmem:[%s342 + $0x8] sm:$0xff] %v345
                $region136: #{vit_mim_forward.12} parent=130 // loop_footer
                  %s340 = sadd.s32 1, %s336
                $region137: #{vit_mim_forward.12} parent=130 // loop_footer_branch
                  %335 = sbr.rel target = $region133
                $region138: #{vit_mim_forward.12} parent=130 // loop_exit
                  _
              $region131: #{vit_mim_forward.12} parent=115 // pred_fallthru
                _
              // Predicated region
              $region139: #{vit_mim_forward.12} parent=115 // pred_check
                _
              $region140: #{vit_mim_forward.12} parent=115 // pred_check_branch
                %348 = sbr.rel target = $region142
              $region141: #{vit_mim_forward.12} parent=115 // pred_region
                _
              $region142: #{vit_mim_forward.12} parent=115 // pred_fallthru
                _
            $region116: #{vit_mim_forward.12} parent=111 // pred_fallthru
              _
            // Predicated region
            $region117: #{vit_mim_forward.12} parent=111 // pred_check
              _
            $region118: #{vit_mim_forward.12} parent=111 // pred_check_branch
              %318 = sbr.rel target = $region120
            $region119: #{vit_mim_forward.12} parent=111 // pred_region
              %s320 = ssub.s32 256, 1
              loop: start=0, step=1, limit=1
              $region121: #{vit_mim_forward.12} parent=119 // loop_pre_header
                _
              $region122: #{vit_mim_forward.12} parent=119 // loop_header
                %s322 = sphi 0, %s326
                %p323 = scmp.ge.s32.totalorder %s322, 1
                %s327 = sphi %s312, %s312
                %s328 = sphi %s308, %s308
              $region123: #{vit_mim_forward.12} parent=119 // loop_header_branch
                %325 = sbr.rel (%p323) target = $region127
              $region124: #{vit_mim_forward.12} parent=119 // loop_body
                %v329 = vld [vmem:[%s327] sm:%s320]
                %330 = vst [vmem:[%s328] sm:%s320] %v329
                %v331 = vld [vmem:[%s327 + $0x18] sm:%s320]
                %332 = vst [vmem:[%s328 + $0x8] sm:%s320] %v331
              $region125: #{vit_mim_forward.12} parent=119 // loop_footer
                %s326 = sadd.s32 1, %s322
              $region126: #{vit_mim_forward.12} parent=119 // loop_footer_branch
                %321 = sbr.rel target = $region122
              $region127: #{vit_mim_forward.12} parent=119 // loop_exit
                _
            $region120: #{vit_mim_forward.12} parent=111 // pred_fallthru
              _
          $region112: #{vit_mim_forward.12} parent=107 // pred_fallthru
            _
          %349 = vnop
        $region108: #{vit_mim_forward.12} parent=27 // pred_fallthru
          _
      $region28: #{vit_mim_forward.12} parent=5 // pred_fallthru
        _
      %p350 = scmp.le.s32.totalorder 1, %s12
      %p351 = scmp.lt.s32.totalorder %s12, 3
      %p352 = pnand %p350, %p351
      %p353 = pneg %p352
      // Predicated region
      $region143: #{vit_mim_forward.12} parent=5 // pred_check
        _
      $region144: #{vit_mim_forward.12} parent=5 // pred_check_branch
        %355 = sbr.rel (%p352) target = $region146
      $region145: #{vit_mim_forward.12} parent=5 // pred_region
        %s356 = ssub.s32 %s12, 1
        %s357 = sand.u32 %s25, 1
        %s358 = sand.u32 %s25, 1
        %s359 = smul.addr %s358, 16
        %s360 = scalar_lea.vmem [#allocation2], %s359
        // Predicated region
        $region147: #{vit_mim_forward.12} parent=145 // pred_check
          %p361 = pneg %p38
        $region148: #{vit_mim_forward.12} parent=145 // pred_check_branch
          %363 = sbr.rel (%p361) target = $region150
        $region149: #{vit_mim_forward.12} parent=145 // pred_region
          _
        $region150: #{vit_mim_forward.12} parent=145 // pred_fallthru
          _
        %s364 = sand.u32 %s51, 1
        %s365 = sand.u32 %s51, 1
        %s366 = smul.addr %s365, 16
        %s367 = scalar_lea.vmem [#allocation3], %s366
        // Predicated region
        $region151: #{vit_mim_forward.12} parent=145 // pred_check
          %p368 = pneg %p64
        $region152: #{vit_mim_forward.12} parent=145 // pred_check_branch
          %370 = sbr.rel (%p368) target = $region154
        $region153: #{vit_mim_forward.12} parent=145 // pred_region
          _
        $region154: #{vit_mim_forward.12} parent=145 // pred_fallthru
          _
        %s371 = sand.u32 %s77, 1
        %s372 = sand.u32 %s77, 1
        %s373 = smul.addr %s372, 16
        %s374 = scalar_lea.vmem [#allocation4], %s373
        // Predicated region
        $region155: #{vit_mim_forward.12} parent=145 // pred_check
          %p375 = pneg %p90
        $region156: #{vit_mim_forward.12} parent=145 // pred_check_branch
          %377 = sbr.rel (%p375) target = $region158
        $region157: #{vit_mim_forward.12} parent=145 // pred_region
          _
        $region158: #{vit_mim_forward.12} parent=145 // pred_fallthru
          _
        %s378 = sand.u32 %s25, 1
        %s379 = sand.u32 %s25, 1
        %s380 = smul.addr %s379, 16
        %s381 = scalar_lea.vmem [#allocation2], %s380
        %p382 = pneg %p38
        %p383 = pneg %p35
        %s384 = sand.u32 %s51, 1
        %s385 = sand.u32 %s51, 1
        %s386 = smul.addr %s385, 16
        %s387 = scalar_lea.vmem [#allocation3], %s386
        %p388 = pneg %p64
        %p389 = pneg %p61
        %s390 = sand.u32 %s77, 1
        %s391 = sand.u32 %s77, 1
        %s392 = smul.addr %s391, 16
        %s393 = scalar_lea.vmem [#allocation4], %s392
        %p394 = pneg %p90
        %p395 = pneg %p87
        %p396 = pneg %p111
        %p397 = pneg %p108
        %p398 = pneg %p132
        %p399 = pneg %p129
        %p400 = pneg %p153
        %p401 = pneg %p150
        %p402 = pneg %p179
        %p403 = pneg %p176
        %p404 = scmp.lt.s32.totalorder %s17, 1
        %s405 = scalar_select %p404, %s17, 1
        %s406 = smul.addr %s405, 4
        %s407 = smul.addr %s406, 4
        %s408 = scalar_lea.vmem %s6, %s407
        %p409 = scmp.lt.s32.totalorder %s17, 1
        %s410 = scalar_select %p409, %s17, 1
        %s411 = smul.addr %s410, 4
        %s412 = smul.addr %s411, 4
        %s413 = scalar_lea.vmem %s6, %s412
        %v415 = vld [vmem:[%s360] sm:$0xff]
        %v416 = vld [vmem:[%s360 + $0x8] sm:$0xff]
        %v417 = vld [vmem:[%s367] sm:$0xff]
        %v418 = vld [vmem:[%s367 + $0x8] sm:$0xff]
        %v419 = vld [vmem:[%s374] sm:$0xff]
        %v420 = vld [vmem:[%s374 + $0x8] sm:$0xff]
        %v421 = vld [vmem:[%s3] sm:$0xff]
        %v422 = vld [vmem:[%s3 + $0x8] sm:$0xff]
        %v423 = vld [vmem:[%s4] sm:$0xff]
        %v424 = vld [vmem:[%s4 + $0x8] sm:$0xff]
        %v425 = vld [vmem:[%s5] sm:$0x1]
        %v426 = vunpack.c.l.bf16 %v415
        %v427 = vunpack.c.l.bf16 %v416
        %v428 = vunpack.c.l.bf16 %v417
        %v429 = vunpack.c.l.bf16 %v418
        %v430 = vmul.f32 %v426, %v421
        %v431 = vmul.f32 %v427, %v422
        %432 = vrot.lane.b32.xlu0 %v426, 64
        %v433 = vpop.permute.xlu0 %432
        %434 = vrot.lane.b32.xlu0 %v427, 64
        %v435 = vpop.permute.xlu0 %434
        %v436 = vmul.f32 %v433, %v423
        %v437 = vmul.f32 %v435, %v424
        %v438 = vadd.f32 %v430, %v436
        %v439 = vadd.f32 %v431, %v437
        %v440 = vpack.c.bf16 %v439, %v438
        %v441 = vmul.f32 %v428, %v421
        %v442 = vmul.f32 %v429, %v422
        %443 = vrot.lane.b32.xlu0 %v428, 64
        %v444 = vpop.permute.xlu0 %443
        %445 = vrot.lane.b32.xlu0 %v429, 64
        %v446 = vpop.permute.xlu0 %445
        %v447 = vmul.f32 %v444, %v423
        %v448 = vmul.f32 %v446, %v424
        %v449 = vadd.f32 %v441, %v447
        %v450 = vadd.f32 %v442, %v448
        %v451 = vpack.c.bf16 %v450, %v449
        %452 = vmatprep.subr.bf16.mxu0 0
        %453 = vmatpush1.bf16.xpose.msra.mxu0 0
        %454 = vmatprep.subr.bf16.mxu0 0
        %455 = vmatpush1.bf16.xpose.msra.mxu0 0
        %456 = vmatprep.subr.bf16.mxu0 0
        %457 = vmatpush1.bf16.xpose.msra.mxu0 0
        %458 = vmatprep.subr.bf16.mxu0 0
        %459 = vmatpush1.bf16.xpose.msra.mxu0 0
        %460 = vmatprep.subr.bf16.mxu0 0
        %461 = vmatpush1.bf16.xpose.msra.mxu0 0
        %462 = vmatprep.subr.bf16.mxu0 0
        %463 = vmatpush1.bf16.xpose.msra.mxu0 0
        %464 = vmatprep.subr.bf16.mxu0 0
        %465 = vmatpush1.bf16.xpose.msra.mxu0 0
        %466 = vmatprep.subr.bf16.mxu0 0
        %467 = vmatpush1.bf16.xpose.msra.mxu0 %v451
        %468 = vmatprep.subr.bf16.mxu0 0
        %469 = vmatpush2.bf16.xpose.msra.mxu0 0
        %470 = vmatprep.subr.bf16.mxu0 0
        %471 = vmatpush2.bf16.xpose.msra.mxu0 0
        %472 = vmatprep.subr.bf16.mxu0 0
        %473 = vmatpush2.bf16.xpose.msra.mxu0 0
        %474 = vmatprep.subr.bf16.mxu0 0
        %475 = vmatpush2.bf16.xpose.msra.mxu0 0
        %476 = vmatprep.subr.bf16.mxu0 0
        %477 = vmatpush2.bf16.xpose.msra.mxu0 0
        %478 = vmatprep.subr.bf16.mxu0 0
        %479 = vmatpush2.bf16.xpose.msra.mxu0 0
        %480 = vmatprep.subr.bf16.mxu0 0
        %481 = vmatpush2.bf16.xpose.msra.mxu0 0
        %482 = vmatprep.subr.bf16.mxu0 0
        %483 = vmatpush2.bf16.xpose.msra.mxu0 0
        %484 = vmatprep.mubr.bf16.mxu0 0
        %485 = vmatmul.mubr.bf16.gmra.mxu0 %v440
        %v486 = vpop.f32.mrf.mxu0
        %v487 = vadd.f32 0.0, %v486
        %v488 = vpop.f32.mrf.mxu0
        %v489 = vpop.f32.mrf.mxu0
        %v490 = vadd.f32 0.0, %v489
        %v491 = vpop.f32.mrf.mxu0
        %492 = vdwg.mxu0
        %v493 = vmul.f32 %v487, 0.088388346
        %v494 = vmul.f32 %v490, 0.088388346
        %v496 = vlaneseq
        %v497 = vshrl.u32 %v496, 7
        %v498 = vsub.s32 0, %v497
        %v499 = vrot.slane %v425, %v498
        %v501 = vadd.f32 %v493, %v499
        %v502 = vadd.f32 %v494, %v499
        %vm503 = vcmask 130048
        %v504 = vsel %vm503, %v501, -inf
        %505 = vmax.xlane.f32.xlu0 %v504
        %v506 = vpop.xlane.xlu0 %505
        %v507 = vsel %vm503, %v502, -inf
        %508 = vmax.xlane.f32.xlu0 %v507
        %v509 = vpop.xlane.xlu0 %508
        %v510 = vsub.f32 %v501, %v506
        %v511 = vsub.f32 %v502, %v509
        %v512 = vmul.f32 %v510, 1.442695
        %v513 = vpow.pop %v512
        %v514 = vmul.f32 %v511, 1.442695
        %v515 = vpow.pop %v514
        %v516 = vsel %vm503, %v513, 0.0
        %517 = vadd.xlane.f32.xlu0 %v516
        %v518 = vpop.xlane.xlu0 %517
        %v519 = vsel %vm503, %v515, 0.0
        %520 = vadd.xlane.f32.xlu0 %v519
        %v521 = vpop.xlane.xlu0 %520
        %v522 = vrcp.pop %v518
        %v523 = vrcp.pop %v521
        %v524 = vmul.f32 %v513, %v522
        %v525 = vmul.f32 %v515, %v523
        %v526 = vpack.c.bf16 %v525, %v524
        %v529 = vunpack.c.l.b16 %v419
        %v530 = vunpack.c.l.b16 %v420
        %v531 = vpack.c.b16 %v530, %v529
        %v534 = vsel %vm503, %v526, 0
        %536 = vmatprep.subr.bf16.mxu0 0
        %537 = vmatpush1.bf16.msra.mxu0 0
        %538 = vmatprep.subr.bf16.mxu0 0
        %539 = vmatpush1.bf16.msra.mxu0 0
        %540 = vmatprep.subr.bf16.mxu0 0
        %541 = vmatpush1.bf16.msra.mxu0 0
        %542 = vmatprep.subr.bf16.mxu0 0
        %543 = vmatpush1.bf16.msra.mxu0 0
        %544 = vmatprep.subr.bf16.mxu0 0
        %545 = vmatpush1.bf16.msra.mxu0 0
        %546 = vmatprep.subr.bf16.mxu0 0
        %547 = vmatpush1.bf16.msra.mxu0 0
        %548 = vmatprep.subr.bf16.mxu0 0
        %549 = vmatpush1.bf16.msra.mxu0 0
        %550 = vmatprep.subr.bf16.mxu0 0
        %551 = vmatpush1.bf16.msra.mxu0 %v531
        %552 = vmatprep.subr.bf16.mxu0 0
        %553 = vmatpush2.bf16.msra.mxu0 0
        %554 = vmatprep.subr.bf16.mxu0 0
        %555 = vmatpush2.bf16.msra.mxu0 0
        %556 = vmatprep.subr.bf16.mxu0 0
        %557 = vmatpush2.bf16.msra.mxu0 0
        %558 = vmatprep.subr.bf16.mxu0 0
        %559 = vmatpush2.bf16.msra.mxu0 0
        %560 = vmatprep.subr.bf16.mxu0 0
        %561 = vmatpush2.bf16.msra.mxu0 0
        %562 = vmatprep.subr.bf16.mxu0 0
        %563 = vmatpush2.bf16.msra.mxu0 0
        %564 = vmatprep.subr.bf16.mxu0 0
        %565 = vmatpush2.bf16.msra.mxu0 0
        %566 = vmatprep.subr.bf16.mxu0 0
        %567 = vmatpush2.bf16.msra.mxu0 0
        %568 = vmatprep.mubr.bf16.mxu0 0
        %569 = vmatmul.mubr.bf16.gmra.mxu0 %v534
        %v570 = vpop.f32.mrf.mxu0
        %v571 = vadd.f32 0.0, %v570
        %v572 = vpop.f32.mrf.mxu0
        %v573 = vpop.f32.mrf.mxu0
        %v574 = vadd.f32 0.0, %v573
        %v575 = vpop.f32.mrf.mxu0
        %576 = vdwg.mxu0
        %v579 = vrot.slane %v415, 4
        %v580 = vrot.slane %v416, 4
        %v583 = vunpack.c.l.bf16 %v579
        %v584 = vunpack.c.l.bf16 %v580
        %v587 = vrot.slane %v417, 4
        %v588 = vrot.slane %v418, 4
        %v591 = vunpack.c.l.bf16 %v587
        %v592 = vunpack.c.l.bf16 %v588
        %v593 = vmul.f32 %v583, %v421
        %v594 = vmul.f32 %v584, %v422
        %595 = vrot.lane.b32.xlu0 %v583, 64
        %v596 = vpop.permute.xlu0 %595
        %597 = vrot.lane.b32.xlu0 %v584, 64
        %v598 = vpop.permute.xlu0 %597
        %v599 = vmul.f32 %v596, %v423
        %v600 = vmul.f32 %v598, %v424
        %v601 = vadd.f32 %v593, %v599
        %v602 = vadd.f32 %v594, %v600
        %v603 = vpack.c.bf16 %v602, %v601
        %v604 = vmul.f32 %v591, %v421
        %v605 = vmul.f32 %v592, %v422
        %606 = vrot.lane.b32.xlu0 %v591, 64
        %v607 = vpop.permute.xlu0 %606
        %608 = vrot.lane.b32.xlu0 %v592, 64
        %v609 = vpop.permute.xlu0 %608
        %v610 = vmul.f32 %v607, %v423
        %v611 = vmul.f32 %v609, %v424
        %v612 = vadd.f32 %v604, %v610
        %v613 = vadd.f32 %v605, %v611
        %v614 = vpack.c.bf16 %v613, %v612
        %615 = vmatprep.subr.bf16.mxu0 0
        %616 = vmatpush1.bf16.xpose.msra.mxu0 0
        %617 = vmatprep.subr.bf16.mxu0 0
        %618 = vmatpush1.bf16.xpose.msra.mxu0 0
        %619 = vmatprep.subr.bf16.mxu0 0
        %620 = vmatpush1.bf16.xpose.msra.mxu0 0
        %621 = vmatprep.subr.bf16.mxu0 0
        %622 = vmatpush1.bf16.xpose.msra.mxu0 0
        %623 = vmatprep.subr.bf16.mxu0 0
        %624 = vmatpush1.bf16.xpose.msra.mxu0 0
        %625 = vmatprep.subr.bf16.mxu0 0
        %626 = vmatpush1.bf16.xpose.msra.mxu0 0
        %627 = vmatprep.subr.bf16.mxu0 0
        %628 = vmatpush1.bf16.xpose.msra.mxu0 0
        %629 = vmatprep.subr.bf16.mxu0 0
        %630 = vmatpush1.bf16.xpose.msra.mxu0 %v614
        %631 = vmatprep.subr.bf16.mxu0 0
        %632 = vmatpush2.bf16.xpose.msra.mxu0 0
        %633 = vmatprep.subr.bf16.mxu0 0
        %634 = vmatpush2.bf16.xpose.msra.mxu0 0
        %635 = vmatprep.subr.bf16.mxu0 0
        %636 = vmatpush2.bf16.xpose.msra.mxu0 0
        %637 = vmatprep.subr.bf16.mxu0 0
        %638 = vmatpush2.bf16.xpose.msra.mxu0 0
        %639 = vmatprep.subr.bf16.mxu0 0
        %640 = vmatpush2.bf16.xpose.msra.mxu0 0
        %641 = vmatprep.subr.bf16.mxu0 0
        %642 = vmatpush2.bf16.xpose.msra.mxu0 0
        %643 = vmatprep.subr.bf16.mxu0 0
        %644 = vmatpush2.bf16.xpose.msra.mxu0 0
        %645 = vmatprep.subr.bf16.mxu0 0
        %646 = vmatpush2.bf16.xpose.msra.mxu0 0
        %647 = vmatprep.mubr.bf16.mxu0 0
        %648 = vmatmul.mubr.bf16.gmra.mxu0 %v603
        %v649 = vpop.f32.mrf.mxu0
        %v650 = vadd.f32 0.0, %v649
        %v651 = vpop.f32.mrf.mxu0
        %v652 = vpop.f32.mrf.mxu0
        %v653 = vadd.f32 0.0, %v652
        %v654 = vpop.f32.mrf.mxu0
        %655 = vdwg.mxu0
        %v656 = vmul.f32 %v650, 0.088388346
        %v657 = vmul.f32 %v653, 0.088388346
        %v658 = vadd.f32 %v656, %v499
        %v659 = vadd.f32 %v657, %v499
        %v660 = vsel %vm503, %v658, -inf
        %661 = vmax.xlane.f32.xlu0 %v660
        %v662 = vpop.xlane.xlu0 %661
        %v663 = vsel %vm503, %v659, -inf
        %664 = vmax.xlane.f32.xlu0 %v663
        %v665 = vpop.xlane.xlu0 %664
        %v666 = vsub.f32 %v658, %v662
        %v667 = vsub.f32 %v659, %v665
        %v668 = vmul.f32 %v666, 1.442695
        %v669 = vpow.pop %v668
        %v670 = vmul.f32 %v667, 1.442695
        %v671 = vpow.pop %v670
        %v672 = vsel %vm503, %v669, 0.0
        %673 = vadd.xlane.f32.xlu0 %v672
        %v674 = vpop.xlane.xlu0 %673
        %v675 = vsel %vm503, %v671, 0.0
        %676 = vadd.xlane.f32.xlu0 %v675
        %v677 = vpop.xlane.xlu0 %676
        %v678 = vrcp.pop %v674
        %v679 = vrcp.pop %v677
        %v680 = vmul.f32 %v669, %v678
        %v681 = vmul.f32 %v671, %v679
        %v682 = vpack.c.bf16 %v681, %v680
        %v683 = vunpack.c.h.b16 %v419
        %v684 = vunpack.c.h.b16 %v420
        %v685 = vpack.c.b16 %v684, %v683
        %v688 = vsel %vm503, %v682, 0
        %690 = vmatprep.subr.bf16.mxu0 0
        %691 = vmatpush1.bf16.msra.mxu0 0
        %692 = vmatprep.subr.bf16.mxu0 0
        %693 = vmatpush1.bf16.msra.mxu0 0
        %694 = vmatprep.subr.bf16.mxu0 0
        %695 = vmatpush1.bf16.msra.mxu0 0
        %696 = vmatprep.subr.bf16.mxu0 0
        %697 = vmatpush1.bf16.msra.mxu0 0
        %698 = vmatprep.subr.bf16.mxu0 0
        %699 = vmatpush1.bf16.msra.mxu0 0
        %700 = vmatprep.subr.bf16.mxu0 0
        %701 = vmatpush1.bf16.msra.mxu0 0
        %702 = vmatprep.subr.bf16.mxu0 0
        %703 = vmatpush1.bf16.msra.mxu0 0
        %704 = vmatprep.subr.bf16.mxu0 0
        %705 = vmatpush1.bf16.msra.mxu0 %v685
        %706 = vmatprep.subr.bf16.mxu0 0
        %707 = vmatpush2.bf16.msra.mxu0 0
        %708 = vmatprep.subr.bf16.mxu0 0
        %709 = vmatpush2.bf16.msra.mxu0 0
        %710 = vmatprep.subr.bf16.mxu0 0
        %711 = vmatpush2.bf16.msra.mxu0 0
        %712 = vmatprep.subr.bf16.mxu0 0
        %713 = vmatpush2.bf16.msra.mxu0 0
        %714 = vmatprep.subr.bf16.mxu0 0
        %715 = vmatpush2.bf16.msra.mxu0 0
        %716 = vmatprep.subr.bf16.mxu0 0
        %717 = vmatpush2.bf16.msra.mxu0 0
        %718 = vmatprep.subr.bf16.mxu0 0
        %719 = vmatpush2.bf16.msra.mxu0 0
        %720 = vmatprep.subr.bf16.mxu0 0
        %721 = vmatpush2.bf16.msra.mxu0 0
        %722 = vmatprep.mubr.bf16.mxu0 0
        %723 = vmatmul.mubr.bf16.gmra.mxu0 %v688
        %v724 = vpop.f32.mrf.mxu0
        %v725 = vadd.f32 0.0, %v724
        %v726 = vpop.f32.mrf.mxu0
        %v727 = vpop.f32.mrf.mxu0
        %v728 = vadd.f32 0.0, %v727
        %v729 = vpop.f32.mrf.mxu0
        %730 = vdwg.mxu0
        %v731 = vpack.c.bf16 %v574, %v571
        %v732 = vpack.c.bf16 %v728, %v725
        %v735 = vunpack.c.l.b16 %v731
        %v736 = vunpack.c.l.b16 %v732
        %v737 = vunpack.c.h.b16 %v731
        %v738 = vunpack.c.h.b16 %v732
        %v739 = vpack.c.b16 %v736, %v735
        %v740 = vpack.c.b16 %v738, %v737
        %743 = vst [vmem:[%s413] sm:$0xff] %v739
        %744 = vst [vmem:[%s413 + $0x8] sm:$0xff] %v740
        %p745 = scmp.lt.s32.totalorder %s17, 1
        %s746 = scalar_select %p745, %s17, 1
        %s747 = smul.addr %s746, 4
        %s748 = smul.addr %s747, 4
        %s749 = scalar_lea.vmem %s6, %s748
        // Predicated region
        $region159: #{vit_mim_forward.12} parent=145 // pred_check
          %p750 = pneg %p176
        $region160: #{vit_mim_forward.12} parent=145 // pred_check_branch
          %752 = sbr.rel (%p750) target = $region162
        $region161: #{vit_mim_forward.12} parent=145 // pred_region
          _
        $region162: #{vit_mim_forward.12} parent=145 // pred_fallthru
          _
      $region146: #{vit_mim_forward.12} parent=5 // pred_fallthru
        _
      %p753 = scmp.le.s32.totalorder 2, %s12
      // Predicated region
      $region163: #{vit_mim_forward.12} parent=5 // pred_check
        %p754 = pneg %p753
      $region164: #{vit_mim_forward.12} parent=5 // pred_check_branch
        %756 = sbr.rel (%p754) target = $region166
      $region165: #{vit_mim_forward.12} parent=5 // pred_region
        %s757 = ssub.s32 %s12, 2
        // Predicated region
        $region167: #{vit_mim_forward.12} parent=165 // pred_check
          %p758 = pneg %p182
        $region168: #{vit_mim_forward.12} parent=165 // pred_check_branch
          %760 = sbr.rel (%p758) target = $region170
        $region169: #{vit_mim_forward.12} parent=165 // pred_region
          %p761 = scmp.lt.s32.totalorder %s18, 1
          %s762 = scalar_select %p761, %s18, 1
          %s763 = smul.addr %s762, 4
          %s764 = smul.addr %s763, 4
          %s765 = scalar_lea.vmem %s6, %s764
        $region170: #{vit_mim_forward.12} parent=165 // pred_fallthru
          _
      $region166: #{vit_mim_forward.12} parent=5 // pred_fallthru
        _
    $region6: #{vit_mim_forward.12} parent=1 // loop_footer
      %s16 = sadd.s32 1, %s12
    $region7: #{vit_mim_forward.12} parent=1 // loop_footer_branch
      %11 = sbr.rel target = $region3
    $region8: #{vit_mim_forward.12} parent=1 // loop_exit
      _

// kernel: vit_mim_forward.11
$region0: #{vit_mim_forward.11}
  #allocation0 [shape = 'u32[]', space=smem, size = 0x4, offset = 0x4, fixed_abs, tag = 'smem constant byte address 0x4 - core index']
  #allocation1 [shape = 'u32[144,128]{1,0:T(1,128)}', space=vmem, size = 0x12000, scoped, tag = 'internal scratch']
  %s0 = inlined_call_operand.vmem [shape: bf16[32,256], index: 0, kind: input, shape index: {}]
  %s1 = inlined_call_operand.vmem [shape: f32[1,256], index: 1, kind: input, shape index: {}]
  %s2 = inlined_call_operand.vmem [shape: bf16[256,768], index: 2, kind: input, shape index: {}]
  %s3 = inlined_call_operand.vmem [shape: bf16[32,768], index: 3, kind: output, shape index: {}]
  %s4 = sld [smem:[#allocation0]]
  $region22: #{vit_mim_forward.11} parent=0
    _
  %s6 = ssub.s32 1, %s4
  %s7 = scalar_select 0, %s6, %s4
  // Predicated region
  $region2: #{vit_mim_forward.11} parent=0 // pred_check
    _
  $region3: #{vit_mim_forward.11} parent=0 // pred_check_branch
    %9 = sbr.rel (0) target = $region5
  $region4: #{vit_mim_forward.11} parent=0 // pred_region
    _
  $region5: #{vit_mim_forward.11} parent=0 // pred_fallthru
    _
  // Predicated region
  $region6: #{vit_mim_forward.11} parent=0 // pred_check
    _
  $region7: #{vit_mim_forward.11} parent=0 // pred_check_branch
    %11 = sbr.rel (0) target = $region9
  $region8: #{vit_mim_forward.11} parent=0 // pred_region
    _
  $region9: #{vit_mim_forward.11} parent=0 // pred_fallthru
    _
  // Predicated region
  $region10: #{vit_mim_forward.11} parent=0 // pred_check
    _
  $region11: #{vit_mim_forward.11} parent=0 // pred_check_branch
    %13 = sbr.rel (0) target = $region13
  $region12: #{vit_mim_forward.11} parent=0 // pred_region
    _
  $region13: #{vit_mim_forward.11} parent=0 // pred_fallthru
    _
  %v14 = vld [vmem:[%s0] sm:$0xff]
  %v15 = vld [vmem:[%s0 + $0x8] sm:$0xff]
  %v16 = vld [vmem:[%s0 + $0x10] sm:$0xff]
  %v17 = vld [vmem:[%s0 + $0x18] sm:$0xff]
  %v18 = vunpack.c.l.bf16 %v14
  %v19 = vunpack.c.h.bf16 %v14
  %v20 = vunpack.c.l.bf16 %v15
  %v21 = vunpack.c.h.bf16 %v15
  %v22 = vunpack.c.l.bf16 %v16
  %v23 = vunpack.c.h.bf16 %v16
  %v24 = vunpack.c.l.bf16 %v17
  %v25 = vunpack.c.h.bf16 %v17
  %v26 = vmul.f32 %v18, %v18
  %v27 = vmul.f32 %v19, %v19
  %v28 = vmul.f32 %v20, %v20
  %v29 = vmul.f32 %v21, %v21
  %v30 = vmul.f32 %v22, %v22
  %v31 = vmul.f32 %v23, %v23
  %v32 = vmul.f32 %v24, %v24
  %v33 = vmul.f32 %v25, %v25
  %v34 = vadd.f32 %v26, %v27
  %35 = vadd.xlane.f32.xlu0 %v34
  %v36 = vpop.xlane.xlu0 %35
  %v37 = vadd.f32 %v28, %v29
  %38 = vadd.xlane.f32.xlu0 %v37
  %v39 = vpop.xlane.xlu0 %38
  %v40 = vadd.f32 %v30, %v31
  %41 = vadd.xlane.f32.xlu0 %v40
  %v42 = vpop.xlane.xlu0 %41
  %v43 = vadd.f32 %v32, %v33
  %44 = vadd.xlane.f32.xlu0 %v43
  %v45 = vpop.xlane.xlu0 %44
  %v46 = vrcp.pop 256.0
  %v47 = vmul.f32 %v36, %v46
  %v48 = vmul.f32 %v39, %v46
  %v49 = vmul.f32 %v42, %v46
  %v50 = vmul.f32 %v45, %v46
  %v51 = vadd.f32 %v47, 1e-06
  %v52 = vadd.f32 %v48, 1e-06
  %v53 = vadd.f32 %v49, 1e-06
  %v54 = vadd.f32 %v50, 1e-06
  %v55 = vrsqrt.pop %v51
  %v56 = vrsqrt.pop %v52
  %v57 = vrsqrt.pop %v53
  %v58 = vrsqrt.pop %v54
  %v59 = vmul.f32 %v18, %v55
  %v60 = vmul.f32 %v19, %v55
  %v61 = vmul.f32 %v20, %v56
  %v62 = vmul.f32 %v21, %v56
  %v63 = vmul.f32 %v22, %v57
  %v64 = vmul.f32 %v23, %v57
  %v65 = vmul.f32 %v24, %v58
  %v66 = vmul.f32 %v25, %v58
  %v67 = vld [vmem:[%s1] sm:$0x3]
  %v69 = vlaneseq
  %v70 = vshrl.u32 %v69, 7
  %v71 = vsub.s32 0, %v70
  %v72 = vrot.slane %v67, %v71
  %v73 = vlaneseq
  %v74 = vshrl.u32 %v73, 7
  %v75 = vsub.s32 1, %v74
  %v76 = vrot.slane %v67, %v75
  %v79 = vmul.f32 %v59, %v72
  %v80 = vmul.f32 %v60, %v76
  %v81 = vmul.f32 %v61, %v72
  %v82 = vmul.f32 %v62, %v76
  %v83 = vmul.f32 %v63, %v72
  %v84 = vmul.f32 %v64, %v76
  %v85 = vmul.f32 %v65, %v72
  %v86 = vmul.f32 %v66, %v76
  %v87 = vpack.c.bf16 %v81, %v79
  %v88 = vpack.c.bf16 %v82, %v80
  %v89 = vpack.c.bf16 %v85, %v83
  %v90 = vpack.c.bf16 %v86, %v84
  %v91 = vld [vmem:[%s2] sm:$0xff]
  %v92 = vld [vmem:[%s2 + $0x8] sm:$0xff]
  %v93 = vld [vmem:[%s2 + $0x10] sm:$0xff]
  %v94 = vld [vmem:[%s2 + $0x18] sm:$0xff]
  %v95 = vld [vmem:[%s2 + $0x20] sm:$0xff]
  %v96 = vld [vmem:[%s2 + $0x28] sm:$0xff]
  %v97 = vld [vmem:[%s2 + $0x30] sm:$0xff]
  %v98 = vld [vmem:[%s2 + $0x38] sm:$0xff]
  %v99 = vld [vmem:[%s2 + $0x40] sm:$0xff]
  %v100 = vld [vmem:[%s2 + $0x48] sm:$0xff]
  %v101 = vld [vmem:[%s2 + $0x50] sm:$0xff]
  %v102 = vld [vmem:[%s2 + $0x58] sm:$0xff]
  %v103 = vld [vmem:[%s2 + $0x60] sm:$0xff]
  %v104 = vld [vmem:[%s2 + $0x68] sm:$0xff]
  %v105 = vld [vmem:[%s2 + $0x70] sm:$0xff]
  %v106 = vld [vmem:[%s2 + $0x78] sm:$0xff]
  %v107 = vld [vmem:[%s2 + $0x80] sm:$0xff]
  %v108 = vld [vmem:[%s2 + $0x88] sm:$0xff]
  %v109 = vld [vmem:[%s2 + $0x90] sm:$0xff]
  %v110 = vld [vmem:[%s2 + $0x98] sm:$0xff]
  %v111 = vld [vmem:[%s2 + $0xa0] sm:$0xff]
  %v112 = vld [vmem:[%s2 + $0xa8] sm:$0xff]
  %v113 = vld [vmem:[%s2 + $0xb0] sm:$0xff]
  %v114 = vld [vmem:[%s2 + $0xb8] sm:$0xff]
  %v115 = vld [vmem:[%s2 + $0xc0] sm:$0xff]
  %v116 = vld [vmem:[%s2 + $0xc8] sm:$0xff]
  %v117 = vld [vmem:[%s2 + $0xd0] sm:$0xff]
  %v118 = vld [vmem:[%s2 + $0xd8] sm:$0xff]
  %v119 = vld [vmem:[%s2 + $0xe0] sm:$0xff]
  %v120 = vld [vmem:[%s2 + $0xe8] sm:$0xff]
  %v121 = vld [vmem:[%s2 + $0xf0] sm:$0xff]
  %v122 = vld [vmem:[%s2 + $0xf8] sm:$0xff]
  %v123 = vld [vmem:[%s2 + $0x100] sm:$0xff]
  %v124 = vld [vmem:[%s2 + $0x108] sm:$0xff]
  %v125 = vld [vmem:[%s2 + $0x110] sm:$0xff]
  %v126 = vld [vmem:[%s2 + $0x118] sm:$0xff]
  %v127 = vld [vmem:[%s2 + $0x120] sm:$0xff]
  %v128 = vld [vmem:[%s2 + $0x128] sm:$0xff]
  %v129 = vld [vmem:[%s2 + $0x130] sm:$0xff]
  %v130 = vld [vmem:[%s2 + $0x138] sm:$0xff]
  %v131 = vld [vmem:[%s2 + $0x140] sm:$0xff]
  %v132 = vld [vmem:[%s2 + $0x148] sm:$0xff]
  %v133 = vld [vmem:[%s2 + $0x150] sm:$0xff]
  %v134 = vld [vmem:[%s2 + $0x158] sm:$0xff]
  %v135 = vld [vmem:[%s2 + $0x160] sm:$0xff]
  %v136 = vld [vmem:[%s2 + $0x168] sm:$0xff]
  %v137 = vld [vmem:[%s2 + $0x170] sm:$0xff]
  %v138 = vld [vmem:[%s2 + $0x178] sm:$0xff]
  %v139 = vld [vmem:[%s2 + $0x180] sm:$0xff]
  %v140 = vld [vmem:[%s2 + $0x188] sm:$0xff]
  %v141 = vld [vmem:[%s2 + $0x190] sm:$0xff]
  %v142 = vld [vmem:[%s2 + $0x198] sm:$0xff]
  %v143 = vld [vmem:[%s2 + $0x1a0] sm:$0xff]
  %v144 = vld [vmem:[%s2 + $0x1a8] sm:$0xff]
  %v145 = vld [vmem:[%s2 + $0x1b0] sm:$0xff]
  %v146 = vld [vmem:[%s2 + $0x1b8] sm:$0xff]
  %v147 = vld [vmem:[%s2 + $0x1c0] sm:$0xff]
  %v148 = vld [vmem:[%s2 + $0x1c8] sm:$0xff]
  %v149 = vld [vmem:[%s2 + $0x1d0] sm:$0xff]
  %v150 = vld [vmem:[%s2 + $0x1d8] sm:$0xff]
  %v151 = vld [vmem:[%s2 + $0x1e0] sm:$0xff]
  %v152 = vld [vmem:[%s2 + $0x1e8] sm:$0xff]
  %v153 = vld [vmem:[%s2 + $0x1f0] sm:$0xff]
  %v154 = vld [vmem:[%s2 + $0x1f8] sm:$0xff]
  %v155 = vld [vmem:[%s2 + $0x200] sm:$0xff]
  %v156 = vld [vmem:[%s2 + $0x208] sm:$0xff]
  %v157 = vld [vmem:[%s2 + $0x210] sm:$0xff]
  %v158 = vld [vmem:[%s2 + $0x218] sm:$0xff]
  %v159 = vld [vmem:[%s2 + $0x220] sm:$0xff]
  %v160 = vld [vmem:[%s2 + $0x228] sm:$0xff]
  %v161 = vld [vmem:[%s2 + $0x230] sm:$0xff]
  %v162 = vld [vmem:[%s2 + $0x238] sm:$0xff]
  %v163 = vld [vmem:[%s2 + $0x240] sm:$0xff]
  %v164 = vld [vmem:[%s2 + $0x248] sm:$0xff]
  %v165 = vld [vmem:[%s2 + $0x250] sm:$0xff]
  %v166 = vld [vmem:[%s2 + $0x258] sm:$0xff]
  %v167 = vld [vmem:[%s2 + $0x260] sm:$0xff]
  %v168 = vld [vmem:[%s2 + $0x268] sm:$0xff]
  %v169 = vld [vmem:[%s2 + $0x270] sm:$0xff]
  %v170 = vld [vmem:[%s2 + $0x278] sm:$0xff]
  %v171 = vld [vmem:[%s2 + $0x280] sm:$0xff]
  %v172 = vld [vmem:[%s2 + $0x288] sm:$0xff]
  %v173 = vld [vmem:[%s2 + $0x290] sm:$0xff]
  %v174 = vld [vmem:[%s2 + $0x298] sm:$0xff]
  %v175 = vld [vmem:[%s2 + $0x2a0] sm:$0xff]
  %v176 = vld [vmem:[%s2 + $0x2a8] sm:$0xff]
  %v177 = vld [vmem:[%s2 + $0x2b0] sm:$0xff]
  %v178 = vld [vmem:[%s2 + $0x2b8] sm:$0xff]
  %v179 = vld [vmem:[%s2 + $0x2c0] sm:$0xff]
  %v180 = vld [vmem:[%s2 + $0x2c8] sm:$0xff]
  %v181 = vld [vmem:[%s2 + $0x2d0] sm:$0xff]
  %v182 = vld [vmem:[%s2 + $0x2d8] sm:$0xff]
  %v183 = vld [vmem:[%s2 + $0x2e0] sm:$0xff]
  %v184 = vld [vmem:[%s2 + $0x2e8] sm:$0xff]
  %v185 = vld [vmem:[%s2 + $0x2f0] sm:$0xff]
  %v186 = vld [vmem:[%s2 + $0x2f8] sm:$0xff]
  %v283 = vunpack.c.l.b16 %v91
  %v284 = vunpack.c.h.b16 %v91
  %v285 = vunpack.c.l.b16 %v92
  %v286 = vunpack.c.h.b16 %v92
  %v287 = vunpack.c.l.b16 %v93
  %v288 = vunpack.c.h.b16 %v93
  %v289 = vunpack.c.l.b16 %v94
  %v290 = vunpack.c.h.b16 %v94
  %v291 = vunpack.c.l.b16 %v95
  %v292 = vunpack.c.h.b16 %v95
  %v293 = vunpack.c.l.b16 %v96
  %v294 = vunpack.c.h.b16 %v96
  %v295 = vunpack.c.l.b16 %v97
  %v296 = vunpack.c.h.b16 %v97
  %v297 = vunpack.c.l.b16 %v98
  %v298 = vunpack.c.h.b16 %v98
  %v299 = vunpack.c.l.b16 %v99
  %v300 = vunpack.c.h.b16 %v99
  %v301 = vunpack.c.l.b16 %v100
  %v302 = vunpack.c.h.b16 %v100
  %v303 = vunpack.c.l.b16 %v101
  %v304 = vunpack.c.h.b16 %v101
  %v305 = vunpack.c.l.b16 %v102
  %v306 = vunpack.c.h.b16 %v102
  %v307 = vunpack.c.l.b16 %v103
  %v308 = vunpack.c.h.b16 %v103
  %v309 = vunpack.c.l.b16 %v104
  %v310 = vunpack.c.h.b16 %v104
  %v311 = vunpack.c.l.b16 %v105
  %v312 = vunpack.c.h.b16 %v105
  %v313 = vunpack.c.l.b16 %v106
  %v314 = vunpack.c.h.b16 %v106
  %v315 = vunpack.c.l.b16 %v107
  %v316 = vunpack.c.h.b16 %v107
  %v317 = vunpack.c.l.b16 %v108
  %v318 = vunpack.c.h.b16 %v108
  %v319 = vunpack.c.l.b16 %v109
  %v320 = vunpack.c.h.b16 %v109
  %v321 = vunpack.c.l.b16 %v110
  %v322 = vunpack.c.h.b16 %v110
  %v323 = vunpack.c.l.b16 %v111
  %v324 = vunpack.c.h.b16 %v111
  %v325 = vunpack.c.l.b16 %v112
  %v326 = vunpack.c.h.b16 %v112
  %v327 = vunpack.c.l.b16 %v113
  %v328 = vunpack.c.h.b16 %v113
  %v329 = vunpack.c.l.b16 %v114
  %v330 = vunpack.c.h.b16 %v114
  %v331 = vunpack.c.l.b16 %v115
  %v332 = vunpack.c.h.b16 %v115
  %v333 = vunpack.c.l.b16 %v116
  %v334 = vunpack.c.h.b16 %v116
  %v335 = vunpack.c.l.b16 %v117
  %v336 = vunpack.c.h.b16 %v117
  %v337 = vunpack.c.l.b16 %v118
  %v338 = vunpack.c.h.b16 %v118
  %v339 = vunpack.c.l.b16 %v119
  %v340 = vunpack.c.h.b16 %v119
  %v341 = vunpack.c.l.b16 %v120
  %v342 = vunpack.c.h.b16 %v120
  %v343 = vunpack.c.l.b16 %v121
  %v344 = vunpack.c.h.b16 %v121
  %v345 = vunpack.c.l.b16 %v122
  %v346 = vunpack.c.h.b16 %v122
  %v347 = vunpack.c.l.b16 %v123
  %v348 = vunpack.c.h.b16 %v123
  %v349 = vunpack.c.l.b16 %v124
  %v350 = vunpack.c.h.b16 %v124
  %v351 = vunpack.c.l.b16 %v125
  %v352 = vunpack.c.h.b16 %v125
  %v353 = vunpack.c.l.b16 %v126
  %v354 = vunpack.c.h.b16 %v126
  %v355 = vunpack.c.l.b16 %v127
  %v356 = vunpack.c.h.b16 %v127
  %v357 = vunpack.c.l.b16 %v128
  %v358 = vunpack.c.h.b16 %v128
  %v359 = vunpack.c.l.b16 %v129
  %v360 = vunpack.c.h.b16 %v129
  %v361 = vunpack.c.l.b16 %v130
  %v362 = vunpack.c.h.b16 %v130
  %v363 = vunpack.c.l.b16 %v131
  %v364 = vunpack.c.h.b16 %v131
  %v365 = vunpack.c.l.b16 %v132
  %v366 = vunpack.c.h.b16 %v132
  %v367 = vunpack.c.l.b16 %v133
  %v368 = vunpack.c.h.b16 %v133
  %v369 = vunpack.c.l.b16 %v134
  %v370 = vunpack.c.h.b16 %v134
  %v371 = vunpack.c.l.b16 %v135
  %v372 = vunpack.c.h.b16 %v135
  %v373 = vunpack.c.l.b16 %v136
  %v374 = vunpack.c.h.b16 %v136
  %v375 = vunpack.c.l.b16 %v137
  %v376 = vunpack.c.h.b16 %v137
  %v377 = vunpack.c.l.b16 %v138
  %v378 = vunpack.c.h.b16 %v138
  %v379 = vunpack.c.l.b16 %v139
  %v380 = vunpack.c.h.b16 %v139
  %v381 = vunpack.c.l.b16 %v140
  %v382 = vunpack.c.h.b16 %v140
  %v383 = vunpack.c.l.b16 %v141
  %v384 = vunpack.c.h.b16 %v141
  %v385 = vunpack.c.l.b16 %v142
  %v386 = vunpack.c.h.b16 %v142
  %v387 = vunpack.c.l.b16 %v143
  %v388 = vunpack.c.h.b16 %v143
  %v389 = vunpack.c.l.b16 %v144
  %v390 = vunpack.c.h.b16 %v144
  %v391 = vunpack.c.l.b16 %v145
  %v392 = vunpack.c.h.b16 %v145
  %v393 = vunpack.c.l.b16 %v146
  %v394 = vunpack.c.h.b16 %v146
  %v395 = vunpack.c.l.b16 %v147
  %v396 = vunpack.c.h.b16 %v147
  %v397 = vunpack.c.l.b16 %v148
  %v398 = vunpack.c.h.b16 %v148
  %v399 = vunpack.c.l.b16 %v149
  %v400 = vunpack.c.h.b16 %v149
  %v401 = vunpack.c.l.b16 %v150
  %v402 = vunpack.c.h.b16 %v150
  %v403 = vunpack.c.l.b16 %v151
  %v404 = vunpack.c.h.b16 %v151
  %v405 = vunpack.c.l.b16 %v152
  %v406 = vunpack.c.h.b16 %v152
  %v407 = vunpack.c.l.b16 %v153
  %v408 = vunpack.c.h.b16 %v153
  %v409 = vunpack.c.l.b16 %v154
  %v410 = vunpack.c.h.b16 %v154
  %v411 = vunpack.c.l.b16 %v155
  %v412 = vunpack.c.h.b16 %v155
  %v413 = vunpack.c.l.b16 %v156
  %v414 = vunpack.c.h.b16 %v156
  %v415 = vunpack.c.l.b16 %v157
  %v416 = vunpack.c.h.b16 %v157
  %v417 = vunpack.c.l.b16 %v158
  %v418 = vunpack.c.h.b16 %v158
  %v419 = vunpack.c.l.b16 %v159
  %v420 = vunpack.c.h.b16 %v159
  %v421 = vunpack.c.l.b16 %v160
  %v422 = vunpack.c.h.b16 %v160
  %v423 = vunpack.c.l.b16 %v161
  %v424 = vunpack.c.h.b16 %v161
  %v425 = vunpack.c.l.b16 %v162
  %v426 = vunpack.c.h.b16 %v162
  %v427 = vunpack.c.l.b16 %v163
  %v428 = vunpack.c.h.b16 %v163
  %v429 = vunpack.c.l.b16 %v164
  %v430 = vunpack.c.h.b16 %v164
  %v431 = vunpack.c.l.b16 %v165
  %v432 = vunpack.c.h.b16 %v165
  %v433 = vunpack.c.l.b16 %v166
  %v434 = vunpack.c.h.b16 %v166
  %v435 = vunpack.c.l.b16 %v167
  %v436 = vunpack.c.h.b16 %v167
  %v437 = vunpack.c.l.b16 %v168
  %v438 = vunpack.c.h.b16 %v168
  %v439 = vunpack.c.l.b16 %v169
  %v440 = vunpack.c.h.b16 %v169
  %v441 = vunpack.c.l.b16 %v170
  %v442 = vunpack.c.h.b16 %v170
  %v443 = vunpack.c.l.b16 %v171
  %v444 = vunpack.c.h.b16 %v171
  %v445 = vunpack.c.l.b16 %v172
  %v446 = vunpack.c.h.b16 %v172
  %v447 = vunpack.c.l.b16 %v173
  %v448 = vunpack.c.h.b16 %v173
  %v449 = vunpack.c.l.b16 %v174
  %v450 = vunpack.c.h.b16 %v174
  %v451 = vunpack.c.l.b16 %v175
  %v452 = vunpack.c.h.b16 %v175
  %v453 = vunpack.c.l.b16 %v176
  %v454 = vunpack.c.h.b16 %v176
  %v455 = vunpack.c.l.b16 %v177
  %v456 = vunpack.c.h.b16 %v177
  %v457 = vunpack.c.l.b16 %v178
  %v458 = vunpack.c.h.b16 %v178
  %v459 = vunpack.c.l.b16 %v179
  %v460 = vunpack.c.h.b16 %v179
  %v461 = vunpack.c.l.b16 %v180
  %v462 = vunpack.c.h.b16 %v180
  %v463 = vunpack.c.l.b16 %v181
  %v464 = vunpack.c.h.b16 %v181
  %v465 = vunpack.c.l.b16 %v182
  %v466 = vunpack.c.h.b16 %v182
  %v467 = vunpack.c.l.b16 %v183
  %v468 = vunpack.c.h.b16 %v183
  %v469 = vunpack.c.l.b16 %v184
  %v470 = vunpack.c.h.b16 %v184
  %v471 = vunpack.c.l.b16 %v185
  %v472 = vunpack.c.h.b16 %v185
  %v473 = vunpack.c.l.b16 %v186
  %v474 = vunpack.c.h.b16 %v186
  %v475 = vpack.c.b16 %v289, %v283
  %v476 = vpack.c.b16 %v290, %v284
  %v477 = vpack.c.b16 %v291, %v285
  %v478 = vpack.c.b16 %v292, %v286
  %v479 = vpack.c.b16 %v293, %v287
  %v480 = vpack.c.b16 %v294, %v288
  %v481 = vpack.c.b16 %v301, %v295
  %v482 = vpack.c.b16 %v302, %v296
  %v483 = vpack.c.b16 %v303, %v297
  %v484 = vpack.c.b16 %v304, %v298
  %v485 = vpack.c.b16 %v305, %v299
  %v486 = vpack.c.b16 %v306, %v300
  %v487 = vpack.c.b16 %v313, %v307
  %v488 = vpack.c.b16 %v314, %v308
  %v489 = vpack.c.b16 %v315, %v309
  %v490 = vpack.c.b16 %v316, %v310
  %v491 = vpack.c.b16 %v317, %v311
  %v492 = vpack.c.b16 %v318, %v312
  %v493 = vpack.c.b16 %v325, %v319
  %v494 = vpack.c.b16 %v326, %v320
  %v495 = vpack.c.b16 %v327, %v321
  %v496 = vpack.c.b16 %v328, %v322
  %v497 = vpack.c.b16 %v329, %v323
  %v498 = vpack.c.b16 %v330, %v324
  %v499 = vpack.c.b16 %v337, %v331
  %v500 = vpack.c.b16 %v338, %v332
  %v501 = vpack.c.b16 %v339, %v333
  %v502 = vpack.c.b16 %v340, %v334
  %v503 = vpack.c.b16 %v341, %v335
  %v504 = vpack.c.b16 %v342, %v336
  %v505 = vpack.c.b16 %v349, %v343
  %v506 = vpack.c.b16 %v350, %v344
  %v507 = vpack.c.b16 %v351, %v345
  %v508 = vpack.c.b16 %v352, %v346
  %v509 = vpack.c.b16 %v353, %v347
  %v510 = vpack.c.b16 %v354, %v348
  %v511 = vpack.c.b16 %v361, %v355
  %v512 = vpack.c.b16 %v362, %v356
  %v513 = vpack.c.b16 %v363, %v357
  %v514 = vpack.c.b16 %v364, %v358
  %v515 = vpack.c.b16 %v365, %v359
  %v516 = vpack.c.b16 %v366, %v360
  %v517 = vpack.c.b16 %v373, %v367
  %v518 = vpack.c.b16 %v374, %v368
  %v519 = vpack.c.b16 %v375, %v369
  %v520 = vpack.c.b16 %v376, %v370
  %v521 = vpack.c.b16 %v377, %v371
  %v522 = vpack.c.b16 %v378, %v372
  %v523 = vpack.c.b16 %v385, %v379
  %v524 = vpack.c.b16 %v386, %v380
  %v525 = vpack.c.b16 %v387, %v381
  %v526 = vpack.c.b16 %v388, %v382
  %v527 = vpack.c.b16 %v389, %v383
  %v528 = vpack.c.b16 %v390, %v384
  %v529 = vpack.c.b16 %v397, %v391
  %v530 = vpack.c.b16 %v398, %v392
  %v531 = vpack.c.b16 %v399, %v393
  %v532 = vpack.c.b16 %v400, %v394
  %v533 = vpack.c.b16 %v401, %v395
  %v534 = vpack.c.b16 %v402, %v396
  %v535 = vpack.c.b16 %v409, %v403
  %v536 = vpack.c.b16 %v410, %v404
  %v537 = vpack.c.b16 %v411, %v405
  %v538 = vpack.c.b16 %v412, %v406
  %v539 = vpack.c.b16 %v413, %v407
  %v540 = vpack.c.b16 %v414, %v408
  %v541 = vpack.c.b16 %v421, %v415
  %v542 = vpack.c.b16 %v422, %v416
  %v543 = vpack.c.b16 %v423, %v417
  %v544 = vpack.c.b16 %v424, %v418
  %v545 = vpack.c.b16 %v425, %v419
  %v546 = vpack.c.b16 %v426, %v420
  %v547 = vpack.c.b16 %v433, %v427
  %v548 = vpack.c.b16 %v434, %v428
  %v549 = vpack.c.b16 %v435, %v429
  %v550 = vpack.c.b16 %v436, %v430
  %v551 = vpack.c.b16 %v437, %v431
  %v552 = vpack.c.b16 %v438, %v432
  %v553 = vpack.c.b16 %v445, %v439
  %v554 = vpack.c.b16 %v446, %v440
  %v555 = vpack.c.b16 %v447, %v441
  %v556 = vpack.c.b16 %v448, %v442
  %v557 = vpack.c.b16 %v449, %v443
  %v558 = vpack.c.b16 %v450, %v444
  %v559 = vpack.c.b16 %v457, %v451
  %v560 = vpack.c.b16 %v458, %v452
  %v561 = vpack.c.b16 %v459, %v453
  %v562 = vpack.c.b16 %v460, %v454
  %v563 = vpack.c.b16 %v461, %v455
  %v564 = vpack.c.b16 %v462, %v456
  %v565 = vpack.c.b16 %v469, %v463
  %v566 = vpack.c.b16 %v470, %v464
  %v567 = vpack.c.b16 %v471, %v465
  %v568 = vpack.c.b16 %v472, %v466
  %v569 = vpack.c.b16 %v473, %v467
  %v570 = vpack.c.b16 %v474, %v468
  %667 = vmatprep.subr.bf16.mxu0 %v518
  %668 = vmatpush1.bf16.msra.mxu0 %v517
  %669 = vmatprep.subr.bf16.mxu0 %v512
  %670 = vmatpush1.bf16.msra.mxu0 %v511
  %671 = vmatprep.subr.bf16.mxu0 %v506
  %672 = vmatpush1.bf16.msra.mxu0 %v505
  %673 = vmatprep.subr.bf16.mxu0 %v500
  %674 = vmatpush1.bf16.msra.mxu0 %v499
  %675 = vmatprep.subr.bf16.mxu0 %v494
  %676 = vmatpush1.bf16.msra.mxu0 %v493
  %677 = vmatprep.subr.bf16.mxu0 %v488
  %678 = vmatpush1.bf16.msra.mxu0 %v487
  %679 = vmatprep.subr.bf16.mxu0 %v482
  %680 = vmatpush1.bf16.msra.mxu0 %v481
  %681 = vmatprep.subr.bf16.mxu0 %v476
  %682 = vmatpush1.bf16.msra.mxu0 %v475
  %683 = vmatprep.subr.bf16.mxu0 %v566
  %684 = vmatpush2.bf16.msra.mxu0 %v565
  %685 = vmatprep.subr.bf16.mxu0 %v560
  %686 = vmatpush2.bf16.msra.mxu0 %v559
  %687 = vmatprep.subr.bf16.mxu0 %v554
  %688 = vmatpush2.bf16.msra.mxu0 %v553
  %689 = vmatprep.subr.bf16.mxu0 %v548
  %690 = vmatpush2.bf16.msra.mxu0 %v547
  %691 = vmatprep.subr.bf16.mxu0 %v542
  %692 = vmatpush2.bf16.msra.mxu0 %v541
  %693 = vmatprep.subr.bf16.mxu0 %v536
  %694 = vmatpush2.bf16.msra.mxu0 %v535
  %695 = vmatprep.subr.bf16.mxu0 %v530
  %696 = vmatpush2.bf16.msra.mxu0 %v529
  %697 = vmatprep.subr.bf16.mxu0 %v524
  %698 = vmatpush2.bf16.msra.mxu0 %v523
  %699 = vmatprep.mubr.bf16.mxu0 %v88
  %700 = vmatmul.mubr.bf16.gmra.mxu0 %v87
  %v701 = vpop.f32.mrf.mxu0
  %v702 = vadd.f32 0.0, %v701
  %v703 = vpop.f32.mrf.mxu0
  %v704 = vadd.f32 0.0, %v703
  %v705 = vpop.f32.mrf.mxu0
  %v706 = vadd.f32 0.0, %v705
  %v707 = vpop.f32.mrf.mxu0
  %v708 = vadd.f32 0.0, %v707
  %709 = vmatprep.mubr.bf16.mxu0 %v90
  %710 = vmatmul.mubr.bf16.gmra.mxu0 %v89
  %v711 = vpop.f32.mrf.mxu0
  %v712 = vadd.f32 0.0, %v711
  %v713 = vpop.f32.mrf.mxu0
  %v714 = vadd.f32 0.0, %v713
  %v715 = vpop.f32.mrf.mxu0
  %v716 = vadd.f32 0.0, %v715
  %v717 = vpop.f32.mrf.mxu0
  %v718 = vadd.f32 0.0, %v717
  %719 = vdwg.mxu0
  %720 = vmatprep.subr.bf16.mxu0 %v520
  %721 = vmatpush1.bf16.msra.mxu0 %v519
  %722 = vmatprep.subr.bf16.mxu0 %v514
  %723 = vmatpush1.bf16.msra.mxu0 %v513
  %724 = vmatprep.subr.bf16.mxu0 %v508
  %725 = vmatpush1.bf16.msra.mxu0 %v507
  %726 = vmatprep.subr.bf16.mxu0 %v502
  %727 = vmatpush1.bf16.msra.mxu0 %v501
  %728 = vmatprep.subr.bf16.mxu0 %v496
  %729 = vmatpush1.bf16.msra.mxu0 %v495
  %730 = vmatprep.subr.bf16.mxu0 %v490
  %731 = vmatpush1.bf16.msra.mxu0 %v489
  %732 = vmatprep.subr.bf16.mxu0 %v484
  %733 = vmatpush1.bf16.msra.mxu0 %v483
  %734 = vmatprep.subr.bf16.mxu0 %v478
  %735 = vmatpush1.bf16.msra.mxu0 %v477
  %736 = vmatprep.subr.bf16.mxu0 %v568
  %737 = vmatpush2.bf16.msra.mxu0 %v567
  %738 = vmatprep.subr.bf16.mxu0 %v562
  %739 = vmatpush2.bf16.msra.mxu0 %v561
  %740 = vmatprep.subr.bf16.mxu0 %v556
  %741 = vmatpush2.bf16.msra.mxu0 %v555
  %742 = vmatprep.subr.bf16.mxu0 %v550
  %743 = vmatpush2.bf16.msra.mxu0 %v549
  %744 = vmatprep.subr.bf16.mxu0 %v544
  %745 = vmatpush2.bf16.msra.mxu0 %v543
  %746 = vmatprep.subr.bf16.mxu0 %v538
  %747 = vmatpush2.bf16.msra.mxu0 %v537
  %748 = vmatprep.subr.bf16.mxu0 %v532
  %749 = vmatpush2.bf16.msra.mxu0 %v531
  %750 = vmatprep.subr.bf16.mxu0 %v526
  %751 = vmatpush2.bf16.msra.mxu0 %v525
  %752 = vmatprep.mubr.bf16.mxu0 %v88
  %753 = vmatmul.mubr.bf16.gmra.mxu0 %v87
  %v754 = vpop.f32.mrf.mxu0
  %v755 = vadd.f32 0.0, %v754
  %v756 = vpop.f32.mrf.mxu0
  %v757 = vadd.f32 0.0, %v756
  %v758 = vpop.f32.mrf.mxu0
  %v759 = vadd.f32 0.0, %v758
  %v760 = vpop.f32.mrf.mxu0
  %v761 = vadd.f32 0.0, %v760
  %762 = vmatprep.mubr.bf16.mxu0 %v90
  %763 = vmatmul.mubr.bf16.gmra.mxu0 %v89
  %v764 = vpop.f32.mrf.mxu0
  %v765 = vadd.f32 0.0, %v764
  %v766 = vpop.f32.mrf.mxu0
  %v767 = vadd.f32 0.0, %v766
  %v768 = vpop.f32.mrf.mxu0
  %v769 = vadd.f32 0.0, %v768
  %v770 = vpop.f32.mrf.mxu0
  %v771 = vadd.f32 0.0, %v770
  %772 = vdwg.mxu0
  %773 = vmatprep.subr.bf16.mxu0 %v522
  %774 = vmatpush1.bf16.msra.mxu0 %v521
  %775 = vmatprep.subr.bf16.mxu0 %v516
  %776 = vmatpush1.bf16.msra.mxu0 %v515
  %777 = vmatprep.subr.bf16.mxu0 %v510
  %778 = vmatpush1.bf16.msra.mxu0 %v509
  %779 = vmatprep.subr.bf16.mxu0 %v504
  %780 = vmatpush1.bf16.msra.mxu0 %v503
  %781 = vmatprep.subr.bf16.mxu0 %v498
  %782 = vmatpush1.bf16.msra.mxu0 %v497
  %783 = vmatprep.subr.bf16.mxu0 %v492
  %784 = vmatpush1.bf16.msra.mxu0 %v491
  %785 = vmatprep.subr.bf16.mxu0 %v486
  %786 = vmatpush1.bf16.msra.mxu0 %v485
  %787 = vmatprep.subr.bf16.mxu0 %v480
  %788 = vmatpush1.bf16.msra.mxu0 %v479
  %789 = vmatprep.subr.bf16.mxu0 %v570
  %790 = vmatpush2.bf16.msra.mxu0 %v569
  %791 = vmatprep.subr.bf16.mxu0 %v564
  %792 = vmatpush2.bf16.msra.mxu0 %v563
  %793 = vmatprep.subr.bf16.mxu0 %v558
  %794 = vmatpush2.bf16.msra.mxu0 %v557
  %795 = vmatprep.subr.bf16.mxu0 %v552
  %796 = vmatpush2.bf16.msra.mxu0 %v551
  %797 = vmatprep.subr.bf16.mxu0 %v546
  %798 = vmatpush2.bf16.msra.mxu0 %v545
  %799 = vmatprep.subr.bf16.mxu0 %v540
  %800 = vmatpush2.bf16.msra.mxu0 %v539
  %801 = vmatprep.subr.bf16.mxu0 %v534
  %802 = vmatpush2.bf16.msra.mxu0 %v533
  %803 = vmatprep.subr.bf16.mxu0 %v528
  %804 = vmatpush2.bf16.msra.mxu0 %v527
  %805 = vmatprep.mubr.bf16.mxu0 %v88
  %806 = vmatmul.mubr.bf16.gmra.mxu0 %v87
  %v807 = vpop.f32.mrf.mxu0
  %v808 = vadd.f32 0.0, %v807
  %v809 = vpop.f32.mrf.mxu0
  %v810 = vadd.f32 0.0, %v809
  %v811 = vpop.f32.mrf.mxu0
  %v812 = vadd.f32 0.0, %v811
  %v813 = vpop.f32.mrf.mxu0
  %v814 = vadd.f32 0.0, %v813
  %815 = vmatprep.mubr.bf16.mxu0 %v90
  %816 = vmatmul.mubr.bf16.gmra.mxu0 %v89
  %v817 = vpop.f32.mrf.mxu0
  %v818 = vadd.f32 0.0, %v817
  %v819 = vpop.f32.mrf.mxu0
  %v820 = vadd.f32 0.0, %v819
  %v821 = vpop.f32.mrf.mxu0
  %v822 = vadd.f32 0.0, %v821
  %v823 = vpop.f32.mrf.mxu0
  %v824 = vadd.f32 0.0, %v823
  %825 = vdwg.mxu0
  %v826 = vpack.c.bf16 %v706, %v702
  %v827 = vpack.c.bf16 %v708, %v704
  %v828 = vpack.c.bf16 %v759, %v755
  %v829 = vpack.c.bf16 %v761, %v757
  %v830 = vpack.c.bf16 %v812, %v808
  %v831 = vpack.c.bf16 %v814, %v810
  %v832 = vpack.c.bf16 %v716, %v712
  %v833 = vpack.c.bf16 %v718, %v714
  %v834 = vpack.c.bf16 %v769, %v765
  %v835 = vpack.c.bf16 %v771, %v767
  %v836 = vpack.c.bf16 %v822, %v818
  %v837 = vpack.c.bf16 %v824, %v820
  %v850 = vunpack.c.l.b16 %v826
  %v851 = vunpack.c.l.b16 %v827
  %v852 = vunpack.c.l.b16 %v828
  %v853 = vunpack.c.l.b16 %v829
  %v854 = vunpack.c.l.b16 %v830
  %v855 = vunpack.c.l.b16 %v831
  %v856 = vunpack.c.h.b16 %v826
  %v857 = vunpack.c.h.b16 %v827
  %v858 = vunpack.c.h.b16 %v828
  %v859 = vunpack.c.h.b16 %v829
  %v860 = vunpack.c.h.b16 %v830
  %v861 = vunpack.c.h.b16 %v831
  %v862 = vunpack.c.l.b16 %v832
  %v863 = vunpack.c.l.b16 %v833
  %v864 = vunpack.c.l.b16 %v834
  %v865 = vunpack.c.l.b16 %v835
  %v866 = vunpack.c.l.b16 %v836
  %v867 = vunpack.c.l.b16 %v837
  %v868 = vunpack.c.h.b16 %v832
  %v869 = vunpack.c.h.b16 %v833
  %v870 = vunpack.c.h.b16 %v834
  %v871 = vunpack.c.h.b16 %v835
  %v872 = vunpack.c.h.b16 %v836
  %v873 = vunpack.c.h.b16 %v837
  %v874 = vpack.c.b16 %v851, %v850
  %v875 = vpack.c.b16 %v853, %v852
  %v876 = vpack.c.b16 %v855, %v854
  %v877 = vpack.c.b16 %v857, %v856
  %v878 = vpack.c.b16 %v859, %v858
  %v879 = vpack.c.b16 %v861, %v860
  %v880 = vpack.c.b16 %v863, %v862
  %v881 = vpack.c.b16 %v865, %v864
  %v882 = vpack.c.b16 %v867, %v866
  %v883 = vpack.c.b16 %v869, %v868
  %v884 = vpack.c.b16 %v871, %v870
  %v885 = vpack.c.b16 %v873, %v872
  %898 = vst [vmem:[%s3] sm:$0xff] %v874
  %899 = vst [vmem:[%s3 + $0x8] sm:$0xff] %v875
  %900 = vst [vmem:[%s3 + $0x10] sm:$0xff] %v876
  %901 = vst [vmem:[%s3 + $0x18] sm:$0xff] %v877
  %902 = vst [vmem:[%s3 + $0x20] sm:$0xff] %v878
  %903 = vst [vmem:[%s3 + $0x28] sm:$0xff] %v879
  %904 = vst [vmem:[%s3 + $0x30] sm:$0xff] %v880
  %905 = vst [vmem:[%s3 + $0x38] sm:$0xff] %v881
  %906 = vst [vmem:[%s3 + $0x40] sm:$0xff] %v882
  %907 = vst [vmem:[%s3 + $0x48] sm:$0xff] %v883
  %908 = vst [vmem:[%s3 + $0x50] sm:$0xff] %v884
  %909 = vst [vmem:[%s3 + $0x58] sm:$0xff] %v885
  // Predicated region
  $region14: #{vit_mim_forward.11} parent=0 // pred_check
    _
  $region15: #{vit_mim_forward.11} parent=0 // pred_check_branch
    %911 = sbr.rel (0) target = $region17
  $region16: #{vit_mim_forward.11} parent=0 // pred_region
    _
  $region17: #{vit_mim_forward.11} parent=0 // pred_fallthru
    _
  // Predicated region
  $region18: #{vit_mim_forward.11} parent=0 // pred_check
    _
  $region19: #{vit_mim_forward.11} parent=0 // pred_check_branch
    %913 = sbr.rel (0) target = $region21
  $region20: #{vit_mim_forward.11} parent=0 // pred_region
    _
  $region21: #{vit_mim_forward.11} parent=0 // pred_fallthru
    _

// kernel: vit_mim_forward.19
$region0: #{vit_mim_forward.19}
  #allocation0 [shape = 'u32[]', space=smem, size = 0x4, offset = 0x4, fixed_abs, tag = 'smem constant byte address 0x4 - core index']
  #allocation1 [shape = 'u32[144,128]{1,0:T(1,128)}', space=vmem, size = 0x12000, scoped, tag = 'internal scratch']
  %s0 = inlined_call_operand.vmem [shape: bf16[32,256], index: 0, kind: input, shape index: {}]
  %s1 = inlined_call_operand.vmem [shape: f32[1,256], index: 1, kind: input, shape index: {}]
  %s2 = inlined_call_operand.vmem [shape: f32[32,256], index: 2, kind: output, shape index: {}]
  %s3 = sld [smem:[#allocation0]]
  $region18: #{vit_mim_forward.19} parent=0
    _
  %s5 = ssub.s32 1, %s3
  %s6 = scalar_select 0, %s5, %s3
  // Predicated region
  $region2: #{vit_mim_forward.19} parent=0 // pred_check
    _
  $region3: #{vit_mim_forward.19} parent=0 // pred_check_branch
    %8 = sbr.rel (0) target = $region5
  $region4: #{vit_mim_forward.19} parent=0 // pred_region
    _
  $region5: #{vit_mim_forward.19} parent=0 // pred_fallthru
    _
  // Predicated region
  $region6: #{vit_mim_forward.19} parent=0 // pred_check
    _
  $region7: #{vit_mim_forward.19} parent=0 // pred_check_branch
    %10 = sbr.rel (0) target = $region9
  $region8: #{vit_mim_forward.19} parent=0 // pred_region
    _
  $region9: #{vit_mim_forward.19} parent=0 // pred_fallthru
    _
  %v11 = vld [vmem:[%s0] sm:$0xff]
  %v12 = vld [vmem:[%s0 + $0x8] sm:$0xff]
  %v13 = vld [vmem:[%s0 + $0x10] sm:$0xff]
  %v14 = vld [vmem:[%s0 + $0x18] sm:$0xff]
  %v15 = vunpack.c.l.bf16 %v11
  %v16 = vunpack.c.h.bf16 %v11
  %v17 = vunpack.c.l.bf16 %v12
  %v18 = vunpack.c.h.bf16 %v12
  %v19 = vunpack.c.l.bf16 %v13
  %v20 = vunpack.c.h.bf16 %v13
  %v21 = vunpack.c.l.bf16 %v14
  %v22 = vunpack.c.h.bf16 %v14
  %v23 = vmul.f32 %v15, %v15
  %v24 = vmul.f32 %v16, %v16
  %v25 = vmul.f32 %v17, %v17
  %v26 = vmul.f32 %v18, %v18
  %v27 = vmul.f32 %v19, %v19
  %v28 = vmul.f32 %v20, %v20
  %v29 = vmul.f32 %v21, %v21
  %v30 = vmul.f32 %v22, %v22
  %v31 = vadd.f32 %v23, %v24
  %32 = vadd.xlane.f32.xlu0 %v31
  %v33 = vpop.xlane.xlu0 %32
  %v34 = vadd.f32 %v25, %v26
  %35 = vadd.xlane.f32.xlu0 %v34
  %v36 = vpop.xlane.xlu0 %35
  %v37 = vadd.f32 %v27, %v28
  %38 = vadd.xlane.f32.xlu0 %v37
  %v39 = vpop.xlane.xlu0 %38
  %v40 = vadd.f32 %v29, %v30
  %41 = vadd.xlane.f32.xlu0 %v40
  %v42 = vpop.xlane.xlu0 %41
  %v43 = vrcp.pop 256.0
  %v44 = vmul.f32 %v33, %v43
  %v45 = vmul.f32 %v36, %v43
  %v46 = vmul.f32 %v39, %v43
  %v47 = vmul.f32 %v42, %v43
  %v48 = vadd.f32 %v44, 1e-06
  %v49 = vadd.f32 %v45, 1e-06
  %v50 = vadd.f32 %v46, 1e-06
  %v51 = vadd.f32 %v47, 1e-06
  %v52 = vrsqrt.pop %v48
  %v53 = vrsqrt.pop %v49
  %v54 = vrsqrt.pop %v50
  %v55 = vrsqrt.pop %v51
  %v56 = vmul.f32 %v15, %v52
  %v57 = vmul.f32 %v16, %v52
  %v58 = vmul.f32 %v17, %v53
  %v59 = vmul.f32 %v18, %v53
  %v60 = vmul.f32 %v19, %v54
  %v61 = vmul.f32 %v20, %v54
  %v62 = vmul.f32 %v21, %v55
  %v63 = vmul.f32 %v22, %v55
  %v64 = vld [vmem:[%s1] sm:$0x3]
  %v66 = vlaneseq
  %v67 = vshrl.u32 %v66, 7
  %v68 = vsub.s32 0, %v67
  %v69 = vrot.slane %v64, %v68
  %v70 = vlaneseq
  %v71 = vshrl.u32 %v70, 7
  %v72 = vsub.s32 1, %v71
  %v73 = vrot.slane %v64, %v72
  %v76 = vmul.f32 %v56, %v69
  %v77 = vmul.f32 %v57, %v73
  %v78 = vmul.f32 %v58, %v69
  %v79 = vmul.f32 %v59, %v73
  %v80 = vmul.f32 %v60, %v69
  %v81 = vmul.f32 %v61, %v73
  %v82 = vmul.f32 %v62, %v69
  %v83 = vmul.f32 %v63, %v73
  %84 = vst [vmem:[%s2] sm:$0xff] %v76
  %85 = vst [vmem:[%s2 + $0x8] sm:$0xff] %v77
  %86 = vst [vmem:[%s2 + $0x10] sm:$0xff] %v78
  %87 = vst [vmem:[%s2 + $0x18] sm:$0xff] %v79
  %88 = vst [vmem:[%s2 + $0x20] sm:$0xff] %v80
  %89 = vst [vmem:[%s2 + $0x28] sm:$0xff] %v81
  %90 = vst [vmem:[%s2 + $0x30] sm:$0xff] %v82
  %91 = vst [vmem:[%s2 + $0x38] sm:$0xff] %v83
  // Predicated region
  $region10: #{vit_mim_forward.19} parent=0 // pred_check
    _
  $region11: #{vit_mim_forward.19} parent=0 // pred_check_branch
    %93 = sbr.rel (0) target = $region13
  $region12: #{vit_mim_forward.19} parent=0 // pred_region
    _
  $region13: #{vit_mim_forward.19} parent=0 // pred_fallthru
    _
  // Predicated region
  $region14: #{vit_mim_forward.19} parent=0 // pred_check
    _
  $region15: #{vit_mim_forward.19} parent=0 // pred_check_branch
    %95 = sbr.rel (0) target = $region17
  $region16: #{vit_mim_forward.19} parent=0 // pred_region
    _
  $region17: #{vit_mim_forward.19} parent=0 // pred_fallthru
    _

// kernel: vit_mim_forward.14
$region0: #{vit_mim_forward.14}
  #allocation0 [shape = 'u32[]', space=smem, size = 0x4, offset = 0x4, fixed_abs, tag = 'smem constant byte address 0x4 - core index']
  #allocation1 [shape = 'u32[144,128]{1,0:T(1,128)}', space=vmem, size = 0x12000, scoped, tag = 'internal scratch']
  #allocation2 [shape = 'f32[32,256]{1,0:T(8,128)}', space=vmem, size = 0x8000, scoped, tag = 'scratch operand']
  %s0 = inlined_call_operand.vmem [shape: bf16[32,256], index: 0, kind: input, shape index: {}]
  %s1 = inlined_call_operand.vmem [shape: f32[1,256], index: 1, kind: input, shape index: {}]
  %s2 = inlined_call_operand.vmem [shape: bf16[256,1024], index: 2, kind: input, shape index: {}]
  %s3 = inlined_call_operand.vmem [shape: bf16[256,1024], index: 3, kind: input, shape index: {}]
  %s4 = inlined_call_operand.vmem [shape: bf16[1024,256], index: 4, kind: input, shape index: {}]
  %s5 = inlined_call_operand.vmem [shape: f32[1,256], index: 5, kind: input, shape index: {}]
  %s6 = inlined_call_operand.vmem [shape: bf16[32,256], index: 6, kind: output, shape index: {}]
  %s7 = sld [smem:[#allocation0]]
  $region111: #{vit_mim_forward.14} parent=0
    _
  %s9 = ssub.s32 1, %s7
  %s10 = scalar_select 0, %s9, %s7
  $region1: #{vit_mim_forward.14} parent=0
    #allocation3 [shape = 'u8[524288]{0}', space=vmem, size = 0x80000, scoped, tag = 'input window, operand 2']
    #allocation4 [shape = 'u8[524288]{0}', space=vmem, size = 0x80000, scoped, tag = 'input window, operand 3']
    loop: start=0, step=1, limit=4
    $region2: #{vit_mim_forward.14} parent=1 // loop_pre_header
      _
    $region3: #{vit_mim_forward.14} parent=1 // loop_header
      %s12 = sphi 0, %s16
      %p13 = scmp.ge.s32.totalorder %s12, 4
      %s19 = sphi 0, %s31
      %s20 = sphi 0, %s27
      %s21 = sphi 0, %s19
      %s22 = sphi 0, %s20
      %s23 = sphi 0, %s21
      %s24 = sphi 0, %s22
      %s34 = sphi 0, %s36
      %s37 = sphi 0, %s34
      %s38 = sphi 0, %s37
      %s54 = sphi 0, %s38
      %s58 = sphi 0, %s58
      %s60 = sphi 0, %s58
      %s61 = sphi 0, %s60
      %s75 = sphi 0, %s61
      %s81 = sphi 0, %s83
      %s84 = sphi 0, %s81
      %s85 = sphi 0, %s84
      %s101 = sphi 0, %s85
      %s107 = sphi 0, %s109
      %s110 = sphi 0, %s107
      %s111 = sphi 0, %s110
      %s127 = sphi 0, %s111
      %s133 = sphi 0, %s135
      %s136 = sphi 0, %s133
      %s137 = sphi 0, %s136
      %s153 = sphi 0, %s137
      %s157 = sphi 0, %s157
      %s159 = sphi 0, %s157
      %s160 = sphi 0, %s159
      %s174 = sphi 0, %s160
      %s180 = sphi 0, %s182
      %s183 = sphi 0, %s180
      %s184 = sphi 0, %s183
      %s200 = sphi 0, %s184
    $region4: #{vit_mim_forward.14} parent=1 // loop_header_branch
      %15 = sbr.rel (%p13) target = $region8
    $region5: #{vit_mim_forward.14} parent=1 // loop_body
      %s17 = ssub.s32 %s12, 1
      %s18 = ssub.s32 %s12, 2
      %s25 = sadd.s32 1, %s20
      %p26 = scmp.ge.s32.totalorder %s25, 2
      %s27 = scalar_select %p26, 0, %s25
      %s28 = sadd.s32 1, %s19
      %s29 = scalar_select %p26, %s28, %s19
      %p30 = scmp.ge.s32.totalorder %s29, 1
      %s31 = scalar_select %p30, 0, %s29
      %s32 = ssub.s32 %s19, %s31
      %p33 = scmp.eq.s32.totalorder %s32, 0
      %s35 = sadd.s32 %s34, 1
      %s36 = scalar_select %p33, %s34, %s35
      %p39 = pneg %p33
      %p40 = scmp.eq.s32.totalorder %s12, 1
      %p41 = por %p39, %p40
      %p42 = scmp.ne.s32.totalorder %s34, %s37
      %p43 = scmp.eq.s32.totalorder %s12, 0
      %p44 = por %p42, %p43
      %p45 = scmp.ne.s32.totalorder %s34, %s37
      %p46 = scmp.eq.s32.totalorder %s17, 1
      %p47 = por %p45, %p46
      %p48 = scmp.ne.s32.totalorder %s37, %s38
      %p49 = scmp.eq.s32.totalorder %s17, 0
      %p50 = por %p48, %p49
      %p51 = scmp.ne.s32.totalorder %s37, %s38
      %p52 = scmp.eq.s32.totalorder %s18, 1
      %p53 = por %p51, %p52
      %p55 = scmp.ne.s32.totalorder %s38, %s54
      %p56 = scmp.eq.s32.totalorder %s18, 0
      %p57 = por %p55, %p56
      %s59 = sadd.s32 %s58, 1
      %p62 = scmp.eq.s32.totalorder %s12, 1
      %p63 = scmp.ne.s32.totalorder %s58, %s60
      %p64 = scmp.eq.s32.totalorder %s12, 0
      %p65 = por %p63, %p64
      %p66 = scmp.ne.s32.totalorder %s58, %s60
      %p67 = scmp.eq.s32.totalorder %s17, 1
      %p68 = por %p66, %p67
      %p69 = scmp.ne.s32.totalorder %s60, %s61
      %p70 = scmp.eq.s32.totalorder %s17, 0
      %p71 = por %p69, %p70
      %p72 = scmp.ne.s32.totalorder %s60, %s61
      %p73 = scmp.eq.s32.totalorder %s18, 1
      %p74 = por %p72, %p73
      %p76 = scmp.ne.s32.totalorder %s61, %s75
      %p77 = scmp.eq.s32.totalorder %s18, 0
      %p78 = por %p76, %p77
      %s79 = ssub.s32 %s20, %s27
      %p80 = scmp.eq.s32.totalorder %s79, 0
      %s82 = sadd.s32 %s81, 1
      %s83 = scalar_select %p80, %s81, %s82
      %p86 = pneg %p80
      %p87 = scmp.eq.s32.totalorder %s12, 1
      %p88 = por %p86, %p87
      %p89 = scmp.ne.s32.totalorder %s81, %s84
      %p90 = scmp.eq.s32.totalorder %s12, 0
      %p91 = por %p89, %p90
      %p92 = scmp.ne.s32.totalorder %s81, %s84
      %p93 = scmp.eq.s32.totalorder %s17, 1
      %p94 = por %p92, %p93
      %p95 = scmp.ne.s32.totalorder %s84, %s85
      %p96 = scmp.eq.s32.totalorder %s17, 0
      %p97 = por %p95, %p96
      %p98 = scmp.ne.s32.totalorder %s84, %s85
      %p99 = scmp.eq.s32.totalorder %s18, 1
      %p100 = por %p98, %p99
      %p102 = scmp.ne.s32.totalorder %s85, %s101
      %p103 = scmp.eq.s32.totalorder %s18, 0
      %p104 = por %p102, %p103
      %s105 = ssub.s32 %s20, %s27
      %p106 = scmp.eq.s32.totalorder %s105, 0
      %s108 = sadd.s32 %s107, 1
      %s109 = scalar_select %p106, %s107, %s108
      %p112 = pneg %p106
      %p113 = scmp.eq.s32.totalorder %s12, 1
      %p114 = por %p112, %p113
      %p115 = scmp.ne.s32.totalorder %s107, %s110
      %p116 = scmp.eq.s32.totalorder %s12, 0
      %p117 = por %p115, %p116
      %p118 = scmp.ne.s32.totalorder %s107, %s110
      %p119 = scmp.eq.s32.totalorder %s17, 1
      %p120 = por %p118, %p119
      %p121 = scmp.ne.s32.totalorder %s110, %s111
      %p122 = scmp.eq.s32.totalorder %s17, 0
      %p123 = por %p121, %p122
      %p124 = scmp.ne.s32.totalorder %s110, %s111
      %p125 = scmp.eq.s32.totalorder %s18, 1
      %p126 = por %p124, %p125
      %p128 = scmp.ne.s32.totalorder %s111, %s127
      %p129 = scmp.eq.s32.totalorder %s18, 0
      %p130 = por %p128, %p129
      %s131 = ssub.s32 %s20, %s27
      %p132 = scmp.eq.s32.totalorder %s131, 0
      %s134 = sadd.s32 %s133, 1
      %s135 = scalar_select %p132, %s133, %s134
      %p138 = pneg %p132
      %p139 = scmp.eq.s32.totalorder %s12, 1
      %p140 = por %p138, %p139
      %p141 = scmp.ne.s32.totalorder %s133, %s136
      %p142 = scmp.eq.s32.totalorder %s12, 0
      %p143 = por %p141, %p142
      %p144 = scmp.ne.s32.totalorder %s133, %s136
      %p145 = scmp.eq.s32.totalorder %s17, 1
      %p146 = por %p144, %p145
      %p147 = scmp.ne.s32.totalorder %s136, %s137
      %p148 = scmp.eq.s32.totalorder %s17, 0
      %p149 = por %p147, %p148
      %p150 = scmp.ne.s32.totalorder %s136, %s137
      %p151 = scmp.eq.s32.totalorder %s18, 1
      %p152 = por %p150, %p151
      %p154 = scmp.ne.s32.totalorder %s137, %s153
      %p155 = scmp.eq.s32.totalorder %s18, 0
      %p156 = por %p154, %p155
      %s158 = sadd.s32 %s157, 1
      %p161 = scmp.eq.s32.totalorder %s12, 1
      %p162 = scmp.ne.s32.totalorder %s157, %s159
      %p163 = scmp.eq.s32.totalorder %s12, 0
      %p164 = por %p162, %p163
      %p165 = scmp.ne.s32.totalorder %s157, %s159
      %p166 = scmp.eq.s32.totalorder %s17, 1
      %p167 = por %p165, %p166
      %p168 = scmp.ne.s32.totalorder %s159, %s160
      %p169 = scmp.eq.s32.totalorder %s17, 0
      %p170 = por %p168, %p169
      %p171 = scmp.ne.s32.totalorder %s159, %s160
      %p172 = scmp.eq.s32.totalorder %s18, 1
      %p173 = por %p171, %p172
      %p175 = scmp.ne.s32.totalorder %s160, %s174
      %p176 = scmp.eq.s32.totalorder %s18, 0
      %p177 = por %p175, %p176
      %s178 = ssub.s32 %s19, %s31
      %p179 = scmp.eq.s32.totalorder %s178, 0
      %s181 = sadd.s32 %s180, 1
      %s182 = scalar_select %p179, %s180, %s181
      %p185 = pneg %p179
      %p186 = scmp.eq.s32.totalorder %s12, 1
      %p187 = por %p185, %p186
      %p188 = scmp.ne.s32.totalorder %s180, %s183
      %p189 = scmp.eq.s32.totalorder %s12, 0
      %p190 = por %p188, %p189
      %p191 = scmp.ne.s32.totalorder %s180, %s183
      %p192 = scmp.eq.s32.totalorder %s17, 1
      %p193 = por %p191, %p192
      %p194 = scmp.ne.s32.totalorder %s183, %s184
      %p195 = scmp.eq.s32.totalorder %s17, 0
      %p196 = por %p194, %p195
      %p197 = scmp.ne.s32.totalorder %s183, %s184
      %p198 = scmp.eq.s32.totalorder %s18, 1
      %p199 = por %p197, %p198
      %p201 = scmp.ne.s32.totalorder %s184, %s200
      %p202 = scmp.eq.s32.totalorder %s18, 0
      %p203 = por %p201, %p202
      %p204 = scmp.le.s32.totalorder 1, %s12
      %p205 = scmp.lt.s32.totalorder %s12, 3
      %p206 = pnand %p204, %p205
      %p207 = pneg %p206
      // Predicated region
      $region9: #{vit_mim_forward.14} parent=5 // pred_check
        _
      $region10: #{vit_mim_forward.14} parent=5 // pred_check_branch
        %209 = sbr.rel (%p206) target = $region12
      $region11: #{vit_mim_forward.14} parent=5 // pred_region
        %s210 = ssub.s32 %s12, 1
        // Predicated region
        $region13: #{vit_mim_forward.14} parent=11 // pred_check
          %p211 = pneg %p50
        $region14: #{vit_mim_forward.14} parent=11 // pred_check_branch
          %213 = sbr.rel (%p211) target = $region16
        $region15: #{vit_mim_forward.14} parent=11 // pred_region
          %s214 = smul.u32 4, %s21
          %p215 = scmp.lt.s32.totalorder %s214, 3
          %s216 = scalar_select %p215, %s214, 3
          %s217 = smul.addr %s216, 2
          %s218 = smul.addr %s217, 4
          %s219 = scalar_lea.vmem %s0, %s218
          %s220 = smul.u32 4, %s21
        $region16: #{vit_mim_forward.14} parent=11 // pred_fallthru
          _
        // Predicated region
        $region17: #{vit_mim_forward.14} parent=11 // pred_check
          %p221 = pneg %p71
        $region18: #{vit_mim_forward.14} parent=11 // pred_check_branch
          %223 = sbr.rel (%p221) target = $region20
        $region19: #{vit_mim_forward.14} parent=11 // pred_region
          _
        $region20: #{vit_mim_forward.14} parent=11 // pred_fallthru
          _
        // Predicated region
        $region21: #{vit_mim_forward.14} parent=11 // pred_check
          %p224 = pneg %p170
        $region22: #{vit_mim_forward.14} parent=11 // pred_check_branch
          %226 = sbr.rel (%p224) target = $region24
        $region23: #{vit_mim_forward.14} parent=11 // pred_region
          _
        $region24: #{vit_mim_forward.14} parent=11 // pred_fallthru
          _
      $region12: #{vit_mim_forward.14} parent=5 // pred_fallthru
        _
      %p227 = scmp.lt.s32.totalorder %s12, 2
      // Predicated region
      $region25: #{vit_mim_forward.14} parent=5 // pred_check
        %p228 = pneg %p227
      $region26: #{vit_mim_forward.14} parent=5 // pred_check_branch
        %230 = sbr.rel (%p228) target = $region28
      $region27: #{vit_mim_forward.14} parent=5 // pred_region
        // Predicated region
        $region29: #{vit_mim_forward.14} parent=27 // pred_check
          %p231 = pneg %p91
        $region30: #{vit_mim_forward.14} parent=27 // pred_check_branch
          %233 = sbr.rel (%p231) target = $region32
        $region31: #{vit_mim_forward.14} parent=27 // pred_region
          %s234 = sand.u32 %s81, 1
          %s235 = sand.u32 %s81, 1
          %s236 = smul.addr %s235, 512
          %s237 = scalar_lea.vmem [#allocation3], %s236
          %s238 = smul.u32 4, %s20
          %s239 = smul.addr %s238, 4
          %s240 = scalar_lea.vmem %s2, %s239
          // Predicated region
          $region33: #{vit_mim_forward.14} parent=31 // pred_check
            _
          $region34: #{vit_mim_forward.14} parent=31 // pred_check_branch
            %242 = sbr.rel (0) target = $region36
          $region35: #{vit_mim_forward.14} parent=31 // pred_region
            // Predicated region
            $region37: #{vit_mim_forward.14} parent=35 // pred_check
              _
            $region38: #{vit_mim_forward.14} parent=35 // pred_check_branch
              %244 = sbr.rel (0) target = $region40
            $region39: #{vit_mim_forward.14} parent=35 // pred_region
              loop: start=0, step=1, limit=1
              $region41: #{vit_mim_forward.14} parent=39 // loop_pre_header
                _
              $region42: #{vit_mim_forward.14} parent=39 // loop_header
                %s246 = sphi 0, %s250
                %p247 = scmp.ge.s32.totalorder %s246, 1
                %s251 = sphi %s240, %s240
                %s252 = sphi %s237, %s237
              $region43: #{vit_mim_forward.14} parent=39 // loop_header_branch
                %249 = sbr.rel (%p247) target = $region47
              $region44: #{vit_mim_forward.14} parent=39 // loop_body
                %v253 = vld [vmem:[%s251] sm:$0xff]
                %254 = vst [vmem:[%s252] sm:$0xff] %v253
                %v255 = vld [vmem:[%s251 + $0x8] sm:$0xff]
                %256 = vst [vmem:[%s252 + $0x8] sm:$0xff] %v255
                %v257 = vld [vmem:[%s251 + $0x20] sm:$0xff]
                %258 = vst [vmem:[%s252 + $0x10] sm:$0xff] %v257
                %v259 = vld [vmem:[%s251 + $0x28] sm:$0xff]
                %260 = vst [vmem:[%s252 + $0x18] sm:$0xff] %v259
                %v261 = vld [vmem:[%s251 + $0x40] sm:$0xff]
                %262 = vst [vmem:[%s252 + $0x20] sm:$0xff] %v261
                %v263 = vld [vmem:[%s251 + $0x48] sm:$0xff]
                %264 = vst [vmem:[%s252 + $0x28] sm:$0xff] %v263
                %v265 = vld [vmem:[%s251 + $0x60] sm:$0xff]
                %266 = vst [vmem:[%s252 + $0x30] sm:$0xff] %v265
                %v267 = vld [vmem:[%s251 + $0x68] sm:$0xff]
                %268 = vst [vmem:[%s252 + $0x38] sm:$0xff] %v267
                %v269 = vld [vmem:[%s251 + $0x80] sm:$0xff]
                %270 = vst [vmem:[%s252 + $0x40] sm:$0xff] %v269
                %v271 = vld [vmem:[%s251 + $0x88] sm:$0xff]
                %272 = vst [vmem:[%s252 + $0x48] sm:$0xff] %v271
                %v273 = vld [vmem:[%s251 + $0xa0] sm:$0xff]
                %274 = vst [vmem:[%s252 + $0x50] sm:$0xff] %v273
                %v275 = vld [vmem:[%s251 + $0xa8] sm:$0xff]
                %276 = vst [vmem:[%s252 + $0x58] sm:$0xff] %v275
                %v277 = vld [vmem:[%s251 + $0xc0] sm:$0xff]
                %278 = vst [vmem:[%s252 + $0x60] sm:$0xff] %v277
                %v279 = vld [vmem:[%s251 + $0xc8] sm:$0xff]
                %280 = vst [vmem:[%s252 + $0x68] sm:$0xff] %v279
                %v281 = vld [vmem:[%s251 + $0xe0] sm:$0xff]
                %282 = vst [vmem:[%s252 + $0x70] sm:$0xff] %v281
                %v283 = vld [vmem:[%s251 + $0xe8] sm:$0xff]
                %284 = vst [vmem:[%s252 + $0x78] sm:$0xff] %v283
                %v285 = vld [vmem:[%s251 + $0x100] sm:$0xff]
                %286 = vst [vmem:[%s252 + $0x80] sm:$0xff] %v285
                %v287 = vld [vmem:[%s251 + $0x108] sm:$0xff]
                %288 = vst [vmem:[%s252 + $0x88] sm:$0xff] %v287
                %v289 = vld [vmem:[%s251 + $0x120] sm:$0xff]
                %290 = vst [vmem:[%s252 + $0x90] sm:$0xff] %v289
                %v291 = vld [vmem:[%s251 + $0x128] sm:$0xff]
                %292 = vst [vmem:[%s252 + $0x98] sm:$0xff] %v291
                %v293 = vld [vmem:[%s251 + $0x140] sm:$0xff]
                %294 = vst [vmem:[%s252 + $0xa0] sm:$0xff] %v293
                %v295 = vld [vmem:[%s251 + $0x148] sm:$0xff]
                %296 = vst [vmem:[%s252 + $0xa8] sm:$0xff] %v295
                %v297 = vld [vmem:[%s251 + $0x160] sm:$0xff]
                %298 = vst [vmem:[%s252 + $0xb0] sm:$0xff] %v297
                %v299 = vld [vmem:[%s251 + $0x168] sm:$0xff]
                %300 = vst [vmem:[%s252 + $0xb8] sm:$0xff] %v299
                %v301 = vld [vmem:[%s251 + $0x180] sm:$0xff]
                %302 = vst [vmem:[%s252 + $0xc0] sm:$0xff] %v301
                %v303 = vld [vmem:[%s251 + $0x188] sm:$0xff]
                %304 = vst [vmem:[%s252 + $0xc8] sm:$0xff] %v303
                %v305 = vld [vmem:[%s251 + $0x1a0] sm:$0xff]
                %306 = vst [vmem:[%s252 + $0xd0] sm:$0xff] %v305
                %v307 = vld [vmem:[%s251 + $0x1a8] sm:$0xff]
                %308 = vst [vmem:[%s252 + $0xd8] sm:$0xff] %v307
                %v309 = vld [vmem:[%s251 + $0x1c0] sm:$0xff]
                %310 = vst [vmem:[%s252 + $0xe0] sm:$0xff] %v309
                %v311 = vld [vmem:[%s251 + $0x1c8] sm:$0xff]
                %312 = vst [vmem:[%s252 + $0xe8] sm:$0xff] %v311
                %v313 = vld [vmem:[%s251 + $0x1e0] sm:$0xff]
                %314 = vst [vmem:[%s252 + $0xf0] sm:$0xff] %v313
                %v315 = vld [vmem:[%s251 + $0x1e8] sm:$0xff]
                %316 = vst [vmem:[%s252 + $0xf8] sm:$0xff] %v315
                %v317 = vld [vmem:[%s251 + $0x200] sm:$0xff]
                %318 = vst [vmem:[%s252 + $0x100] sm:$0xff] %v317
                %v319 = vld [vmem:[%s251 + $0x208] sm:$0xff]
                %320 = vst [vmem:[%s252 + $0x108] sm:$0xff] %v319
                %v321 = vld [vmem:[%s251 + $0x220] sm:$0xff]
                %322 = vst [vmem:[%s252 + $0x110] sm:$0xff] %v321
                %v323 = vld [vmem:[%s251 + $0x228] sm:$0xff]
                %324 = vst [vmem:[%s252 + $0x118] sm:$0xff] %v323
                %v325 = vld [vmem:[%s251 + $0x240] sm:$0xff]
                %326 = vst [vmem:[%s252 + $0x120] sm:$0xff] %v325
                %v327 = vld [vmem:[%s251 + $0x248] sm:$0xff]
                %328 = vst [vmem:[%s252 + $0x128] sm:$0xff] %v327
                %v329 = vld [vmem:[%s251 + $0x260] sm:$0xff]
                %330 = vst [vmem:[%s252 + $0x130] sm:$0xff] %v329
                %v331 = vld [vmem:[%s251 + $0x268] sm:$0xff]
                %332 = vst [vmem:[%s252 + $0x138] sm:$0xff] %v331
                %v333 = vld [vmem:[%s251 + $0x280] sm:$0xff]
                %334 = vst [vmem:[%s252 + $0x140] sm:$0xff] %v333
                %v335 = vld [vmem:[%s251 + $0x288] sm:$0xff]
                %336 = vst [vmem:[%s252 + $0x148] sm:$0xff] %v335
                %v337 = vld [vmem:[%s251 + $0x2a0] sm:$0xff]
                %338 = vst [vmem:[%s252 + $0x150] sm:$0xff] %v337
                %v339 = vld [vmem:[%s251 + $0x2a8] sm:$0xff]
                %340 = vst [vmem:[%s252 + $0x158] sm:$0xff] %v339
                %v341 = vld [vmem:[%s251 + $0x2c0] sm:$0xff]
                %342 = vst [vmem:[%s252 + $0x160] sm:$0xff] %v341
                %v343 = vld [vmem:[%s251 + $0x2c8] sm:$0xff]
                %344 = vst [vmem:[%s252 + $0x168] sm:$0xff] %v343
                %v345 = vld [vmem:[%s251 + $0x2e0] sm:$0xff]
                %346 = vst [vmem:[%s252 + $0x170] sm:$0xff] %v345
                %v347 = vld [vmem:[%s251 + $0x2e8] sm:$0xff]
                %348 = vst [vmem:[%s252 + $0x178] sm:$0xff] %v347
                %v349 = vld [vmem:[%s251 + $0x300] sm:$0xff]
                %350 = vst [vmem:[%s252 + $0x180] sm:$0xff] %v349
                %v351 = vld [vmem:[%s251 + $0x308] sm:$0xff]
                %352 = vst [vmem:[%s252 + $0x188] sm:$0xff] %v351
                %v353 = vld [vmem:[%s251 + $0x320] sm:$0xff]
                %354 = vst [vmem:[%s252 + $0x190] sm:$0xff] %v353
                %v355 = vld [vmem:[%s251 + $0x328] sm:$0xff]
                %356 = vst [vmem:[%s252 + $0x198] sm:$0xff] %v355
                %v357 = vld [vmem:[%s251 + $0x340] sm:$0xff]
                %358 = vst [vmem:[%s252 + $0x1a0] sm:$0xff] %v357
                %v359 = vld [vmem:[%s251 + $0x348] sm:$0xff]
                %360 = vst [vmem:[%s252 + $0x1a8] sm:$0xff] %v359
                %v361 = vld [vmem:[%s251 + $0x360] sm:$0xff]
                %362 = vst [vmem:[%s252 + $0x1b0] sm:$0xff] %v361
                %v363 = vld [vmem:[%s251 + $0x368] sm:$0xff]
                %364 = vst [vmem:[%s252 + $0x1b8] sm:$0xff] %v363
                %v365 = vld [vmem:[%s251 + $0x380] sm:$0xff]
                %366 = vst [vmem:[%s252 + $0x1c0] sm:$0xff] %v365
                %v367 = vld [vmem:[%s251 + $0x388] sm:$0xff]
                %368 = vst [vmem:[%s252 + $0x1c8] sm:$0xff] %v367
                %v369 = vld [vmem:[%s251 + $0x3a0] sm:$0xff]
                %370 = vst [vmem:[%s252 + $0x1d0] sm:$0xff] %v369
                %v371 = vld [vmem:[%s251 + $0x3a8] sm:$0xff]
                %372 = vst [vmem:[%s252 + $0x1d8] sm:$0xff] %v371
                %v373 = vld [vmem:[%s251 + $0x3c0] sm:$0xff]
                %374 = vst [vmem:[%s252 + $0x1e0] sm:$0xff] %v373
                %v375 = vld [vmem:[%s251 + $0x3c8] sm:$0xff]
                %376 = vst [vmem:[%s252 + $0x1e8] sm:$0xff] %v375
                %v377 = vld [vmem:[%s251 + $0x3e0] sm:$0xff]
                %378 = vst [vmem:[%s252 + $0x1f0] sm:$0xff] %v377
                %v379 = vld [vmem:[%s251 + $0x3e8] sm:$0xff]
                %380 = vst [vmem:[%s252 + $0x1f8] sm:$0xff] %v379
              $region45: #{vit_mim_forward.14} parent=39 // loop_footer
                %s250 = sadd.s32 1, %s246
              $region46: #{vit_mim_forward.14} parent=39 // loop_footer_branch
                %245 = sbr.rel target = $region42
              $region47: #{vit_mim_forward.14} parent=39 // loop_exit
                _
            $region40: #{vit_mim_forward.14} parent=35 // pred_fallthru
              _
            // Predicated region
            $region48: #{vit_mim_forward.14} parent=35 // pred_check
              _
            $region49: #{vit_mim_forward.14} parent=35 // pred_check_branch
              %382 = sbr.rel target = $region51
            $region50: #{vit_mim_forward.14} parent=35 // pred_region
              _
            $region51: #{vit_mim_forward.14} parent=35 // pred_fallthru
              _
          $region36: #{vit_mim_forward.14} parent=31 // pred_fallthru
            _
          %383 = vnop
        $region32: #{vit_mim_forward.14} parent=27 // pred_fallthru
          _
        // Predicated region
        $region52: #{vit_mim_forward.14} parent=27 // pred_check
          %p384 = pneg %p117
        $region53: #{vit_mim_forward.14} parent=27 // pred_check_branch
          %386 = sbr.rel (%p384) target = $region55
        $region54: #{vit_mim_forward.14} parent=27 // pred_region
          %s387 = sand.u32 %s107, 1
          %s388 = sand.u32 %s107, 1
          %s389 = smul.addr %s388, 512
          %s390 = scalar_lea.vmem [#allocation4], %s389
          %s391 = smul.u32 4, %s20
          %s392 = smul.addr %s391, 4
          %s393 = scalar_lea.vmem %s3, %s392
          // Predicated region
          $region56: #{vit_mim_forward.14} parent=54 // pred_check
            _
          $region57: #{vit_mim_forward.14} parent=54 // pred_check_branch
            %395 = sbr.rel (0) target = $region59
          $region58: #{vit_mim_forward.14} parent=54 // pred_region
            // Predicated region
            $region60: #{vit_mim_forward.14} parent=58 // pred_check
              _
            $region61: #{vit_mim_forward.14} parent=58 // pred_check_branch
              %397 = sbr.rel (0) target = $region63
            $region62: #{vit_mim_forward.14} parent=58 // pred_region
              loop: start=0, step=1, limit=1
              $region64: #{vit_mim_forward.14} parent=62 // loop_pre_header
                _
              $region65: #{vit_mim_forward.14} parent=62 // loop_header
                %s399 = sphi 0, %s403
                %p400 = scmp.ge.s32.totalorder %s399, 1
                %s404 = sphi %s393, %s393
                %s405 = sphi %s390, %s390
              $region66: #{vit_mim_forward.14} parent=62 // loop_header_branch
                %402 = sbr.rel (%p400) target = $region70
              $region67: #{vit_mim_forward.14} parent=62 // loop_body
                %v406 = vld [vmem:[%s404] sm:$0xff]
                %407 = vst [vmem:[%s405] sm:$0xff] %v406
                %v408 = vld [vmem:[%s404 + $0x8] sm:$0xff]
                %409 = vst [vmem:[%s405 + $0x8] sm:$0xff] %v408
                %v410 = vld [vmem:[%s404 + $0x20] sm:$0xff]
                %411 = vst [vmem:[%s405 + $0x10] sm:$0xff] %v410
                %v412 = vld [vmem:[%s404 + $0x28] sm:$0xff]
                %413 = vst [vmem:[%s405 + $0x18] sm:$0xff] %v412
                %v414 = vld [vmem:[%s404 + $0x40] sm:$0xff]
                %415 = vst [vmem:[%s405 + $0x20] sm:$0xff] %v414
                %v416 = vld [vmem:[%s404 + $0x48] sm:$0xff]
                %417 = vst [vmem:[%s405 + $0x28] sm:$0xff] %v416
                %v418 = vld [vmem:[%s404 + $0x60] sm:$0xff]
                %419 = vst [vmem:[%s405 + $0x30] sm:$0xff] %v418
                %v420 = vld [vmem:[%s404 + $0x68] sm:$0xff]
                %421 = vst [vmem:[%s405 + $0x38] sm:$0xff] %v420
                %v422 = vld [vmem:[%s404 + $0x80] sm:$0xff]
                %423 = vst [vmem:[%s405 + $0x40] sm:$0xff] %v422
                %v424 = vld [vmem:[%s404 + $0x88] sm:$0xff]
                %425 = vst [vmem:[%s405 + $0x48] sm:$0xff] %v424
                %v426 = vld [vmem:[%s404 + $0xa0] sm:$0xff]
                %427 = vst [vmem:[%s405 + $0x50] sm:$0xff] %v426
                %v428 = vld [vmem:[%s404 + $0xa8] sm:$0xff]
                %429 = vst [vmem:[%s405 + $0x58] sm:$0xff] %v428
                %v430 = vld [vmem:[%s404 + $0xc0] sm:$0xff]
                %431 = vst [vmem:[%s405 + $0x60] sm:$0xff] %v430
                %v432 = vld [vmem:[%s404 + $0xc8] sm:$0xff]
                %433 = vst [vmem:[%s405 + $0x68] sm:$0xff] %v432
                %v434 = vld [vmem:[%s404 + $0xe0] sm:$0xff]
                %435 = vst [vmem:[%s405 + $0x70] sm:$0xff] %v434
                %v436 = vld [vmem:[%s404 + $0xe8] sm:$0xff]
                %437 = vst [vmem:[%s405 + $0x78] sm:$0xff] %v436
                %v438 = vld [vmem:[%s404 + $0x100] sm:$0xff]
                %439 = vst [vmem:[%s405 + $0x80] sm:$0xff] %v438
                %v440 = vld [vmem:[%s404 + $0x108] sm:$0xff]
                %441 = vst [vmem:[%s405 + $0x88] sm:$0xff] %v440
                %v442 = vld [vmem:[%s404 + $0x120] sm:$0xff]
                %443 = vst [vmem:[%s405 + $0x90] sm:$0xff] %v442
                %v444 = vld [vmem:[%s404 + $0x128] sm:$0xff]
                %445 = vst [vmem:[%s405 + $0x98] sm:$0xff] %v444
                %v446 = vld [vmem:[%s404 + $0x140] sm:$0xff]
                %447 = vst [vmem:[%s405 + $0xa0] sm:$0xff] %v446
                %v448 = vld [vmem:[%s404 + $0x148] sm:$0xff]
                %449 = vst [vmem:[%s405 + $0xa8] sm:$0xff] %v448
                %v450 = vld [vmem:[%s404 + $0x160] sm:$0xff]
                %451 = vst [vmem:[%s405 + $0xb0] sm:$0xff] %v450
                %v452 = vld [vmem:[%s404 + $0x168] sm:$0xff]
                %453 = vst [vmem:[%s405 + $0xb8] sm:$0xff] %v452
                %v454 = vld [vmem:[%s404 + $0x180] sm:$0xff]
                %455 = vst [vmem:[%s405 + $0xc0] sm:$0xff] %v454
                %v456 = vld [vmem:[%s404 + $0x188] sm:$0xff]
                %457 = vst [vmem:[%s405 + $0xc8] sm:$0xff] %v456
                %v458 = vld [vmem:[%s404 + $0x1a0] sm:$0xff]
                %459 = vst [vmem:[%s405 + $0xd0] sm:$0xff] %v458
                %v460 = vld [vmem:[%s404 + $0x1a8] sm:$0xff]
                %461 = vst [vmem:[%s405 + $0xd8] sm:$0xff] %v460
                %v462 = vld [vmem:[%s404 + $0x1c0] sm:$0xff]
                %463 = vst [vmem:[%s405 + $0xe0] sm:$0xff] %v462
                %v464 = vld [vmem:[%s404 + $0x1c8] sm:$0xff]
                %465 = vst [vmem:[%s405 + $0xe8] sm:$0xff] %v464
                %v466 = vld [vmem:[%s404 + $0x1e0] sm:$0xff]
                %467 = vst [vmem:[%s405 + $0xf0] sm:$0xff] %v466
                %v468 = vld [vmem:[%s404 + $0x1e8] sm:$0xff]
                %469 = vst [vmem:[%s405 + $0xf8] sm:$0xff] %v468
                %v470 = vld [vmem:[%s404 + $0x200] sm:$0xff]
                %471 = vst [vmem:[%s405 + $0x100] sm:$0xff] %v470
                %v472 = vld [vmem:[%s404 + $0x208] sm:$0xff]
                %473 = vst [vmem:[%s405 + $0x108] sm:$0xff] %v472
                %v474 = vld [vmem:[%s404 + $0x220] sm:$0xff]
                %475 = vst [vmem:[%s405 + $0x110] sm:$0xff] %v474
                %v476 = vld [vmem:[%s404 + $0x228] sm:$0xff]
                %477 = vst [vmem:[%s405 + $0x118] sm:$0xff] %v476
                %v478 = vld [vmem:[%s404 + $0x240] sm:$0xff]
                %479 = vst [vmem:[%s405 + $0x120] sm:$0xff] %v478
                %v480 = vld [vmem:[%s404 + $0x248] sm:$0xff]
                %481 = vst [vmem:[%s405 + $0x128] sm:$0xff] %v480
                %v482 = vld [vmem:[%s404 + $0x260] sm:$0xff]
                %483 = vst [vmem:[%s405 + $0x130] sm:$0xff] %v482
                %v484 = vld [vmem:[%s404 + $0x268] sm:$0xff]
                %485 = vst [vmem:[%s405 + $0x138] sm:$0xff] %v484
                %v486 = vld [vmem:[%s404 + $0x280] sm:$0xff]
                %487 = vst [vmem:[%s405 + $0x140] sm:$0xff] %v486
                %v488 = vld [vmem:[%s404 + $0x288] sm:$0xff]
                %489 = vst [vmem:[%s405 + $0x148] sm:$0xff] %v488
                %v490 = vld [vmem:[%s404 + $0x2a0] sm:$0xff]
                %491 = vst [vmem:[%s405 + $0x150] sm:$0xff] %v490
                %v492 = vld [vmem:[%s404 + $0x2a8] sm:$0xff]
                %493 = vst [vmem:[%s405 + $0x158] sm:$0xff] %v492
                %v494 = vld [vmem:[%s404 + $0x2c0] sm:$0xff]
                %495 = vst [vmem:[%s405 + $0x160] sm:$0xff] %v494
                %v496 = vld [vmem:[%s404 + $0x2c8] sm:$0xff]
                %497 = vst [vmem:[%s405 + $0x168] sm:$0xff] %v496
                %v498 = vld [vmem:[%s404 + $0x2e0] sm:$0xff]
                %499 = vst [vmem:[%s405 + $0x170] sm:$0xff] %v498
                %v500 = vld [vmem:[%s404 + $0x2e8] sm:$0xff]
                %501 = vst [vmem:[%s405 + $0x178] sm:$0xff] %v500
                %v502 = vld [vmem:[%s404 + $0x300] sm:$0xff]
                %503 = vst [vmem:[%s405 + $0x180] sm:$0xff] %v502
                %v504 = vld [vmem:[%s404 + $0x308] sm:$0xff]
                %505 = vst [vmem:[%s405 + $0x188] sm:$0xff] %v504
                %v506 = vld [vmem:[%s404 + $0x320] sm:$0xff]
                %507 = vst [vmem:[%s405 + $0x190] sm:$0xff] %v506
                %v508 = vld [vmem:[%s404 + $0x328] sm:$0xff]
                %509 = vst [vmem:[%s405 + $0x198] sm:$0xff] %v508
                %v510 = vld [vmem:[%s404 + $0x340] sm:$0xff]
                %511 = vst [vmem:[%s405 + $0x1a0] sm:$0xff] %v510
                %v512 = vld [vmem:[%s404 + $0x348] sm:$0xff]
                %513 = vst [vmem:[%s405 + $0x1a8] sm:$0xff] %v512
                %v514 = vld [vmem:[%s404 + $0x360] sm:$0xff]
                %515 = vst [vmem:[%s405 + $0x1b0] sm:$0xff] %v514
                %v516 = vld [vmem:[%s404 + $0x368] sm:$0xff]
                %517 = vst [vmem:[%s405 + $0x1b8] sm:$0xff] %v516
                %v518 = vld [vmem:[%s404 + $0x380] sm:$0xff]
                %519 = vst [vmem:[%s405 + $0x1c0] sm:$0xff] %v518
                %v520 = vld [vmem:[%s404 + $0x388] sm:$0xff]
                %521 = vst [vmem:[%s405 + $0x1c8] sm:$0xff] %v520
                %v522 = vld [vmem:[%s404 + $0x3a0] sm:$0xff]
                %523 = vst [vmem:[%s405 + $0x1d0] sm:$0xff] %v522
                %v524 = vld [vmem:[%s404 + $0x3a8] sm:$0xff]
                %525 = vst [vmem:[%s405 + $0x1d8] sm:$0xff] %v524
                %v526 = vld [vmem:[%s404 + $0x3c0] sm:$0xff]
                %527 = vst [vmem:[%s405 + $0x1e0] sm:$0xff] %v526
                %v528 = vld [vmem:[%s404 + $0x3c8] sm:$0xff]
                %529 = vst [vmem:[%s405 + $0x1e8] sm:$0xff] %v528
                %v530 = vld [vmem:[%s404 + $0x3e0] sm:$0xff]
                %531 = vst [vmem:[%s405 + $0x1f0] sm:$0xff] %v530
                %v532 = vld [vmem:[%s404 + $0x3e8] sm:$0xff]
                %533 = vst [vmem:[%s405 + $0x1f8] sm:$0xff] %v532
              $region68: #{vit_mim_forward.14} parent=62 // loop_footer
                %s403 = sadd.s32 1, %s399
              $region69: #{vit_mim_forward.14} parent=62 // loop_footer_branch
                %398 = sbr.rel target = $region65
              $region70: #{vit_mim_forward.14} parent=62 // loop_exit
                _
            $region63: #{vit_mim_forward.14} parent=58 // pred_fallthru
              _
            // Predicated region
            $region71: #{vit_mim_forward.14} parent=58 // pred_check
              _
            $region72: #{vit_mim_forward.14} parent=58 // pred_check_branch
              %535 = sbr.rel target = $region74
            $region73: #{vit_mim_forward.14} parent=58 // pred_region
              _
            $region74: #{vit_mim_forward.14} parent=58 // pred_fallthru
              _
          $region59: #{vit_mim_forward.14} parent=54 // pred_fallthru
            _
          %536 = vnop
        $region55: #{vit_mim_forward.14} parent=27 // pred_fallthru
          _
        // Predicated region
        $region75: #{vit_mim_forward.14} parent=27 // pred_check
          %p537 = pneg %p143
        $region76: #{vit_mim_forward.14} parent=27 // pred_check_branch
          %539 = sbr.rel (%p537) target = $region78
        $region77: #{vit_mim_forward.14} parent=27 // pred_region
          %s540 = smul.u32 64, %s20
          %p541 = scmp.lt.s32.totalorder %s540, 127
          %s542 = scalar_select %p541, %s540, 127
          %s543 = smul.addr %s542, 2
          %s544 = smul.addr %s543, 4
          %s545 = scalar_lea.vmem %s4, %s544
          %s546 = smul.u32 64, %s20
        $region78: #{vit_mim_forward.14} parent=27 // pred_fallthru
          _
      $region28: #{vit_mim_forward.14} parent=5 // pred_fallthru
        _
      %p547 = scmp.le.s32.totalorder 1, %s12
      %p548 = scmp.lt.s32.totalorder %s12, 3
      %p549 = pnand %p547, %p548
      %p550 = pneg %p549
      // Predicated region
      $region79: #{vit_mim_forward.14} parent=5 // pred_check
        _
      $region80: #{vit_mim_forward.14} parent=5 // pred_check_branch
        %552 = sbr.rel (%p549) target = $region82
      $region81: #{vit_mim_forward.14} parent=5 // pred_region
        %s553 = ssub.s32 %s12, 1
        %s554 = sand.u32 %s84, 1
        %s555 = sand.u32 %s84, 1
        %s556 = smul.addr %s555, 512
        %s557 = scalar_lea.vmem [#allocation3], %s556
        // Predicated region
        $region83: #{vit_mim_forward.14} parent=81 // pred_check
          %p558 = pneg %p97
        $region84: #{vit_mim_forward.14} parent=81 // pred_check_branch
          %560 = sbr.rel (%p558) target = $region86
        $region85: #{vit_mim_forward.14} parent=81 // pred_region
          _
        $region86: #{vit_mim_forward.14} parent=81 // pred_fallthru
          _
        %s561 = sand.u32 %s110, 1
        %s562 = sand.u32 %s110, 1
        %s563 = smul.addr %s562, 512
        %s564 = scalar_lea.vmem [#allocation4], %s563
        // Predicated region
        $region87: #{vit_mim_forward.14} parent=81 // pred_check
          %p565 = pneg %p123
        $region88: #{vit_mim_forward.14} parent=81 // pred_check_branch
          %567 = sbr.rel (%p565) target = $region90
        $region89: #{vit_mim_forward.14} parent=81 // pred_region
          _
        $region90: #{vit_mim_forward.14} parent=81 // pred_fallthru
          _
        %s568 = smul.u32 4, %s21
        %p569 = scmp.lt.s32.totalorder %s568, 3
        %s570 = scalar_select %p569, %s568, 3
        %s571 = smul.addr %s570, 2
        %s572 = smul.addr %s571, 4
        %s573 = scalar_lea.vmem %s0, %s572
        %p574 = pneg %p50
        %p575 = pneg %p47
        %p576 = pneg %p71
        %p577 = pneg %p68
        %s578 = sand.u32 %s84, 1
        %s579 = sand.u32 %s84, 1
        %s580 = smul.addr %s579, 512
        %s581 = scalar_lea.vmem [#allocation3], %s580
        %p582 = pneg %p97
        %p583 = pneg %p94
        %s584 = sand.u32 %s110, 1
        %s585 = sand.u32 %s110, 1
        %s586 = smul.addr %s585, 512
        %s587 = scalar_lea.vmem [#allocation4], %s586
        %p588 = pneg %p123
        %p589 = pneg %p120
        %s590 = smul.u32 64, %s22
        %p591 = scmp.lt.s32.totalorder %s590, 127
        %s592 = scalar_select %p591, %s590, 127
        %s593 = smul.addr %s592, 2
        %s594 = smul.addr %s593, 4
        %s595 = scalar_lea.vmem %s4, %s594
        %p596 = pneg %p149
        %p597 = pneg %p146
        %p598 = pneg %p170
        %p599 = pneg %p167
        %p600 = pneg %p196
        %p601 = pneg %p193
        %s602 = smul.u32 4, %s21
        %p603 = scmp.lt.s32.totalorder %s602, 3
        %s604 = scalar_select %p603, %s602, 3
        %s605 = smul.addr %s604, 2
        %s606 = smul.addr %s605, 4
        %s607 = scalar_lea.vmem %s6, %s606
        %s608 = smul.u32 4, %s21
        %p609 = scmp.lt.s32.totalorder %s608, 3
        %s610 = scalar_select %p609, %s608, 3
        %s611 = smul.addr %s610, 2
        %s612 = smul.addr %s611, 4
        %s613 = scalar_lea.vmem %s0, %s612
        %s614 = smul.u32 4, %s21
        %s615 = smul.u32 4, %s22
        %s616 = smul.u32 4, %s22
        %s617 = smul.u32 64, %s22
        %p618 = scmp.lt.s32.totalorder %s617, 127
        %s619 = scalar_select %p618, %s617, 127
        %s620 = smul.addr %s619, 2
        %s621 = smul.addr %s620, 4
        %s622 = scalar_lea.vmem %s4, %s621
        %s623 = smul.u32 64, %s22
        %s624 = smul.u32 4, %s21
        %p625 = scmp.lt.s32.totalorder %s624, 3
        %s626 = scalar_select %p625, %s624, 3
        %s627 = smul.addr %s626, 2
        %s628 = smul.addr %s627, 4
        %s629 = scalar_lea.vmem %s6, %s628
        %s630 = smul.u32 4, %s21
        %p631 = scmp.eq.s32.totalorder %s22, 0
        // Predicated region
        $region91: #{vit_mim_forward.14} parent=81 // pred_check
          %p632 = pneg %p631
        $region92: #{vit_mim_forward.14} parent=81 // pred_check_branch
          %634 = sbr.rel (%p632) target = $region94
        $region93: #{vit_mim_forward.14} parent=81 // pred_region
          %635 = vst [vmem:[#allocation2] sm:$0xff] 0.0
          %636 = vst [vmem:[#allocation2 + $0x8] sm:$0xff] 0.0
          %637 = vst [vmem:[#allocation2 + $0x10] sm:$0xff] 0.0
          %638 = vst [vmem:[#allocation2 + $0x18] sm:$0xff] 0.0
          %639 = vst [vmem:[#allocation2 + $0x20] sm:$0xff] 0.0
          %640 = vst [vmem:[#allocation2 + $0x28] sm:$0xff] 0.0
          %641 = vst [vmem:[#allocation2 + $0x30] sm:$0xff] 0.0
          %642 = vst [vmem:[#allocation2 + $0x38] sm:$0xff] 0.0
        $region94: #{vit_mim_forward.14} parent=81 // pred_fallthru
          _
        %v643 = vld [vmem:[%s613] sm:$0xff]
        %v644 = vld [vmem:[%s613 + $0x8] sm:$0xff]
        %v645 = vld [vmem:[%s613 + $0x10] sm:$0xff]
        %v646 = vld [vmem:[%s613 + $0x18] sm:$0xff]
        %v647 = vunpack.c.l.bf16 %v643
        %v648 = vunpack.c.h.bf16 %v643
        %v649 = vunpack.c.l.bf16 %v644
        %v650 = vunpack.c.h.bf16 %v644
        %v651 = vunpack.c.l.bf16 %v645
        %v652 = vunpack.c.h.bf16 %v645
        %v653 = vunpack.c.l.bf16 %v646
        %v654 = vunpack.c.h.bf16 %v646
        %v655 = vmul.f32 %v647, %v647
        %v656 = vmul.f32 %v648, %v648
        %v657 = vmul.f32 %v649, %v649
        %v658 = vmul.f32 %v650, %v650
        %v659 = vmul.f32 %v651, %v651
        %v660 = vmul.f32 %v652, %v652
        %v661 = vmul.f32 %v653, %v653
        %v662 = vmul.f32 %v654, %v654
        %v663 = vadd.f32 %v655, %v656
        %664 = vadd.xlane.f32.xlu0 %v663
        %v665 = vpop.xlane.xlu0 %664
        %v666 = vadd.f32 %v657, %v658
        %667 = vadd.xlane.f32.xlu0 %v666
        %v668 = vpop.xlane.xlu0 %667
        %v669 = vadd.f32 %v659, %v660
        %670 = vadd.xlane.f32.xlu0 %v669
        %v671 = vpop.xlane.xlu0 %670
        %v672 = vadd.f32 %v661, %v662
        %673 = vadd.xlane.f32.xlu0 %v672
        %v674 = vpop.xlane.xlu0 %673
        %v675 = vrcp.pop 256.0
        %v676 = vmul.f32 %v665, %v675
        %v677 = vmul.f32 %v668, %v675
        %v678 = vmul.f32 %v671, %v675
        %v679 = vmul.f32 %v674, %v675
        %v680 = vadd.f32 %v676, 1e-06
        %v681 = vadd.f32 %v677, 1e-06
        %v682 = vadd.f32 %v678, 1e-06
        %v683 = vadd.f32 %v679, 1e-06
        %v684 = vrsqrt.pop %v680
        %v685 = vrsqrt.pop %v681
        %v686 = vrsqrt.pop %v682
        %v687 = vrsqrt.pop %v683
        %v688 = vmul.f32 %v647, %v684
        %v689 = vmul.f32 %v648, %v684
        %v690 = vmul.f32 %v649, %v685
        %v691 = vmul.f32 %v650, %v685
        %v692 = vmul.f32 %v651, %v686
        %v693 = vmul.f32 %v652, %v686
        %v694 = vmul.f32 %v653, %v687
        %v695 = vmul.f32 %v654, %v687
        %v696 = vld [vmem:[%s1] sm:$0x3]
        %v698 = vlaneseq
        %v699 = vshrl.u32 %v698, 7
        %v700 = vsub.s32 0, %v699
        %v701 = vrot.slane %v696, %v700
        %v702 = vlaneseq
        %v703 = vshrl.u32 %v702, 7
        %v704 = vsub.s32 1, %v703
        %v705 = vrot.slane %v696, %v704
        %v708 = vmul.f32 %v688, %v701
        %v709 = vmul.f32 %v689, %v705
        %v710 = vmul.f32 %v690, %v701
        %v711 = vmul.f32 %v691, %v705
        %v712 = vmul.f32 %v692, %v701
        %v713 = vmul.f32 %v693, %v705
        %v714 = vmul.f32 %v694, %v701
        %v715 = vmul.f32 %v695, %v705
        %v716 = vpack.c.bf16 %v710, %v708
        %v717 = vpack.c.bf16 %v711, %v709
        %v718 = vpack.c.bf16 %v714, %v712
        %v719 = vpack.c.bf16 %v715, %v713
        %v720 = vld [vmem:[%s557] sm:$0xff]
        %v721 = vld [vmem:[%s557 + $0x8] sm:$0xff]
        %v722 = vld [vmem:[%s557 + $0x10] sm:$0xff]
        %v723 = vld [vmem:[%s557 + $0x18] sm:$0xff]
        %v724 = vld [vmem:[%s557 + $0x20] sm:$0xff]
        %v725 = vld [vmem:[%s557 + $0x28] sm:$0xff]
        %v726 = vld [vmem:[%s557 + $0x30] sm:$0xff]
        %v727 = vld [vmem:[%s557 + $0x38] sm:$0xff]
        %v728 = vld [vmem:[%s557 + $0x40] sm:$0xff]
        %v729 = vld [vmem:[%s557 + $0x48] sm:$0xff]
        %v730 = vld [vmem:[%s557 + $0x50] sm:$0xff]
        %v731 = vld [vmem:[%s557 + $0x58] sm:$0xff]
        %v732 = vld [vmem:[%s557 + $0x60] sm:$0xff]
        %v733 = vld [vmem:[%s557 + $0x68] sm:$0xff]
        %v734 = vld [vmem:[%s557 + $0x70] sm:$0xff]
        %v735 = vld [vmem:[%s557 + $0x78] sm:$0xff]
        %v736 = vld [vmem:[%s557 + $0x80] sm:$0xff]
        %v737 = vld [vmem:[%s557 + $0x88] sm:$0xff]
        %v738 = vld [vmem:[%s557 + $0x90] sm:$0xff]
        %v739 = vld [vmem:[%s557 + $0x98] sm:$0xff]
        %v740 = vld [vmem:[%s557 + $0xa0] sm:$0xff]
        %v741 = vld [vmem:[%s557 + $0xa8] sm:$0xff]
        %v742 = vld [vmem:[%s557 + $0xb0] sm:$0xff]
        %v743 = vld [vmem:[%s557 + $0xb8] sm:$0xff]
        %v744 = vld [vmem:[%s557 + $0xc0] sm:$0xff]
        %v745 = vld [vmem:[%s557 + $0xc8] sm:$0xff]
        %v746 = vld [vmem:[%s557 + $0xd0] sm:$0xff]
        %v747 = vld [vmem:[%s557 + $0xd8] sm:$0xff]
        %v748 = vld [vmem:[%s557 + $0xe0] sm:$0xff]
        %v749 = vld [vmem:[%s557 + $0xe8] sm:$0xff]
        %v750 = vld [vmem:[%s557 + $0xf0] sm:$0xff]
        %v751 = vld [vmem:[%s557 + $0xf8] sm:$0xff]
        %v752 = vld [vmem:[%s557 + $0x100] sm:$0xff]
        %v753 = vld [vmem:[%s557 + $0x108] sm:$0xff]
        %v754 = vld [vmem:[%s557 + $0x110] sm:$0xff]
        %v755 = vld [vmem:[%s557 + $0x118] sm:$0xff]
        %v756 = vld [vmem:[%s557 + $0x120] sm:$0xff]
        %v757 = vld [vmem:[%s557 + $0x128] sm:$0xff]
        %v758 = vld [vmem:[%s557 + $0x130] sm:$0xff]
        %v759 = vld [vmem:[%s557 + $0x138] sm:$0xff]
        %v760 = vld [vmem:[%s557 + $0x140] sm:$0xff]
        %v761 = vld [vmem:[%s557 + $0x148] sm:$0xff]
        %v762 = vld [vmem:[%s557 + $0x150] sm:$0xff]
        %v763 = vld [vmem:[%s557 + $0x158] sm:$0xff]
        %v764 = vld [vmem:[%s557 + $0x160] sm:$0xff]
        %v765 = vld [vmem:[%s557 + $0x168] sm:$0xff]
        %v766 = vld [vmem:[%s557 + $0x170] sm:$0xff]
        %v767 = vld [vmem:[%s557 + $0x178] sm:$0xff]
        %v768 = vld [vmem:[%s557 + $0x180] sm:$0xff]
        %v769 = vld [vmem:[%s557 + $0x188] sm:$0xff]
        %v770 = vld [vmem:[%s557 + $0x190] sm:$0xff]
        %v771 = vld [vmem:[%s557 + $0x198] sm:$0xff]
        %v772 = vld [vmem:[%s557 + $0x1a0] sm:$0xff]
        %v773 = vld [vmem:[%s557 + $0x1a8] sm:$0xff]
        %v774 = vld [vmem:[%s557 + $0x1b0] sm:$0xff]
        %v775 = vld [vmem:[%s557 + $0x1b8] sm:$0xff]
        %v776 = vld [vmem:[%s557 + $0x1c0] sm:$0xff]
        %v777 = vld [vmem:[%s557 + $0x1c8] sm:$0xff]
        %v778 = vld [vmem:[%s557 + $0x1d0] sm:$0xff]
        %v779 = vld [vmem:[%s557 + $0x1d8] sm:$0xff]
        %v780 = vld [vmem:[%s557 + $0x1e0] sm:$0xff]
        %v781 = vld [vmem:[%s557 + $0x1e8] sm:$0xff]
        %v782 = vld [vmem:[%s557 + $0x1f0] sm:$0xff]
        %v783 = vld [vmem:[%s557 + $0x1f8] sm:$0xff]
        %v848 = vunpack.c.l.b16 %v720
        %v849 = vunpack.c.h.b16 %v720
        %v850 = vunpack.c.l.b16 %v721
        %v851 = vunpack.c.h.b16 %v721
        %v852 = vunpack.c.l.b16 %v722
        %v853 = vunpack.c.h.b16 %v722
        %v854 = vunpack.c.l.b16 %v723
        %v855 = vunpack.c.h.b16 %v723
        %v856 = vunpack.c.l.b16 %v724
        %v857 = vunpack.c.h.b16 %v724
        %v858 = vunpack.c.l.b16 %v725
        %v859 = vunpack.c.h.b16 %v725
        %v860 = vunpack.c.l.b16 %v726
        %v861 = vunpack.c.h.b16 %v726
        %v862 = vunpack.c.l.b16 %v727
        %v863 = vunpack.c.h.b16 %v727
        %v864 = vunpack.c.l.b16 %v728
        %v865 = vunpack.c.h.b16 %v728
        %v866 = vunpack.c.l.b16 %v729
        %v867 = vunpack.c.h.b16 %v729
        %v868 = vunpack.c.l.b16 %v730
        %v869 = vunpack.c.h.b16 %v730
        %v870 = vunpack.c.l.b16 %v731
        %v871 = vunpack.c.h.b16 %v731
        %v872 = vunpack.c.l.b16 %v732
        %v873 = vunpack.c.h.b16 %v732
        %v874 = vunpack.c.l.b16 %v733
        %v875 = vunpack.c.h.b16 %v733
        %v876 = vunpack.c.l.b16 %v734
        %v877 = vunpack.c.h.b16 %v734
        %v878 = vunpack.c.l.b16 %v735
        %v879 = vunpack.c.h.b16 %v735
        %v880 = vunpack.c.l.b16 %v736
        %v881 = vunpack.c.h.b16 %v736
        %v882 = vunpack.c.l.b16 %v737
        %v883 = vunpack.c.h.b16 %v737
        %v884 = vunpack.c.l.b16 %v738
        %v885 = vunpack.c.h.b16 %v738
        %v886 = vunpack.c.l.b16 %v739
        %v887 = vunpack.c.h.b16 %v739
        %v888 = vunpack.c.l.b16 %v740
        %v889 = vunpack.c.h.b16 %v740
        %v890 = vunpack.c.l.b16 %v741
        %v891 = vunpack.c.h.b16 %v741
        %v892 = vunpack.c.l.b16 %v742
        %v893 = vunpack.c.h.b16 %v742
        %v894 = vunpack.c.l.b16 %v743
        %v895 = vunpack.c.h.b16 %v743
        %v896 = vunpack.c.l.b16 %v744
        %v897 = vunpack.c.h.b16 %v744
        %v898 = vunpack.c.l.b16 %v745
        %v899 = vunpack.c.h.b16 %v745
        %v900 = vunpack.c.l.b16 %v746
        %v901 = vunpack.c.h.b16 %v746
        %v902 = vunpack.c.l.b16 %v747
        %v903 = vunpack.c.h.b16 %v747
        %v904 = vunpack.c.l.b16 %v748
        %v905 = vunpack.c.h.b16 %v748
        %v906 = vunpack.c.l.b16 %v749
        %v907 = vunpack.c.h.b16 %v749
        %v908 = vunpack.c.l.b16 %v750
        %v909 = vunpack.c.h.b16 %v750
        %v910 = vunpack.c.l.b16 %v751
        %v911 = vunpack.c.h.b16 %v751
        %v912 = vunpack.c.l.b16 %v752
        %v913 = vunpack.c.h.b16 %v752
        %v914 = vunpack.c.l.b16 %v753
        %v915 = vunpack.c.h.b16 %v753
        %v916 = vunpack.c.l.b16 %v754
        %v917 = vunpack.c.h.b16 %v754
        %v918 = vunpack.c.l.b16 %v755
        %v919 = vunpack.c.h.b16 %v755
        %v920 = vunpack.c.l.b16 %v756
        %v921 = vunpack.c.h.b16 %v756
        %v922 = vunpack.c.l.b16 %v757
        %v923 = vunpack.c.h.b16 %v757
        %v924 = vunpack.c.l.b16 %v758
        %v925 = vunpack.c.h.b16 %v758
        %v926 = vunpack.c.l.b16 %v759
        %v927 = vunpack.c.h.b16 %v759
        %v928 = vunpack.c.l.b16 %v760
        %v929 = vunpack.c.h.b16 %v760
        %v930 = vunpack.c.l.b16 %v761
        %v931 = vunpack.c.h.b16 %v761
        %v932 = vunpack.c.l.b16 %v762
        %v933 = vunpack.c.h.b16 %v762
        %v934 = vunpack.c.l.b16 %v763
        %v935 = vunpack.c.h.b16 %v763
        %v936 = vunpack.c.l.b16 %v764
        %v937 = vunpack.c.h.b16 %v764
        %v938 = vunpack.c.l.b16 %v765
        %v939 = vunpack.c.h.b16 %v765
        %v940 = vunpack.c.l.b16 %v766
        %v941 = vunpack.c.h.b16 %v766
        %v942 = vunpack.c.l.b16 %v767
        %v943 = vunpack.c.h.b16 %v767
        %v944 = vunpack.c.l.b16 %v768
        %v945 = vunpack.c.h.b16 %v768
        %v946 = vunpack.c.l.b16 %v769
        %v947 = vunpack.c.h.b16 %v769
        %v948 = vunpack.c.l.b16 %v770
        %v949 = vunpack.c.h.b16 %v770
        %v950 = vunpack.c.l.b16 %v771
        %v951 = vunpack.c.h.b16 %v771
        %v952 = vunpack.c.l.b16 %v772
        %v953 = vunpack.c.h.b16 %v772
        %v954 = vunpack.c.l.b16 %v773
        %v955 = vunpack.c.h.b16 %v773
        %v956 = vunpack.c.l.b16 %v774
        %v957 = vunpack.c.h.b16 %v774
        %v958 = vunpack.c.l.b16 %v775
        %v959 = vunpack.c.h.b16 %v775
        %v960 = vunpack.c.l.b16 %v776
        %v961 = vunpack.c.h.b16 %v776
        %v962 = vunpack.c.l.b16 %v777
        %v963 = vunpack.c.h.b16 %v777
        %v964 = vunpack.c.l.b16 %v778
        %v965 = vunpack.c.h.b16 %v778
        %v966 = vunpack.c.l.b16 %v779
        %v967 = vunpack.c.h.b16 %v779
        %v968 = vunpack.c.l.b16 %v780
        %v969 = vunpack.c.h.b16 %v780
        %v970 = vunpack.c.l.b16 %v781
        %v971 = vunpack.c.h.b16 %v781
        %v972 = vunpack.c.l.b16 %v782
        %v973 = vunpack.c.h.b16 %v782
        %v974 = vunpack.c.l.b16 %v783
        %v975 = vunpack.c.h.b16 %v783
        %v976 = vpack.c.b16 %v852, %v848
        %v977 = vpack.c.b16 %v853, %v849
        %v978 = vpack.c.b16 %v854, %v850
        %v979 = vpack.c.b16 %v855, %v851
        %v980 = vpack.c.b16 %v860, %v856
        %v981 = vpack.c.b16 %v861, %v857
        %v982 = vpack.c.b16 %v862, %v858
        %v983 = vpack.c.b16 %v863, %v859
        %v984 = vpack.c.b16 %v868, %v864
        %v985 = vpack.c.b16 %v869, %v865
        %v986 = vpack.c.b16 %v870, %v866
        %v987 = vpack.c.b16 %v871, %v867
        %v988 = vpack.c.b16 %v876, %v872
        %v989 = vpack.c.b16 %v877, %v873
        %v990 = vpack.c.b16 %v878, %v874
        %v991 = vpack.c.b16 %v879, %v875
        %v992 = vpack.c.b16 %v884, %v880
        %v993 = vpack.c.b16 %v885, %v881
        %v994 = vpack.c.b16 %v886, %v882
        %v995 = vpack.c.b16 %v887, %v883
        %v996 = vpack.c.b16 %v892, %v888
        %v997 = vpack.c.b16 %v893, %v889
        %v998 = vpack.c.b16 %v894, %v890
        %v999 = vpack.c.b16 %v895, %v891
        %v1000 = vpack.c.b16 %v900, %v896
        %v1001 = vpack.c.b16 %v901, %v897
        %v1002 = vpack.c.b16 %v902, %v898
        %v1003 = vpack.c.b16 %v903, %v899
        %v1004 = vpack.c.b16 %v908, %v904
        %v1005 = vpack.c.b16 %v909, %v905
        %v1006 = vpack.c.b16 %v910, %v906
        %v1007 = vpack.c.b16 %v911, %v907
        %v1008 = vpack.c.b16 %v916, %v912
        %v1009 = vpack.c.b16 %v917, %v913
        %v1010 = vpack.c.b16 %v918, %v914
        %v1011 = vpack.c.b16 %v919, %v915
        %v1012 = vpack.c.b16 %v924, %v920
        %v1013 = vpack.c.b16 %v925, %v921
        %v1014 = vpack.c.b16 %v926, %v922
        %v1015 = vpack.c.b16 %v927, %v923
        %v1016 = vpack.c.b16 %v932, %v928
        %v1017 = vpack.c.b16 %v933, %v929
        %v1018 = vpack.c.b16 %v934, %v930
        %v1019 = vpack.c.b16 %v935, %v931
        %v1020 = vpack.c.b16 %v940, %v936
        %v1021 = vpack.c.b16 %v941, %v937
        %v1022 = vpack.c.b16 %v942, %v938
        %v1023 = vpack.c.b16 %v943, %v939
        %v1024 = vpack.c.b16 %v948, %v944
        %v1025 = vpack.c.b16 %v949, %v945
        %v1026 = vpack.c.b16 %v950, %v946
        %v1027 = vpack.c.b16 %v951, %v947
        %v1028 = vpack.c.b16 %v956, %v952
        %v1029 = vpack.c.b16 %v957, %v953
        %v1030 = vpack.c.b16 %v958, %v954
        %v1031 = vpack.c.b16 %v959, %v955
        %v1032 = vpack.c.b16 %v964, %v960
        %v1033 = vpack.c.b16 %v965, %v961
        %v1034 = vpack.c.b16 %v966, %v962
        %v1035 = vpack.c.b16 %v967, %v963
        %v1036 = vpack.c.b16 %v972, %v968
        %v1037 = vpack.c.b16 %v973, %v969
        %v1038 = vpack.c.b16 %v974, %v970
        %v1039 = vpack.c.b16 %v975, %v971
        %1104 = vmatprep.subr.bf16.mxu0 %v1005
        %1105 = vmatpush1.bf16.msra.mxu0 %v1004
        %1106 = vmatprep.subr.bf16.mxu0 %v1001
        %1107 = vmatpush1.bf16.msra.mxu0 %v1000
        %1108 = vmatprep.subr.bf16.mxu0 %v997
        %1109 = vmatpush1.bf16.msra.mxu0 %v996
        %1110 = vmatprep.subr.bf16.mxu0 %v993
        %1111 = vmatpush1.bf16.msra.mxu0 %v992
        %1112 = vmatprep.subr.bf16.mxu0 %v989
        %1113 = vmatpush1.bf16.msra.mxu0 %v988
        %1114 = vmatprep.subr.bf16.mxu0 %v985
        %1115 = vmatpush1.bf16.msra.mxu0 %v984
        %1116 = vmatprep.subr.bf16.mxu0 %v981
        %1117 = vmatpush1.bf16.msra.mxu0 %v980
        %1118 = vmatprep.subr.bf16.mxu0 %v977
        %1119 = vmatpush1.bf16.msra.mxu0 %v976
        %1120 = vmatprep.subr.bf16.mxu0 %v1037
        %1121 = vmatpush2.bf16.msra.mxu0 %v1036
        %1122 = vmatprep.subr.bf16.mxu0 %v1033
        %1123 = vmatpush2.bf16.msra.mxu0 %v1032
        %1124 = vmatprep.subr.bf16.mxu0 %v1029
        %1125 = vmatpush2.bf16.msra.mxu0 %v1028
        %1126 = vmatprep.subr.bf16.mxu0 %v1025
        %1127 = vmatpush2.bf16.msra.mxu0 %v1024
        %1128 = vmatprep.subr.bf16.mxu0 %v1021
        %1129 = vmatpush2.bf16.msra.mxu0 %v1020
        %1130 = vmatprep.subr.bf16.mxu0 %v1017
        %1131 = vmatpush2.bf16.msra.mxu0 %v1016
        %1132 = vmatprep.subr.bf16.mxu0 %v1013
        %1133 = vmatpush2.bf16.msra.mxu0 %v1012
        %1134 = vmatprep.subr.bf16.mxu0 %v1009
        %1135 = vmatpush2.bf16.msra.mxu0 %v1008
        %1136 = vmatprep.mubr.bf16.mxu0 %v717
        %1137 = vmatmul.mubr.bf16.gmra.mxu0 %v716
        %v1138 = vpop.f32.mrf.mxu0
        %v1139 = vadd.f32 0.0, %v1138
        %v1140 = vpop.f32.mrf.mxu0
        %v1141 = vadd.f32 0.0, %v1140
        %v1142 = vpop.f32.mrf.mxu0
        %v1143 = vadd.f32 0.0, %v1142
        %v1144 = vpop.f32.mrf.mxu0
        %v1145 = vadd.f32 0.0, %v1144
        %1146 = vmatprep.mubr.bf16.mxu0 %v719
        %1147 = vmatmul.mubr.bf16.gmra.mxu0 %v718
        %v1148 = vpop.f32.mrf.mxu0
        %v1149 = vadd.f32 0.0, %v1148
        %v1150 = vpop.f32.mrf.mxu0
        %v1151 = vadd.f32 0.0, %v1150
        %v1152 = vpop.f32.mrf.mxu0
        %v1153 = vadd.f32 0.0, %v1152
        %v1154 = vpop.f32.mrf.mxu0
        %v1155 = vadd.f32 0.0, %v1154
        %1156 = vdwg.mxu0
        %1157 = vmatprep.subr.bf16.mxu0 %v1007
        %1158 = vmatpush1.bf16.msra.mxu0 %v1006
        %1159 = vmatprep.subr.bf16.mxu0 %v1003
        %1160 = vmatpush1.bf16.msra.mxu0 %v1002
        %1161 = vmatprep.subr.bf16.mxu0 %v999
        %1162 = vmatpush1.bf16.msra.mxu0 %v998
        %1163 = vmatprep.subr.bf16.mxu0 %v995
        %1164 = vmatpush1.bf16.msra.mxu0 %v994
        %1165 = vmatprep.subr.bf16.mxu0 %v991
        %1166 = vmatpush1.bf16.msra.mxu0 %v990
        %1167 = vmatprep.subr.bf16.mxu0 %v987
        %1168 = vmatpush1.bf16.msra.mxu0 %v986
        %1169 = vmatprep.subr.bf16.mxu0 %v983
        %1170 = vmatpush1.bf16.msra.mxu0 %v982
        %1171 = vmatprep.subr.bf16.mxu0 %v979
        %1172 = vmatpush1.bf16.msra.mxu0 %v978
        %1173 = vmatprep.subr.bf16.mxu0 %v1039
        %1174 = vmatpush2.bf16.msra.mxu0 %v1038
        %1175 = vmatprep.subr.bf16.mxu0 %v1035
        %1176 = vmatpush2.bf16.msra.mxu0 %v1034
        %1177 = vmatprep.subr.bf16.mxu0 %v1031
        %1178 = vmatpush2.bf16.msra.mxu0 %v1030
        %1179 = vmatprep.subr.bf16.mxu0 %v1027
        %1180 = vmatpush2.bf16.msra.mxu0 %v1026
        %1181 = vmatprep.subr.bf16.mxu0 %v1023
        %1182 = vmatpush2.bf16.msra.mxu0 %v1022
        %1183 = vmatprep.subr.bf16.mxu0 %v1019
        %1184 = vmatpush2.bf16.msra.mxu0 %v1018
        %1185 = vmatprep.subr.bf16.mxu0 %v1015
        %1186 = vmatpush2.bf16.msra.mxu0 %v1014
        %1187 = vmatprep.subr.bf16.mxu0 %v1011
        %1188 = vmatpush2.bf16.msra.mxu0 %v1010
        %1189 = vmatprep.mubr.bf16.mxu0 %v717
        %1190 = vmatmul.mubr.bf16.gmra.mxu0 %v716
        %v1191 = vpop.f32.mrf.mxu0
        %v1192 = vadd.f32 0.0, %v1191
        %v1193 = vpop.f32.mrf.mxu0
        %v1194 = vadd.f32 0.0, %v1193
        %v1195 = vpop.f32.mrf.mxu0
        %v1196 = vadd.f32 0.0, %v1195
        %v1197 = vpop.f32.mrf.mxu0
        %v1198 = vadd.f32 0.0, %v1197
        %1199 = vmatprep.mubr.bf16.mxu0 %v719
        %1200 = vmatmul.mubr.bf16.gmra.mxu0 %v718
        %v1201 = vpop.f32.mrf.mxu0
        %v1202 = vadd.f32 0.0, %v1201
        %v1203 = vpop.f32.mrf.mxu0
        %v1204 = vadd.f32 0.0, %v1203
        %v1205 = vpop.f32.mrf.mxu0
        %v1206 = vadd.f32 0.0, %v1205
        %v1207 = vpop.f32.mrf.mxu0
        %v1208 = vadd.f32 0.0, %v1207
        %1209 = vdwg.mxu0
        %v1210 = vld [vmem:[%s564] sm:$0xff]
        %v1211 = vld [vmem:[%s564 + $0x8] sm:$0xff]
        %v1212 = vld [vmem:[%s564 + $0x10] sm:$0xff]
        %v1213 = vld [vmem:[%s564 + $0x18] sm:$0xff]
        %v1214 = vld [vmem:[%s564 + $0x20] sm:$0xff]
        %v1215 = vld [vmem:[%s564 + $0x28] sm:$0xff]
        %v1216 = vld [vmem:[%s564 + $0x30] sm:$0xff]
        %v1217 = vld [vmem:[%s564 + $0x38] sm:$0xff]
        %v1218 = vld [vmem:[%s564 + $0x40] sm:$0xff]
        %v1219 = vld [vmem:[%s564 + $0x48] sm:$0xff]
        %v1220 = vld [vmem:[%s564 + $0x50] sm:$0xff]
        %v1221 = vld [vmem:[%s564 + $0x58] sm:$0xff]
        %v1222 = vld [vmem:[%s564 + $0x60] sm:$0xff]
        %v1223 = vld [vmem:[%s564 + $0x68] sm:$0xff]
        %v1224 = vld [vmem:[%s564 + $0x70] sm:$0xff]
        %v1225 = vld [vmem:[%s564 + $0x78] sm:$0xff]
        %v1226 = vld [vmem:[%s564 + $0x80] sm:$0xff]
        %v1227 = vld [vmem:[%s564 + $0x88] sm:$0xff]
        %v1228 = vld [vmem:[%s564 + $0x90] sm:$0xff]
        %v1229 = vld [vmem:[%s564 + $0x98] sm:$0xff]
        %v1230 = vld [vmem:[%s564 + $0xa0] sm:$0xff]
        %v1231 = vld [vmem:[%s564 + $0xa8] sm:$0xff]
        %v1232 = vld [vmem:[%s564 + $0xb0] sm:$0xff]
        %v1233 = vld [vmem:[%s564 + $0xb8] sm:$0xff]
        %v1234 = vld [vmem:[%s564 + $0xc0] sm:$0xff]
        %v1235 = vld [vmem:[%s564 + $0xc8] sm:$0xff]
        %v1236 = vld [vmem:[%s564 + $0xd0] sm:$0xff]
        %v1237 = vld [vmem:[%s564 + $0xd8] sm:$0xff]
        %v1238 = vld [vmem:[%s564 + $0xe0] sm:$0xff]
        %v1239 = vld [vmem:[%s564 + $0xe8] sm:$0xff]
        %v1240 = vld [vmem:[%s564 + $0xf0] sm:$0xff]
        %v1241 = vld [vmem:[%s564 + $0xf8] sm:$0xff]
        %v1242 = vld [vmem:[%s564 + $0x100] sm:$0xff]
        %v1243 = vld [vmem:[%s564 + $0x108] sm:$0xff]
        %v1244 = vld [vmem:[%s564 + $0x110] sm:$0xff]
        %v1245 = vld [vmem:[%s564 + $0x118] sm:$0xff]
        %v1246 = vld [vmem:[%s564 + $0x120] sm:$0xff]
        %v1247 = vld [vmem:[%s564 + $0x128] sm:$0xff]
        %v1248 = vld [vmem:[%s564 + $0x130] sm:$0xff]
        %v1249 = vld [vmem:[%s564 + $0x138] sm:$0xff]
        %v1250 = vld [vmem:[%s564 + $0x140] sm:$0xff]
        %v1251 = vld [vmem:[%s564 + $0x148] sm:$0xff]
        %v1252 = vld [vmem:[%s564 + $0x150] sm:$0xff]
        %v1253 = vld [vmem:[%s564 + $0x158] sm:$0xff]
        %v1254 = vld [vmem:[%s564 + $0x160] sm:$0xff]
        %v1255 = vld [vmem:[%s564 + $0x168] sm:$0xff]
        %v1256 = vld [vmem:[%s564 + $0x170] sm:$0xff]
        %v1257 = vld [vmem:[%s564 + $0x178] sm:$0xff]
        %v1258 = vld [vmem:[%s564 + $0x180] sm:$0xff]
        %v1259 = vld [vmem:[%s564 + $0x188] sm:$0xff]
        %v1260 = vld [vmem:[%s564 + $0x190] sm:$0xff]
        %v1261 = vld [vmem:[%s564 + $0x198] sm:$0xff]
        %v1262 = vld [vmem:[%s564 + $0x1a0] sm:$0xff]
        %v1263 = vld [vmem:[%s564 + $0x1a8] sm:$0xff]
        %v1264 = vld [vmem:[%s564 + $0x1b0] sm:$0xff]
        %v1265 = vld [vmem:[%s564 + $0x1b8] sm:$0xff]
        %v1266 = vld [vmem:[%s564 + $0x1c0] sm:$0xff]
        %v1267 = vld [vmem:[%s564 + $0x1c8] sm:$0xff]
        %v1268 = vld [vmem:[%s564 + $0x1d0] sm:$0xff]
        %v1269 = vld [vmem:[%s564 + $0x1d8] sm:$0xff]
        %v1270 = vld [vmem:[%s564 + $0x1e0] sm:$0xff]
        %v1271 = vld [vmem:[%s564 + $0x1e8] sm:$0xff]
        %v1272 = vld [vmem:[%s564 + $0x1f0] sm:$0xff]
        %v1273 = vld [vmem:[%s564 + $0x1f8] sm:$0xff]
        %v1338 = vunpack.c.l.b16 %v1210
        %v1339 = vunpack.c.h.b16 %v1210
        %v1340 = vunpack.c.l.b16 %v1211
        %v1341 = vunpack.c.h.b16 %v1211
        %v1342 = vunpack.c.l.b16 %v1212
        %v1343 = vunpack.c.h.b16 %v1212
        %v1344 = vunpack.c.l.b16 %v1213
        %v1345 = vunpack.c.h.b16 %v1213
        %v1346 = vunpack.c.l.b16 %v1214
        %v1347 = vunpack.c.h.b16 %v1214
        %v1348 = vunpack.c.l.b16 %v1215
        %v1349 = vunpack.c.h.b16 %v1215
        %v1350 = vunpack.c.l.b16 %v1216
        %v1351 = vunpack.c.h.b16 %v1216
        %v1352 = vunpack.c.l.b16 %v1217
        %v1353 = vunpack.c.h.b16 %v1217
        %v1354 = vunpack.c.l.b16 %v1218
        %v1355 = vunpack.c.h.b16 %v1218
        %v1356 = vunpack.c.l.b16 %v1219
        %v1357 = vunpack.c.h.b16 %v1219
        %v1358 = vunpack.c.l.b16 %v1220
        %v1359 = vunpack.c.h.b16 %v1220
        %v1360 = vunpack.c.l.b16 %v1221
        %v1361 = vunpack.c.h.b16 %v1221
        %v1362 = vunpack.c.l.b16 %v1222
        %v1363 = vunpack.c.h.b16 %v1222
        %v1364 = vunpack.c.l.b16 %v1223
        %v1365 = vunpack.c.h.b16 %v1223
        %v1366 = vunpack.c.l.b16 %v1224
        %v1367 = vunpack.c.h.b16 %v1224
        %v1368 = vunpack.c.l.b16 %v1225
        %v1369 = vunpack.c.h.b16 %v1225
        %v1370 = vunpack.c.l.b16 %v1226
        %v1371 = vunpack.c.h.b16 %v1226
        %v1372 = vunpack.c.l.b16 %v1227
        %v1373 = vunpack.c.h.b16 %v1227
        %v1374 = vunpack.c.l.b16 %v1228
        %v1375 = vunpack.c.h.b16 %v1228
        %v1376 = vunpack.c.l.b16 %v1229
        %v1377 = vunpack.c.h.b16 %v1229
        %v1378 = vunpack.c.l.b16 %v1230
        %v1379 = vunpack.c.h.b16 %v1230
        %v1380 = vunpack.c.l.b16 %v1231
        %v1381 = vunpack.c.h.b16 %v1231
        %v1382 = vunpack.c.l.b16 %v1232
        %v1383 = vunpack.c.h.b16 %v1232
        %v1384 = vunpack.c.l.b16 %v1233
        %v1385 = vunpack.c.h.b16 %v1233
        %v1386 = vunpack.c.l.b16 %v1234
        %v1387 = vunpack.c.h.b16 %v1234
        %v1388 = vunpack.c.l.b16 %v1235
        %v1389 = vunpack.c.h.b16 %v1235
        %v1390 = vunpack.c.l.b16 %v1236
        %v1391 = vunpack.c.h.b16 %v1236
        %v1392 = vunpack.c.l.b16 %v1237
        %v1393 = vunpack.c.h.b16 %v1237
        %v1394 = vunpack.c.l.b16 %v1238
        %v1395 = vunpack.c.h.b16 %v1238
        %v1396 = vunpack.c.l.b16 %v1239
        %v1397 = vunpack.c.h.b16 %v1239
        %v1398 = vunpack.c.l.b16 %v1240
        %v1399 = vunpack.c.h.b16 %v1240
        %v1400 = vunpack.c.l.b16 %v1241
        %v1401 = vunpack.c.h.b16 %v1241
        %v1402 = vunpack.c.l.b16 %v1242
        %v1403 = vunpack.c.h.b16 %v1242
        %v1404 = vunpack.c.l.b16 %v1243
        %v1405 = vunpack.c.h.b16 %v1243
        %v1406 = vunpack.c.l.b16 %v1244
        %v1407 = vunpack.c.h.b16 %v1244
        %v1408 = vunpack.c.l.b16 %v1245
        %v1409 = vunpack.c.h.b16 %v1245
        %v1410 = vunpack.c.l.b16 %v1246
        %v1411 = vunpack.c.h.b16 %v1246
        %v1412 = vunpack.c.l.b16 %v1247
        %v1413 = vunpack.c.h.b16 %v1247
        %v1414 = vunpack.c.l.b16 %v1248
        %v1415 = vunpack.c.h.b16 %v1248
        %v1416 = vunpack.c.l.b16 %v1249
        %v1417 = vunpack.c.h.b16 %v1249
        %v1418 = vunpack.c.l.b16 %v1250
        %v1419 = vunpack.c.h.b16 %v1250
        %v1420 = vunpack.c.l.b16 %v1251
        %v1421 = vunpack.c.h.b16 %v1251
        %v1422 = vunpack.c.l.b16 %v1252
        %v1423 = vunpack.c.h.b16 %v1252
        %v1424 = vunpack.c.l.b16 %v1253
        %v1425 = vunpack.c.h.b16 %v1253
        %v1426 = vunpack.c.l.b16 %v1254
        %v1427 = vunpack.c.h.b16 %v1254
        %v1428 = vunpack.c.l.b16 %v1255
        %v1429 = vunpack.c.h.b16 %v1255
        %v1430 = vunpack.c.l.b16 %v1256
        %v1431 = vunpack.c.h.b16 %v1256
        %v1432 = vunpack.c.l.b16 %v1257
        %v1433 = vunpack.c.h.b16 %v1257
        %v1434 = vunpack.c.l.b16 %v1258
        %v1435 = vunpack.c.h.b16 %v1258
        %v1436 = vunpack.c.l.b16 %v1259
        %v1437 = vunpack.c.h.b16 %v1259
        %v1438 = vunpack.c.l.b16 %v1260
        %v1439 = vunpack.c.h.b16 %v1260
        %v1440 = vunpack.c.l.b16 %v1261
        %v1441 = vunpack.c.h.b16 %v1261
        %v1442 = vunpack.c.l.b16 %v1262
        %v1443 = vunpack.c.h.b16 %v1262
        %v1444 = vunpack.c.l.b16 %v1263
        %v1445 = vunpack.c.h.b16 %v1263
        %v1446 = vunpack.c.l.b16 %v1264
        %v1447 = vunpack.c.h.b16 %v1264
        %v1448 = vunpack.c.l.b16 %v1265
        %v1449 = vunpack.c.h.b16 %v1265
        %v1450 = vunpack.c.l.b16 %v1266
        %v1451 = vunpack.c.h.b16 %v1266
        %v1452 = vunpack.c.l.b16 %v1267
        %v1453 = vunpack.c.h.b16 %v1267
        %v1454 = vunpack.c.l.b16 %v1268
        %v1455 = vunpack.c.h.b16 %v1268
        %v1456 = vunpack.c.l.b16 %v1269
        %v1457 = vunpack.c.h.b16 %v1269
        %v1458 = vunpack.c.l.b16 %v1270
        %v1459 = vunpack.c.h.b16 %v1270
        %v1460 = vunpack.c.l.b16 %v1271
        %v1461 = vunpack.c.h.b16 %v1271
        %v1462 = vunpack.c.l.b16 %v1272
        %v1463 = vunpack.c.h.b16 %v1272
        %v1464 = vunpack.c.l.b16 %v1273
        %v1465 = vunpack.c.h.b16 %v1273
        %v1466 = vpack.c.b16 %v1342, %v1338
        %v1467 = vpack.c.b16 %v1343, %v1339
        %v1468 = vpack.c.b16 %v1344, %v1340
        %v1469 = vpack.c.b16 %v1345, %v1341
        %v1470 = vpack.c.b16 %v1350, %v1346
        %v1471 = vpack.c.b16 %v1351, %v1347
        %v1472 = vpack.c.b16 %v1352, %v1348
        %v1473 = vpack.c.b16 %v1353, %v1349
        %v1474 = vpack.c.b16 %v1358, %v1354
        %v1475 = vpack.c.b16 %v1359, %v1355
        %v1476 = vpack.c.b16 %v1360, %v1356
        %v1477 = vpack.c.b16 %v1361, %v1357
        %v1478 = vpack.c.b16 %v1366, %v1362
        %v1479 = vpack.c.b16 %v1367, %v1363
        %v1480 = vpack.c.b16 %v1368, %v1364
        %v1481 = vpack.c.b16 %v1369, %v1365
        %v1482 = vpack.c.b16 %v1374, %v1370
        %v1483 = vpack.c.b16 %v1375, %v1371
        %v1484 = vpack.c.b16 %v1376, %v1372
        %v1485 = vpack.c.b16 %v1377, %v1373
        %v1486 = vpack.c.b16 %v1382, %v1378
        %v1487 = vpack.c.b16 %v1383, %v1379
        %v1488 = vpack.c.b16 %v1384, %v1380
        %v1489 = vpack.c.b16 %v1385, %v1381
        %v1490 = vpack.c.b16 %v1390, %v1386
        %v1491 = vpack.c.b16 %v1391, %v1387
        %v1492 = vpack.c.b16 %v1392, %v1388
        %v1493 = vpack.c.b16 %v1393, %v1389
        %v1494 = vpack.c.b16 %v1398, %v1394
        %v1495 = vpack.c.b16 %v1399, %v1395
        %v1496 = vpack.c.b16 %v1400, %v1396
        %v1497 = vpack.c.b16 %v1401, %v1397
        %v1498 = vpack.c.b16 %v1406, %v1402
        %v1499 = vpack.c.b16 %v1407, %v1403
        %v1500 = vpack.c.b16 %v1408, %v1404
        %v1501 = vpack.c.b16 %v1409, %v1405
        %v1502 = vpack.c.b16 %v1414, %v1410
        %v1503 = vpack.c.b16 %v1415, %v1411
        %v1504 = vpack.c.b16 %v1416, %v1412
        %v1505 = vpack.c.b16 %v1417, %v1413
        %v1506 = vpack.c.b16 %v1422, %v1418
        %v1507 = vpack.c.b16 %v1423, %v1419
        %v1508 = vpack.c.b16 %v1424, %v1420
        %v1509 = vpack.c.b16 %v1425, %v1421
        %v1510 = vpack.c.b16 %v1430, %v1426
        %v1511 = vpack.c.b16 %v1431, %v1427
        %v1512 = vpack.c.b16 %v1432, %v1428
        %v1513 = vpack.c.b16 %v1433, %v1429
        %v1514 = vpack.c.b16 %v1438, %v1434
        %v1515 = vpack.c.b16 %v1439, %v1435
        %v1516 = vpack.c.b16 %v1440, %v1436
        %v1517 = vpack.c.b16 %v1441, %v1437
        %v1518 = vpack.c.b16 %v1446, %v1442
        %v1519 = vpack.c.b16 %v1447, %v1443
        %v1520 = vpack.c.b16 %v1448, %v1444
        %v1521 = vpack.c.b16 %v1449, %v1445
        %v1522 = vpack.c.b16 %v1454, %v1450
        %v1523 = vpack.c.b16 %v1455, %v1451
        %v1524 = vpack.c.b16 %v1456, %v1452
        %v1525 = vpack.c.b16 %v1457, %v1453
        %v1526 = vpack.c.b16 %v1462, %v1458
        %v1527 = vpack.c.b16 %v1463, %v1459
        %v1528 = vpack.c.b16 %v1464, %v1460
        %v1529 = vpack.c.b16 %v1465, %v1461
        %1594 = vmatprep.subr.bf16.mxu0 %v1495
        %1595 = vmatpush1.bf16.msra.mxu0 %v1494
        %1596 = vmatprep.subr.bf16.mxu0 %v1491
        %1597 = vmatpush1.bf16.msra.mxu0 %v1490
        %1598 = vmatprep.subr.bf16.mxu0 %v1487
        %1599 = vmatpush1.bf16.msra.mxu0 %v1486
        %1600 = vmatprep.subr.bf16.mxu0 %v1483
        %1601 = vmatpush1.bf16.msra.mxu0 %v1482
        %1602 = vmatprep.subr.bf16.mxu0 %v1479
        %1603 = vmatpush1.bf16.msra.mxu0 %v1478
        %1604 = vmatprep.subr.bf16.mxu0 %v1475
        %1605 = vmatpush1.bf16.msra.mxu0 %v1474
        %1606 = vmatprep.subr.bf16.mxu0 %v1471
        %1607 = vmatpush1.bf16.msra.mxu0 %v1470
        %1608 = vmatprep.subr.bf16.mxu0 %v1467
        %1609 = vmatpush1.bf16.msra.mxu0 %v1466
        %1610 = vmatprep.subr.bf16.mxu0 %v1527
        %1611 = vmatpush2.bf16.msra.mxu0 %v1526
        %1612 = vmatprep.subr.bf16.mxu0 %v1523
        %1613 = vmatpush2.bf16.msra.mxu0 %v1522
        %1614 = vmatprep.subr.bf16.mxu0 %v1519
        %1615 = vmatpush2.bf16.msra.mxu0 %v1518
        %1616 = vmatprep.subr.bf16.mxu0 %v1515
        %1617 = vmatpush2.bf16.msra.mxu0 %v1514
        %1618 = vmatprep.subr.bf16.mxu0 %v1511
        %1619 = vmatpush2.bf16.msra.mxu0 %v1510
        %1620 = vmatprep.subr.bf16.mxu0 %v1507
        %1621 = vmatpush2.bf16.msra.mxu0 %v1506
        %1622 = vmatprep.subr.bf16.mxu0 %v1503
        %1623 = vmatpush2.bf16.msra.mxu0 %v1502
        %1624 = vmatprep.subr.bf16.mxu0 %v1499
        %1625 = vmatpush2.bf16.msra.mxu0 %v1498
        %1626 = vmatprep.mubr.bf16.mxu0 %v717
        %1627 = vmatmul.mubr.bf16.gmra.mxu0 %v716
        %v1628 = vpop.f32.mrf.mxu0
        %v1629 = vadd.f32 0.0, %v1628
        %v1630 = vpop.f32.mrf.mxu0
        %v1631 = vadd.f32 0.0, %v1630
        %v1632 = vpop.f32.mrf.mxu0
        %v1633 = vadd.f32 0.0, %v1632
        %v1634 = vpop.f32.mrf.mxu0
        %v1635 = vadd.f32 0.0, %v1634
        %1636 = vmatprep.mubr.bf16.mxu0 %v719
        %1637 = vmatmul.mubr.bf16.gmra.mxu0 %v718
        %v1638 = vpop.f32.mrf.mxu0
        %v1639 = vadd.f32 0.0, %v1638
        %v1640 = vpop.f32.mrf.mxu0
        %v1641 = vadd.f32 0.0, %v1640
        %v1642 = vpop.f32.mrf.mxu0
        %v1643 = vadd.f32 0.0, %v1642
        %v1644 = vpop.f32.mrf.mxu0
        %v1645 = vadd.f32 0.0, %v1644
        %1646 = vdwg.mxu0
        %1647 = vmatprep.subr.bf16.mxu0 %v1497
        %1648 = vmatpush1.bf16.msra.mxu0 %v1496
        %1649 = vmatprep.subr.bf16.mxu0 %v1493
        %1650 = vmatpush1.bf16.msra.mxu0 %v1492
        %1651 = vmatprep.subr.bf16.mxu0 %v1489
        %1652 = vmatpush1.bf16.msra.mxu0 %v1488
        %1653 = vmatprep.subr.bf16.mxu0 %v1485
        %1654 = vmatpush1.bf16.msra.mxu0 %v1484
        %1655 = vmatprep.subr.bf16.mxu0 %v1481
        %1656 = vmatpush1.bf16.msra.mxu0 %v1480
        %1657 = vmatprep.subr.bf16.mxu0 %v1477
        %1658 = vmatpush1.bf16.msra.mxu0 %v1476
        %1659 = vmatprep.subr.bf16.mxu0 %v1473
        %1660 = vmatpush1.bf16.msra.mxu0 %v1472
        %1661 = vmatprep.subr.bf16.mxu0 %v1469
        %1662 = vmatpush1.bf16.msra.mxu0 %v1468
        %1663 = vmatprep.subr.bf16.mxu0 %v1529
        %1664 = vmatpush2.bf16.msra.mxu0 %v1528
        %1665 = vmatprep.subr.bf16.mxu0 %v1525
        %1666 = vmatpush2.bf16.msra.mxu0 %v1524
        %1667 = vmatprep.subr.bf16.mxu0 %v1521
        %1668 = vmatpush2.bf16.msra.mxu0 %v1520
        %1669 = vmatprep.subr.bf16.mxu0 %v1517
        %1670 = vmatpush2.bf16.msra.mxu0 %v1516
        %1671 = vmatprep.subr.bf16.mxu0 %v1513
        %1672 = vmatpush2.bf16.msra.mxu0 %v1512
        %1673 = vmatprep.subr.bf16.mxu0 %v1509
        %1674 = vmatpush2.bf16.msra.mxu0 %v1508
        %1675 = vmatprep.subr.bf16.mxu0 %v1505
        %1676 = vmatpush2.bf16.msra.mxu0 %v1504
        %1677 = vmatprep.subr.bf16.mxu0 %v1501
        %1678 = vmatpush2.bf16.msra.mxu0 %v1500
        %1679 = vmatprep.mubr.bf16.mxu0 %v717
        %1680 = vmatmul.mubr.bf16.gmra.mxu0 %v716
        %v1681 = vpop.f32.mrf.mxu0
        %v1682 = vadd.f32 0.0, %v1681
        %v1683 = vpop.f32.mrf.mxu0
        %v1684 = vadd.f32 0.0, %v1683
        %v1685 = vpop.f32.mrf.mxu0
        %v1686 = vadd.f32 0.0, %v1685
        %v1687 = vpop.f32.mrf.mxu0
        %v1688 = vadd.f32 0.0, %v1687
        %1689 = vmatprep.mubr.bf16.mxu0 %v719
        %1690 = vmatmul.mubr.bf16.gmra.mxu0 %v718
        %v1691 = vpop.f32.mrf.mxu0
        %v1692 = vadd.f32 0.0, %v1691
        %v1693 = vpop.f32.mrf.mxu0
        %v1694 = vadd.f32 0.0, %v1693
        %v1695 = vpop.f32.mrf.mxu0
        %v1696 = vadd.f32 0.0, %v1695
        %v1697 = vpop.f32.mrf.mxu0
        %v1698 = vadd.f32 0.0, %v1697
        %1699 = vdwg.mxu0
        %v1700 = vxor.u32 %v1139, 2147483648
        %v1701 = vxor.u32 %v1141, 2147483648
        %v1702 = vxor.u32 %v1192, 2147483648
        %v1703 = vxor.u32 %v1194, 2147483648
        %v1704 = vxor.u32 %v1143, 2147483648
        %v1705 = vxor.u32 %v1145, 2147483648
        %v1706 = vxor.u32 %v1196, 2147483648
        %v1707 = vxor.u32 %v1198, 2147483648
        %v1708 = vxor.u32 %v1149, 2147483648
        %v1709 = vxor.u32 %v1151, 2147483648
        %v1710 = vxor.u32 %v1202, 2147483648
        %v1711 = vxor.u32 %v1204, 2147483648
        %v1712 = vxor.u32 %v1153, 2147483648
        %v1713 = vxor.u32 %v1155, 2147483648
        %v1714 = vxor.u32 %v1206, 2147483648
        %v1715 = vxor.u32 %v1208, 2147483648
        %v1716 = vmul.f32 %v1700, 1.442695
        %v1717 = vpow.pop %v1716
        %v1718 = vmul.f32 %v1701, 1.442695
        %v1719 = vpow.pop %v1718
        %v1720 = vmul.f32 %v1702, 1.442695
        %v1721 = vpow.pop %v1720
        %v1722 = vmul.f32 %v1703, 1.442695
        %v1723 = vpow.pop %v1722
        %v1724 = vmul.f32 %v1704, 1.442695
        %v1725 = vpow.pop %v1724
        %v1726 = vmul.f32 %v1705, 1.442695
        %v1727 = vpow.pop %v1726
        %v1728 = vmul.f32 %v1706, 1.442695
        %v1729 = vpow.pop %v1728
        %v1730 = vmul.f32 %v1707, 1.442695
        %v1731 = vpow.pop %v1730
        %v1732 = vmul.f32 %v1708, 1.442695
        %v1733 = vpow.pop %v1732
        %v1734 = vmul.f32 %v1709, 1.442695
        %v1735 = vpow.pop %v1734
        %v1736 = vmul.f32 %v1710, 1.442695
        %v1737 = vpow.pop %v1736
        %v1738 = vmul.f32 %v1711, 1.442695
        %v1739 = vpow.pop %v1738
        %v1740 = vmul.f32 %v1712, 1.442695
        %v1741 = vpow.pop %v1740
        %v1742 = vmul.f32 %v1713, 1.442695
        %v1743 = vpow.pop %v1742
        %v1744 = vmul.f32 %v1714, 1.442695
        %v1745 = vpow.pop %v1744
        %v1746 = vmul.f32 %v1715, 1.442695
        %v1747 = vpow.pop %v1746
        %v1748 = vadd.f32 %v1717, 1.0
        %v1749 = vadd.f32 %v1719, 1.0
        %v1750 = vadd.f32 %v1721, 1.0
        %v1751 = vadd.f32 %v1723, 1.0
        %v1752 = vadd.f32 %v1725, 1.0
        %v1753 = vadd.f32 %v1727, 1.0
        %v1754 = vadd.f32 %v1729, 1.0
        %v1755 = vadd.f32 %v1731, 1.0
        %v1756 = vadd.f32 %v1733, 1.0
        %v1757 = vadd.f32 %v1735, 1.0
        %v1758 = vadd.f32 %v1737, 1.0
        %v1759 = vadd.f32 %v1739, 1.0
        %v1760 = vadd.f32 %v1741, 1.0
        %v1761 = vadd.f32 %v1743, 1.0
        %v1762 = vadd.f32 %v1745, 1.0
        %v1763 = vadd.f32 %v1747, 1.0
        %v1764 = vrcp.pop %v1748
        %v1765 = vmul.f32 1.0, %v1764
        %v1766 = vrcp.pop %v1749
        %v1767 = vmul.f32 1.0, %v1766
        %v1768 = vrcp.pop %v1750
        %v1769 = vmul.f32 1.0, %v1768
        %v1770 = vrcp.pop %v1751
        %v1771 = vmul.f32 1.0, %v1770
        %v1772 = vrcp.pop %v1752
        %v1773 = vmul.f32 1.0, %v1772
        %v1774 = vrcp.pop %v1753
        %v1775 = vmul.f32 1.0, %v1774
        %v1776 = vrcp.pop %v1754
        %v1777 = vmul.f32 1.0, %v1776
        %v1778 = vrcp.pop %v1755
        %v1779 = vmul.f32 1.0, %v1778
        %v1780 = vrcp.pop %v1756
        %v1781 = vmul.f32 1.0, %v1780
        %v1782 = vrcp.pop %v1757
        %v1783 = vmul.f32 1.0, %v1782
        %v1784 = vrcp.pop %v1758
        %v1785 = vmul.f32 1.0, %v1784
        %v1786 = vrcp.pop %v1759
        %v1787 = vmul.f32 1.0, %v1786
        %v1788 = vrcp.pop %v1760
        %v1789 = vmul.f32 1.0, %v1788
        %v1790 = vrcp.pop %v1761
        %v1791 = vmul.f32 1.0, %v1790
        %v1792 = vrcp.pop %v1762
        %v1793 = vmul.f32 1.0, %v1792
        %v1794 = vrcp.pop %v1763
        %v1795 = vmul.f32 1.0, %v1794
        %v1796 = vmul.f32 %v1139, %v1765
        %v1797 = vmul.f32 %v1141, %v1767
        %v1798 = vmul.f32 %v1192, %v1769
        %v1799 = vmul.f32 %v1194, %v1771
        %v1800 = vmul.f32 %v1143, %v1773
        %v1801 = vmul.f32 %v1145, %v1775
        %v1802 = vmul.f32 %v1196, %v1777
        %v1803 = vmul.f32 %v1198, %v1779
        %v1804 = vmul.f32 %v1149, %v1781
        %v1805 = vmul.f32 %v1151, %v1783
        %v1806 = vmul.f32 %v1202, %v1785
        %v1807 = vmul.f32 %v1204, %v1787
        %v1808 = vmul.f32 %v1153, %v1789
        %v1809 = vmul.f32 %v1155, %v1791
        %v1810 = vmul.f32 %v1206, %v1793
        %v1811 = vmul.f32 %v1208, %v1795
        %v1812 = vmul.f32 %v1796, %v1629
        %v1813 = vmul.f32 %v1797, %v1631
        %v1814 = vmul.f32 %v1798, %v1682
        %v1815 = vmul.f32 %v1799, %v1684
        %v1816 = vmul.f32 %v1800, %v1633
        %v1817 = vmul.f32 %v1801, %v1635
        %v1818 = vmul.f32 %v1802, %v1686
        %v1819 = vmul.f32 %v1803, %v1688
        %v1820 = vmul.f32 %v1804, %v1639
        %v1821 = vmul.f32 %v1805, %v1641
        %v1822 = vmul.f32 %v1806, %v1692
        %v1823 = vmul.f32 %v1807, %v1694
        %v1824 = vmul.f32 %v1808, %v1643
        %v1825 = vmul.f32 %v1809, %v1645
        %v1826 = vmul.f32 %v1810, %v1696
        %v1827 = vmul.f32 %v1811, %v1698
        %v1828 = vpack.c.bf16 %v1816, %v1812
        %v1829 = vpack.c.bf16 %v1817, %v1813
        %v1830 = vpack.c.bf16 %v1818, %v1814
        %v1831 = vpack.c.bf16 %v1819, %v1815
        %v1832 = vpack.c.bf16 %v1824, %v1820
        %v1833 = vpack.c.bf16 %v1825, %v1821
        %v1834 = vpack.c.bf16 %v1826, %v1822
        %v1835 = vpack.c.bf16 %v1827, %v1823
        %v1836 = vld [vmem:[#allocation2] sm:$0xff]
        %v1837 = vld [vmem:[#allocation2 + $0x8] sm:$0xff]
        %v1838 = vld [vmem:[#allocation2 + $0x10] sm:$0xff]
        %v1839 = vld [vmem:[#allocation2 + $0x18] sm:$0xff]
        %v1840 = vld [vmem:[#allocation2 + $0x20] sm:$0xff]
        %v1841 = vld [vmem:[#allocation2 + $0x28] sm:$0xff]
        %v1842 = vld [vmem:[#allocation2 + $0x30] sm:$0xff]
        %v1843 = vld [vmem:[#allocation2 + $0x38] sm:$0xff]
        %v1844 = vld [vmem:[%s622] sm:$0xff]
        %v1845 = vld [vmem:[%s622 + $0x8] sm:$0xff]
        %v1846 = vld [vmem:[%s622 + $0x10] sm:$0xff]
        %v1847 = vld [vmem:[%s622 + $0x18] sm:$0xff]
        %v1848 = vld [vmem:[%s622 + $0x20] sm:$0xff]
        %v1849 = vld [vmem:[%s622 + $0x28] sm:$0xff]
        %v1850 = vld [vmem:[%s622 + $0x30] sm:$0xff]
        %v1851 = vld [vmem:[%s622 + $0x38] sm:$0xff]
        %v1852 = vld [vmem:[%s622 + $0x40] sm:$0xff]
        %v1853 = vld [vmem:[%s622 + $0x48] sm:$0xff]
        %v1854 = vld [vmem:[%s622 + $0x50] sm:$0xff]
        %v1855 = vld [vmem:[%s622 + $0x58] sm:$0xff]
        %v1856 = vld [vmem:[%s622 + $0x60] sm:$0xff]
        %v1857 = vld [vmem:[%s622 + $0x68] sm:$0xff]
        %v1858 = vld [vmem:[%s622 + $0x70] sm:$0xff]
        %v1859 = vld [vmem:[%s622 + $0x78] sm:$0xff]
        %v1860 = vld [vmem:[%s622 + $0x80] sm:$0xff]
        %v1861 = vld [vmem:[%s622 + $0x88] sm:$0xff]
        %v1862 = vld [vmem:[%s622 + $0x90] sm:$0xff]
        %v1863 = vld [vmem:[%s622 + $0x98] sm:$0xff]
        %v1864 = vld [vmem:[%s622 + $0xa0] sm:$0xff]
        %v1865 = vld [vmem:[%s622 + $0xa8] sm:$0xff]
        %v1866 = vld [vmem:[%s622 + $0xb0] sm:$0xff]
        %v1867 = vld [vmem:[%s622 + $0xb8] sm:$0xff]
        %v1868 = vld [vmem:[%s622 + $0xc0] sm:$0xff]
        %v1869 = vld [vmem:[%s622 + $0xc8] sm:$0xff]
        %v1870 = vld [vmem:[%s622 + $0xd0] sm:$0xff]
        %v1871 = vld [vmem:[%s622 + $0xd8] sm:$0xff]
        %v1872 = vld [vmem:[%s622 + $0xe0] sm:$0xff]
        %v1873 = vld [vmem:[%s622 + $0xe8] sm:$0xff]
        %v1874 = vld [vmem:[%s622 + $0xf0] sm:$0xff]
        %v1875 = vld [vmem:[%s622 + $0xf8] sm:$0xff]
        %v1876 = vld [vmem:[%s622 + $0x100] sm:$0xff]
        %v1877 = vld [vmem:[%s622 + $0x108] sm:$0xff]
        %v1878 = vld [vmem:[%s622 + $0x110] sm:$0xff]
        %v1879 = vld [vmem:[%s622 + $0x118] sm:$0xff]
        %v1880 = vld [vmem:[%s622 + $0x120] sm:$0xff]
        %v1881 = vld [vmem:[%s622 + $0x128] sm:$0xff]
        %v1882 = vld [vmem:[%s622 + $0x130] sm:$0xff]
        %v1883 = vld [vmem:[%s622 + $0x138] sm:$0xff]
        %v1884 = vld [vmem:[%s622 + $0x140] sm:$0xff]
        %v1885 = vld [vmem:[%s622 + $0x148] sm:$0xff]
        %v1886 = vld [vmem:[%s622 + $0x150] sm:$0xff]
        %v1887 = vld [vmem:[%s622 + $0x158] sm:$0xff]
        %v1888 = vld [vmem:[%s622 + $0x160] sm:$0xff]
        %v1889 = vld [vmem:[%s622 + $0x168] sm:$0xff]
        %v1890 = vld [vmem:[%s622 + $0x170] sm:$0xff]
        %v1891 = vld [vmem:[%s622 + $0x178] sm:$0xff]
        %v1892 = vld [vmem:[%s622 + $0x180] sm:$0xff]
        %v1893 = vld [vmem:[%s622 + $0x188] sm:$0xff]
        %v1894 = vld [vmem:[%s622 + $0x190] sm:$0xff]
        %v1895 = vld [vmem:[%s622 + $0x198] sm:$0xff]
        %v1896 = vld [vmem:[%s622 + $0x1a0] sm:$0xff]
        %v1897 = vld [vmem:[%s622 + $0x1a8] sm:$0xff]
        %v1898 = vld [vmem:[%s622 + $0x1b0] sm:$0xff]
        %v1899 = vld [vmem:[%s622 + $0x1b8] sm:$0xff]
        %v1900 = vld [vmem:[%s622 + $0x1c0] sm:$0xff]
        %v1901 = vld [vmem:[%s622 + $0x1c8] sm:$0xff]
        %v1902 = vld [vmem:[%s622 + $0x1d0] sm:$0xff]
        %v1903 = vld [vmem:[%s622 + $0x1d8] sm:$0xff]
        %v1904 = vld [vmem:[%s622 + $0x1e0] sm:$0xff]
        %v1905 = vld [vmem:[%s622 + $0x1e8] sm:$0xff]
        %v1906 = vld [vmem:[%s622 + $0x1f0] sm:$0xff]
        %v1907 = vld [vmem:[%s622 + $0x1f8] sm:$0xff]
        %v1972 = vunpack.c.l.b16 %v1844
        %v1973 = vunpack.c.h.b16 %v1844
        %v1974 = vunpack.c.l.b16 %v1845
        %v1975 = vunpack.c.h.b16 %v1845
        %v1976 = vunpack.c.l.b16 %v1846
        %v1977 = vunpack.c.h.b16 %v1846
        %v1978 = vunpack.c.l.b16 %v1847
        %v1979 = vunpack.c.h.b16 %v1847
        %v1980 = vunpack.c.l.b16 %v1848
        %v1981 = vunpack.c.h.b16 %v1848
        %v1982 = vunpack.c.l.b16 %v1849
        %v1983 = vunpack.c.h.b16 %v1849
        %v1984 = vunpack.c.l.b16 %v1850
        %v1985 = vunpack.c.h.b16 %v1850
        %v1986 = vunpack.c.l.b16 %v1851
        %v1987 = vunpack.c.h.b16 %v1851
        %v1988 = vunpack.c.l.b16 %v1852
        %v1989 = vunpack.c.h.b16 %v1852
        %v1990 = vunpack.c.l.b16 %v1853
        %v1991 = vunpack.c.h.b16 %v1853
        %v1992 = vunpack.c.l.b16 %v1854
        %v1993 = vunpack.c.h.b16 %v1854
        %v1994 = vunpack.c.l.b16 %v1855
        %v1995 = vunpack.c.h.b16 %v1855
        %v1996 = vunpack.c.l.b16 %v1856
        %v1997 = vunpack.c.h.b16 %v1856
        %v1998 = vunpack.c.l.b16 %v1857
        %v1999 = vunpack.c.h.b16 %v1857
        %v2000 = vunpack.c.l.b16 %v1858
        %v2001 = vunpack.c.h.b16 %v1858
        %v2002 = vunpack.c.l.b16 %v1859
        %v2003 = vunpack.c.h.b16 %v1859
        %v2004 = vunpack.c.l.b16 %v1860
        %v2005 = vunpack.c.h.b16 %v1860
        %v2006 = vunpack.c.l.b16 %v1861
        %v2007 = vunpack.c.h.b16 %v1861
        %v2008 = vunpack.c.l.b16 %v1862
        %v2009 = vunpack.c.h.b16 %v1862
        %v2010 = vunpack.c.l.b16 %v1863
        %v2011 = vunpack.c.h.b16 %v1863
        %v2012 = vunpack.c.l.b16 %v1864
        %v2013 = vunpack.c.h.b16 %v1864
        %v2014 = vunpack.c.l.b16 %v1865
        %v2015 = vunpack.c.h.b16 %v1865
        %v2016 = vunpack.c.l.b16 %v1866
        %v2017 = vunpack.c.h.b16 %v1866
        %v2018 = vunpack.c.l.b16 %v1867
        %v2019 = vunpack.c.h.b16 %v1867
        %v2020 = vunpack.c.l.b16 %v1868
        %v2021 = vunpack.c.h.b16 %v1868
        %v2022 = vunpack.c.l.b16 %v1869
        %v2023 = vunpack.c.h.b16 %v1869
        %v2024 = vunpack.c.l.b16 %v1870
        %v2025 = vunpack.c.h.b16 %v1870
        %v2026 = vunpack.c.l.b16 %v1871
        %v2027 = vunpack.c.h.b16 %v1871
        %v2028 = vunpack.c.l.b16 %v1872
        %v2029 = vunpack.c.h.b16 %v1872
        %v2030 = vunpack.c.l.b16 %v1873
        %v2031 = vunpack.c.h.b16 %v1873
        %v2032 = vunpack.c.l.b16 %v1874
        %v2033 = vunpack.c.h.b16 %v1874
        %v2034 = vunpack.c.l.b16 %v1875
        %v2035 = vunpack.c.h.b16 %v1875
        %v2036 = vunpack.c.l.b16 %v1876
        %v2037 = vunpack.c.h.b16 %v1876
        %v2038 = vunpack.c.l.b16 %v1877
        %v2039 = vunpack.c.h.b16 %v1877
        %v2040 = vunpack.c.l.b16 %v1878
        %v2041 = vunpack.c.h.b16 %v1878
        %v2042 = vunpack.c.l.b16 %v1879
        %v2043 = vunpack.c.h.b16 %v1879
        %v2044 = vunpack.c.l.b16 %v1880
        %v2045 = vunpack.c.h.b16 %v1880
        %v2046 = vunpack.c.l.b16 %v1881
        %v2047 = vunpack.c.h.b16 %v1881
        %v2048 = vunpack.c.l.b16 %v1882
        %v2049 = vunpack.c.h.b16 %v1882
        %v2050 = vunpack.c.l.b16 %v1883
        %v2051 = vunpack.c.h.b16 %v1883
        %v2052 = vunpack.c.l.b16 %v1884
        %v2053 = vunpack.c.h.b16 %v1884
        %v2054 = vunpack.c.l.b16 %v1885
        %v2055 = vunpack.c.h.b16 %v1885
        %v2056 = vunpack.c.l.b16 %v1886
        %v2057 = vunpack.c.h.b16 %v1886
        %v2058 = vunpack.c.l.b16 %v1887
        %v2059 = vunpack.c.h.b16 %v1887
        %v2060 = vunpack.c.l.b16 %v1888
        %v2061 = vunpack.c.h.b16 %v1888
        %v2062 = vunpack.c.l.b16 %v1889
        %v2063 = vunpack.c.h.b16 %v1889
        %v2064 = vunpack.c.l.b16 %v1890
        %v2065 = vunpack.c.h.b16 %v1890
        %v2066 = vunpack.c.l.b16 %v1891
        %v2067 = vunpack.c.h.b16 %v1891
        %v2068 = vunpack.c.l.b16 %v1892
        %v2069 = vunpack.c.h.b16 %v1892
        %v2070 = vunpack.c.l.b16 %v1893
        %v2071 = vunpack.c.h.b16 %v1893
        %v2072 = vunpack.c.l.b16 %v1894
        %v2073 = vunpack.c.h.b16 %v1894
        %v2074 = vunpack.c.l.b16 %v1895
        %v2075 = vunpack.c.h.b16 %v1895
        %v2076 = vunpack.c.l.b16 %v1896
        %v2077 = vunpack.c.h.b16 %v1896
        %v2078 = vunpack.c.l.b16 %v1897
        %v2079 = vunpack.c.h.b16 %v1897
        %v2080 = vunpack.c.l.b16 %v1898
        %v2081 = vunpack.c.h.b16 %v1898
        %v2082 = vunpack.c.l.b16 %v1899
        %v2083 = vunpack.c.h.b16 %v1899
        %v2084 = vunpack.c.l.b16 %v1900
        %v2085 = vunpack.c.h.b16 %v1900
        %v2086 = vunpack.c.l.b16 %v1901
        %v2087 = vunpack.c.h.b16 %v1901
        %v2088 = vunpack.c.l.b16 %v1902
        %v2089 = vunpack.c.h.b16 %v1902
        %v2090 = vunpack.c.l.b16 %v1903
        %v2091 = vunpack.c.h.b16 %v1903
        %v2092 = vunpack.c.l.b16 %v1904
        %v2093 = vunpack.c.h.b16 %v1904
        %v2094 = vunpack.c.l.b16 %v1905
        %v2095 = vunpack.c.h.b16 %v1905
        %v2096 = vunpack.c.l.b16 %v1906
        %v2097 = vunpack.c.h.b16 %v1906
        %v2098 = vunpack.c.l.b16 %v1907
        %v2099 = vunpack.c.h.b16 %v1907
        %v2100 = vpack.c.b16 %v1974, %v1972
        %v2101 = vpack.c.b16 %v1975, %v1973
        %v2102 = vpack.c.b16 %v1978, %v1976
        %v2103 = vpack.c.b16 %v1979, %v1977
        %v2104 = vpack.c.b16 %v1982, %v1980
        %v2105 = vpack.c.b16 %v1983, %v1981
        %v2106 = vpack.c.b16 %v1986, %v1984
        %v2107 = vpack.c.b16 %v1987, %v1985
        %v2108 = vpack.c.b16 %v1990, %v1988
        %v2109 = vpack.c.b16 %v1991, %v1989
        %v2110 = vpack.c.b16 %v1994, %v1992
        %v2111 = vpack.c.b16 %v1995, %v1993
        %v2112 = vpack.c.b16 %v1998, %v1996
        %v2113 = vpack.c.b16 %v1999, %v1997
        %v2114 = vpack.c.b16 %v2002, %v2000
        %v2115 = vpack.c.b16 %v2003, %v2001
        %v2116 = vpack.c.b16 %v2006, %v2004
        %v2117 = vpack.c.b16 %v2007, %v2005
        %v2118 = vpack.c.b16 %v2010, %v2008
        %v2119 = vpack.c.b16 %v2011, %v2009
        %v2120 = vpack.c.b16 %v2014, %v2012
        %v2121 = vpack.c.b16 %v2015, %v2013
        %v2122 = vpack.c.b16 %v2018, %v2016
        %v2123 = vpack.c.b16 %v2019, %v2017
        %v2124 = vpack.c.b16 %v2022, %v2020
        %v2125 = vpack.c.b16 %v2023, %v2021
        %v2126 = vpack.c.b16 %v2026, %v2024
        %v2127 = vpack.c.b16 %v2027, %v2025
        %v2128 = vpack.c.b16 %v2030, %v2028
        %v2129 = vpack.c.b16 %v2031, %v2029
        %v2130 = vpack.c.b16 %v2034, %v2032
        %v2131 = vpack.c.b16 %v2035, %v2033
        %v2132 = vpack.c.b16 %v2038, %v2036
        %v2133 = vpack.c.b16 %v2039, %v2037
        %v2134 = vpack.c.b16 %v2042, %v2040
        %v2135 = vpack.c.b16 %v2043, %v2041
        %v2136 = vpack.c.b16 %v2046, %v2044
        %v2137 = vpack.c.b16 %v2047, %v2045
        %v2138 = vpack.c.b16 %v2050, %v2048
        %v2139 = vpack.c.b16 %v2051, %v2049
        %v2140 = vpack.c.b16 %v2054, %v2052
        %v2141 = vpack.c.b16 %v2055, %v2053
        %v2142 = vpack.c.b16 %v2058, %v2056
        %v2143 = vpack.c.b16 %v2059, %v2057
        %v2144 = vpack.c.b16 %v2062, %v2060
        %v2145 = vpack.c.b16 %v2063, %v2061
        %v2146 = vpack.c.b16 %v2066, %v2064
        %v2147 = vpack.c.b16 %v2067, %v2065
        %v2148 = vpack.c.b16 %v2070, %v2068
        %v2149 = vpack.c.b16 %v2071, %v2069
        %v2150 = vpack.c.b16 %v2074, %v2072
        %v2151 = vpack.c.b16 %v2075, %v2073
        %v2152 = vpack.c.b16 %v2078, %v2076
        %v2153 = vpack.c.b16 %v2079, %v2077
        %v2154 = vpack.c.b16 %v2082, %v2080
        %v2155 = vpack.c.b16 %v2083, %v2081
        %v2156 = vpack.c.b16 %v2086, %v2084
        %v2157 = vpack.c.b16 %v2087, %v2085
        %v2158 = vpack.c.b16 %v2090, %v2088
        %v2159 = vpack.c.b16 %v2091, %v2089
        %v2160 = vpack.c.b16 %v2094, %v2092
        %v2161 = vpack.c.b16 %v2095, %v2093
        %v2162 = vpack.c.b16 %v2098, %v2096
        %v2163 = vpack.c.b16 %v2099, %v2097
        %2228 = vmatprep.subr.bf16.mxu0 %v2115
        %2229 = vmatpush1.bf16.msra.mxu0 %v2114
        %2230 = vmatprep.subr.bf16.mxu0 %v2113
        %2231 = vmatpush1.bf16.msra.mxu0 %v2112
        %2232 = vmatprep.subr.bf16.mxu0 %v2111
        %2233 = vmatpush1.bf16.msra.mxu0 %v2110
        %2234 = vmatprep.subr.bf16.mxu0 %v2109
        %2235 = vmatpush1.bf16.msra.mxu0 %v2108
        %2236 = vmatprep.subr.bf16.mxu0 %v2107
        %2237 = vmatpush1.bf16.msra.mxu0 %v2106
        %2238 = vmatprep.subr.bf16.mxu0 %v2105
        %2239 = vmatpush1.bf16.msra.mxu0 %v2104
        %2240 = vmatprep.subr.bf16.mxu0 %v2103
        %2241 = vmatpush1.bf16.msra.mxu0 %v2102
        %2242 = vmatprep.subr.bf16.mxu0 %v2101
        %2243 = vmatpush1.bf16.msra.mxu0 %v2100
        %2244 = vmatprep.subr.bf16.mxu0 %v2131
        %2245 = vmatpush2.bf16.msra.mxu0 %v2130
        %2246 = vmatprep.subr.bf16.mxu0 %v2129
        %2247 = vmatpush2.bf16.msra.mxu0 %v2128
        %2248 = vmatprep.subr.bf16.mxu0 %v2127
        %2249 = vmatpush2.bf16.msra.mxu0 %v2126
        %2250 = vmatprep.subr.bf16.mxu0 %v2125
        %2251 = vmatpush2.bf16.msra.mxu0 %v2124
        %2252 = vmatprep.subr.bf16.mxu0 %v2123
        %2253 = vmatpush2.bf16.msra.mxu0 %v2122
        %2254 = vmatprep.subr.bf16.mxu0 %v2121
        %2255 = vmatpush2.bf16.msra.mxu0 %v2120
        %2256 = vmatprep.subr.bf16.mxu0 %v2119
        %2257 = vmatpush2.bf16.msra.mxu0 %v2118
        %2258 = vmatprep.subr.bf16.mxu0 %v2117
        %2259 = vmatpush2.bf16.msra.mxu0 %v2116
        %2260 = vmatprep.mubr.bf16.mxu0 %v1829
        %2261 = vmatmul.mubr.bf16.gmra.mxu0 %v1828
        %v2262 = vpop.f32.mrf.mxu0
        %v2263 = vadd.f32 0.0, %v2262
        %v2264 = vpop.f32.mrf.mxu0
        %v2265 = vadd.f32 0.0, %v2264
        %v2266 = vpop.f32.mrf.mxu0
        %v2267 = vadd.f32 0.0, %v2266
        %v2268 = vpop.f32.mrf.mxu0
        %v2269 = vadd.f32 0.0, %v2268
        %2270 = vmatprep.mubr.bf16.mxu0 %v1833
        %2271 = vmatmul.mubr.bf16.gmra.mxu0 %v1832
        %v2272 = vpop.f32.mrf.mxu0
        %v2273 = vadd.f32 0.0, %v2272
        %v2274 = vpop.f32.mrf.mxu0
        %v2275 = vadd.f32 0.0, %v2274
        %v2276 = vpop.f32.mrf.mxu0
        %v2277 = vadd.f32 0.0, %v2276
        %v2278 = vpop.f32.mrf.mxu0
        %v2279 = vadd.f32 0.0, %v2278
        %2280 = vdwg.mxu0
        %2281 = vmatprep.subr.bf16.mxu0 %v2147
        %2282 = vmatpush1.bf16.msra.mxu0 %v2146
        %2283 = vmatprep.subr.bf16.mxu0 %v2145
        %2284 = vmatpush1.bf16.msra.mxu0 %v2144
        %2285 = vmatprep.subr.bf16.mxu0 %v2143
        %2286 = vmatpush1.bf16.msra.mxu0 %v2142
        %2287 = vmatprep.subr.bf16.mxu0 %v2141
        %2288 = vmatpush1.bf16.msra.mxu0 %v2140
        %2289 = vmatprep.subr.bf16.mxu0 %v2139
        %2290 = vmatpush1.bf16.msra.mxu0 %v2138
        %2291 = vmatprep.subr.bf16.mxu0 %v2137
        %2292 = vmatpush1.bf16.msra.mxu0 %v2136
        %2293 = vmatprep.subr.bf16.mxu0 %v2135
        %2294 = vmatpush1.bf16.msra.mxu0 %v2134
        %2295 = vmatprep.subr.bf16.mxu0 %v2133
        %2296 = vmatpush1.bf16.msra.mxu0 %v2132
        %2297 = vmatprep.subr.bf16.mxu0 %v2163
        %2298 = vmatpush2.bf16.msra.mxu0 %v2162
        %2299 = vmatprep.subr.bf16.mxu0 %v2161
        %2300 = vmatpush2.bf16.msra.mxu0 %v2160
        %2301 = vmatprep.subr.bf16.mxu0 %v2159
        %2302 = vmatpush2.bf16.msra.mxu0 %v2158
        %2303 = vmatprep.subr.bf16.mxu0 %v2157
        %2304 = vmatpush2.bf16.msra.mxu0 %v2156
        %2305 = vmatprep.subr.bf16.mxu0 %v2155
        %2306 = vmatpush2.bf16.msra.mxu0 %v2154
        %2307 = vmatprep.subr.bf16.mxu0 %v2153
        %2308 = vmatpush2.bf16.msra.mxu0 %v2152
        %2309 = vmatprep.subr.bf16.mxu0 %v2151
        %2310 = vmatpush2.bf16.msra.mxu0 %v2150
        %2311 = vmatprep.subr.bf16.mxu0 %v2149
        %2312 = vmatpush2.bf16.msra.mxu0 %v2148
        %2313 = vmatprep.mubr.bf16.mxu0 %v1831
        %2314 = vmatmul.mubr.bf16.gmra.mxu0 %v1830
        %v2315 = vpop.f32.mrf.mxu0
        %v2316 = vadd.f32 %v2263, %v2315
        %v2317 = vpop.f32.mrf.mxu0
        %v2318 = vadd.f32 %v2265, %v2317
        %v2319 = vpop.f32.mrf.mxu0
        %v2320 = vadd.f32 %v2267, %v2319
        %v2321 = vpop.f32.mrf.mxu0
        %v2322 = vadd.f32 %v2269, %v2321
        %2323 = vmatprep.mubr.bf16.mxu0 %v1835
        %2324 = vmatmul.mubr.bf16.gmra.mxu0 %v1834
        %v2325 = vpop.f32.mrf.mxu0
        %v2326 = vadd.f32 %v2273, %v2325
        %v2327 = vpop.f32.mrf.mxu0
        %v2328 = vadd.f32 %v2275, %v2327
        %v2329 = vpop.f32.mrf.mxu0
        %v2330 = vadd.f32 %v2277, %v2329
        %v2331 = vpop.f32.mrf.mxu0
        %v2332 = vadd.f32 %v2279, %v2331
        %2333 = vdwg.mxu0
        %v2334 = vadd.f32 %v1836, %v2316
        %v2335 = vadd.f32 %v1837, %v2318
        %v2336 = vadd.f32 %v1838, %v2320
        %v2337 = vadd.f32 %v1839, %v2322
        %v2338 = vadd.f32 %v1840, %v2326
        %v2339 = vadd.f32 %v1841, %v2328
        %v2340 = vadd.f32 %v1842, %v2330
        %v2341 = vadd.f32 %v1843, %v2332
        %2342 = vst [vmem:[#allocation2] sm:$0xff] %v2334
        %2343 = vst [vmem:[#allocation2 + $0x8] sm:$0xff] %v2335
        %2344 = vst [vmem:[#allocation2 + $0x10] sm:$0xff] %v2336
        %2345 = vst [vmem:[#allocation2 + $0x18] sm:$0xff] %v2337
        %2346 = vst [vmem:[#allocation2 + $0x20] sm:$0xff] %v2338
        %2347 = vst [vmem:[#allocation2 + $0x28] sm:$0xff] %v2339
        %2348 = vst [vmem:[#allocation2 + $0x30] sm:$0xff] %v2340
        %2349 = vst [vmem:[#allocation2 + $0x38] sm:$0xff] %v2341
        %p2350 = scmp.eq.s32.totalorder %s22, 1
        // Predicated region
        $region95: #{vit_mim_forward.14} parent=81 // pred_check
          %p2351 = pneg %p2350
        $region96: #{vit_mim_forward.14} parent=81 // pred_check_branch
          %2353 = sbr.rel (%p2351) target = $region98
        $region97: #{vit_mim_forward.14} parent=81 // pred_region
          %v2354 = vld [vmem:[%s5] sm:$0x3]
          %v2355 = vld [vmem:[#allocation2] sm:$0xff]
          %v2356 = vld [vmem:[#allocation2 + $0x8] sm:$0xff]
          %v2357 = vld [vmem:[#allocation2 + $0x10] sm:$0xff]
          %v2358 = vld [vmem:[#allocation2 + $0x18] sm:$0xff]
          %v2359 = vld [vmem:[#allocation2 + $0x20] sm:$0xff]
          %v2360 = vld [vmem:[#allocation2 + $0x28] sm:$0xff]
          %v2361 = vld [vmem:[#allocation2 + $0x30] sm:$0xff]
          %v2362 = vld [vmem:[#allocation2 + $0x38] sm:$0xff]
          %v2364 = vlaneseq
          %v2365 = vshrl.u32 %v2364, 7
          %v2366 = vsub.s32 0, %v2365
          %v2367 = vrot.slane %v2354, %v2366
          %v2368 = vlaneseq
          %v2369 = vshrl.u32 %v2368, 7
          %v2370 = vsub.s32 1, %v2369
          %v2371 = vrot.slane %v2354, %v2370
          %v2374 = vmul.f32 %v2367, %v2355
          %v2375 = vmul.f32 %v2371, %v2356
          %v2376 = vmul.f32 %v2367, %v2357
          %v2377 = vmul.f32 %v2371, %v2358
          %v2378 = vmul.f32 %v2367, %v2359
          %v2379 = vmul.f32 %v2371, %v2360
          %v2380 = vmul.f32 %v2367, %v2361
          %v2381 = vmul.f32 %v2371, %v2362
          %v2382 = vadd.f32 %v647, %v2374
          %v2383 = vadd.f32 %v648, %v2375
          %v2384 = vadd.f32 %v649, %v2376
          %v2385 = vadd.f32 %v650, %v2377
          %v2386 = vadd.f32 %v651, %v2378
          %v2387 = vadd.f32 %v652, %v2379
          %v2388 = vadd.f32 %v653, %v2380
          %v2389 = vadd.f32 %v654, %v2381
          %v2390 = vpack.c.bf16 %v2384, %v2382
          %v2391 = vpack.c.bf16 %v2385, %v2383
          %v2392 = vpack.c.bf16 %v2388, %v2386
          %v2393 = vpack.c.bf16 %v2389, %v2387
          %v2398 = vunpack.c.l.b16 %v2390
          %v2399 = vunpack.c.l.b16 %v2391
          %v2400 = vunpack.c.h.b16 %v2390
          %v2401 = vunpack.c.h.b16 %v2391
          %v2402 = vunpack.c.l.b16 %v2392
          %v2403 = vunpack.c.l.b16 %v2393
          %v2404 = vunpack.c.h.b16 %v2392
          %v2405 = vunpack.c.h.b16 %v2393
          %v2406 = vpack.c.b16 %v2399, %v2398
          %v2407 = vpack.c.b16 %v2401, %v2400
          %v2408 = vpack.c.b16 %v2403, %v2402
          %v2409 = vpack.c.b16 %v2405, %v2404
          %2414 = vst [vmem:[%s629] sm:$0xff] %v2406
          %2415 = vst [vmem:[%s629 + $0x8] sm:$0xff] %v2407
          %2416 = vst [vmem:[%s629 + $0x10] sm:$0xff] %v2408
          %2417 = vst [vmem:[%s629 + $0x18] sm:$0xff] %v2409
        $region98: #{vit_mim_forward.14} parent=81 // pred_fallthru
          _
        %s2418 = smul.u32 4, %s21
        %p2419 = scmp.lt.s32.totalorder %s2418, 3
        %s2420 = scalar_select %p2419, %s2418, 3
        %s2421 = smul.addr %s2420, 2
        %s2422 = smul.addr %s2421, 4
        %s2423 = scalar_lea.vmem %s6, %s2422
        // Predicated region
        $region99: #{vit_mim_forward.14} parent=81 // pred_check
          %p2424 = pneg %p193
        $region100: #{vit_mim_forward.14} parent=81 // pred_check_branch
          %2426 = sbr.rel (%p2424) target = $region102
        $region101: #{vit_mim_forward.14} parent=81 // pred_region
          %s2427 = smul.u32 4, %s21
        $region102: #{vit_mim_forward.14} parent=81 // pred_fallthru
          _
        // Predicated region
        $region103: #{vit_mim_forward.14} parent=81 // pred_check
          %p2428 = pneg %p193
        $region104: #{vit_mim_forward.14} parent=81 // pred_check_branch
          %2430 = sbr.rel (%p2428) target = $region106
        $region105: #{vit_mim_forward.14} parent=81 // pred_region
          %s2431 = smul.u32 4, %s21
          %p2432 = scmp.lt.s32.totalorder %s2431, 3
          %s2433 = scalar_select %p2432, %s2431, 3
          %s2434 = smul.addr %s2433, 2
          %s2435 = smul.addr %s2434, 4
          %s2436 = scalar_lea.vmem %s6, %s2435
        $region106: #{vit_mim_forward.14} parent=81 // pred_fallthru
          _
      $region82: #{vit_mim_forward.14} parent=5 // pred_fallthru
        _
      %p2437 = scmp.le.s32.totalorder 2, %s12
      // Predicated region
      $region107: #{vit_mim_forward.14} parent=5 // pred_check
        %p2438 = pneg %p2437
      $region108: #{vit_mim_forward.14} parent=5 // pred_check_branch
        %2440 = sbr.rel (%p2438) target = $region110
      $region109: #{vit_mim_forward.14} parent=5 // pred_region
        %s2441 = ssub.s32 %s12, 2
      $region110: #{vit_mim_forward.14} parent=5 // pred_fallthru
        _
    $region6: #{vit_mim_forward.14} parent=1 // loop_footer
      %s16 = sadd.s32 1, %s12
    $region7: #{vit_mim_forward.14} parent=1 // loop_footer_branch
      %11 = sbr.rel target = $region3
    $region8: #{vit_mim_forward.14} parent=1 // loop_exit
      _

</llo_original>
